<compile_context>
chip_gen: v5e
topology: v5e:2x2
jax: 0.10.0
libtpu: 0.0.40
codegen_flags: <defaults>
</compile_context>

<pallas_src>
import jax
import jax.numpy as jnp
from jax import lax
from jax.experimental import pallas as pl
from jax.experimental.pallas import tpu as pltpu


# ----------------------------- Pallas kernels -----------------------------

def _conv_pool_relu(cols_ref, w_ref, b_ref):
    """4x (C_out,K)@(K,S) GEMMs -> max over the 4 pool members -> +bias -> ReLU."""
    w = w_ref[...]                                               # (C_out, K) bf16
    y = jnp.dot(w, cols_ref[0, 0], preferred_element_type=jnp.float32)
    for blk in range(1, cols_ref.shape[1]):                      # 4 pool members
        y = jnp.maximum(y, jnp.dot(w, cols_ref[0, blk],
                                   preferred_element_type=jnp.float32))
    return jnp.maximum(y + b_ref[...], 0.0)                      # (C_out, S) f32


def _conv1_kernel(cols_ref, w_ref, b_ref, o_ref):
    # conv1 + 2x2 max-pool + ReLU, output kept channel-major (C, H2*W2).
    o_ref[0] = _conv_pool_relu(cols_ref, w_ref, b_ref).astype(o_ref.dtype)


def _conv2_fc_kernel(cols_ref, w2_ref, b2_ref, wf1_ref, bf1_ref,
                     wf2_ref, bf2_ref, o_ref):
    a2 = _conv_pool_relu(cols_ref, w2_ref, b2_ref)   # (20, 105) rows=c, lanes=(h,w)
    # TODO(synk): nn.Dropout2d after conv2 is identity in eval mode (no RNG mask).
    # fc1: PyTorch's NCHW flatten (idx = c*105 + h*15 + w) is realized by the
    # host-side permutation of fc1_w into (C=20, S=105, 50); contract per channel.
    h = bf1_ref[...]                                             # (1, 50) f32
    for c in range(a2.shape[0]):
        h = h + jnp.dot(a2[c:c + 1, :].astype(jnp.bfloat16), wf1_ref[c],
                        preferred_element_type=jnp.float32)
    h = jnp.maximum(h, 0.0)
    # TODO(synk): F.dropout between fc1 and fc2 is identity in eval mode.
    logits = jnp.dot(h.astype(jnp.bfloat16), wf2_ref[...],
                     preferred_element_type=jnp.float32) + bf2_ref[...]  # (1, 15)
    m = jnp.max(logits, axis=-1, keepdims=True)
    s = logits - m
    o_ref[0] = (s - jnp.log(jnp.sum(jnp.exp(s), axis=-1, keepdims=True))
                ).astype(o_ref.dtype)


# ----------------------------- pallas_call wrappers ------------------------

def _full(shape):
    nd = len(shape)
    return pl.BlockSpec(shape, lambda *_: (0,) * nd)


def conv1_pool(cols, w, b):
    N, nblk, K, S = cols.shape
    Co = w.shape[0]
    return pl.pallas_call(
        _conv1_kernel,
        out_shape=jax.ShapeDtypeStruct((N, Co, S), jnp.bfloat16),
        grid=(N,),
        in_specs=[pl.BlockSpec((1, nblk, K, S), lambda n: (n, 0, 0, 0)),
                  _full(w.shape), _full(b.shape)],
        out_specs=pl.BlockSpec((1, Co, S), lambda n: (n, 0, 0)),
        compiler_params=pltpu.CompilerParams(
            dimension_semantics=("parallel",)),
    )(cols, w, b)


def conv2_fc_head(cols, w2, b2, wf1, bf1, wf2, bf2):
    N, nblk, K, S = cols.shape
    ncls = wf2.shape[1]
    out = pl.pallas_call(
        _conv2_fc_kernel,
        out_shape=jax.ShapeDtypeStruct((N, 1, ncls), jnp.float32),
        grid=(N,),
        in_specs=[pl.BlockSpec((1, nblk, K, S), lambda n: (n, 0, 0, 0)),
                  _full(w2.shape), _full(b2.shape),
                  _full(wf1.shape), _full(bf1.shape),
                  _full(wf2.shape), _full(bf2.shape)],
        out_specs=pl.BlockSpec((1, 1, ncls), lambda n: (n, 0, 0)),
        compiler_params=pltpu.CompilerParams(
            dimension_semantics=("parallel",)),
    )(cols, w2, b2, wf1, bf1, wf2, bf2)
    return out[:, 0, :]


# ----------------------------- JAX glue (fused under jit) ------------------

def _pooled_im2col(x, k=5, pad=2):
    """NCHW -> (N, 4, C*k*k, (H//2)*(W//2)) im2col.

    The 4 members of each 2x2 pool window are split into the leading size-4
    axis (ph, pw); reduction rows are ordered (c, kh, kw) to match
    torch Conv2d weight.reshape(C_out, C_in*k*k); columns are (h2, w2).
    """
    N, C, H, W = x.shape
    xp = jnp.pad(x, ((0, 0), (0, 0), (pad, pad), (pad, pad)))
    pats = jnp.stack([xp[:, :, i:i + H, j:j + W]
                      for i in range(k) for j in range(k)], axis=2)   # (N,C,kk,H,W)
    pats = pats.reshape(N, C, k * k, H // 2, 2, W // 2, 2)            # h=2*h2+ph, w=2*w2+pw
    pats = pats.transpose(0, 4, 6, 1, 2, 3, 5)                        # (N,ph,pw,C,kk,h2,w2)
    return pats.reshape(N, 4, C * k * k, (H // 2) * (W // 2))


@jax.jit
def net_forward(x, q):
    """x: (N, 1, 28, 60) NCHW float32 -> (N, 15) log-probabilities."""
    N = x.shape[0]
    # conv1 + 2x2 maxpool + ReLU                       (fused kernel 1)
    cols1 = _pooled_im2col(x.astype(jnp.bfloat16))     # (N, 4, 25, 420)
    a1 = conv1_pool(cols1, q["w1"], q["b1"])           # (N, 10, 420) bf16, (c, h2*30+w2)
    # conv2 + maxpool + ReLU + fc1 + ReLU + fc2 + log_softmax   (fused kernel 2)
    cols2 = _pooled_im2col(a1.reshape(N, 10, 14, 30))  # (N, 4, 250, 105)
    return conv2_fc_head(cols2, q["w2"], q["b2"],
                         q["wf1"], q["bf1"], q["wf2"], q["bf2"])


# ----------------------------- parameters ----------------------------------

def init_params(key):
    """Parameters in their native PyTorch layouts."""
    k1, k2, k3, k4 = jax.random.split(key, 4)
    return {
        "conv1_w": 0.1 * jax.random.normal(k1, (10, 1, 5, 5), jnp.float32),
        "conv1_b": jnp.zeros((10,), jnp.float32),
        "conv2_w": 0.05 * jax.random.normal(k2, (20, 10, 5, 5), jnp.float32),
        "conv2_b": jnp.zeros((20,), jnp.float32),
        "fc1_w": 0.02 * jax.random.normal(k3, (50, 2100), jnp.float32),   # (out, in)
        "fc1_b": jnp.zeros((50,), jnp.float32),
        "fc2_w": 0.1 * jax.random.normal(k4, (15, 50), jnp.float32),
        "fc2_b": jnp.zeros((15,), jnp.float32),
    }


def prepare_params(p):
    """One-time host prep: GEMM-ready layouts, bf16 MXU operands, f32 biases."""
    return {
        "w1": p["conv1_w"].reshape(10, 25).astype(jnp.bfloat16),
        "b1": p["conv1_b"].reshape(10, 1).astype(jnp.float32),
        "w2": p["conv2_w"].reshape(20, 250).astype(jnp.bfloat16),
        "b2": p["conv2_b"].reshape(20, 1).astype(jnp.float32),
        # torch flatten index = c*105 + h*15 + w  -> regroup fc1_w to (20,105,50)
        "wf1": p["fc1_w"].reshape(50, 20, 105).transpose(1, 2, 0).astype(jnp.bfloat16),
        "bf1": p["fc1_b"].reshape(1, 50).astype(jnp.float32),
        "wf2": p["fc2_w"].T.astype(jnp.bfloat16),
        "bf2": p["fc2_b"].reshape(1, 15).astype(jnp.float32),
    }


# ----------------------------- f32 reference (validation) ------------------

def reference_forward(x, p):
    """Pure-JAX f32 reference via an independent lax.conv path."""
    hp = lax.Precision.HIGHEST
    y = lax.conv_general_dilated(x, p["conv1_w"], (1, 1), ((2, 2), (2, 2)),
                                 dimension_numbers=("NCHW", "OIHW", "NCHW"),
                                 precision=hp)
    y = y + p["conv1_b"][None, :, None, None]
    y = jax.nn.relu(lax.reduce_window(y, -jnp.inf, lax.max,
                                      (1, 1, 2, 2), (1, 1, 2, 2), "VALID"))
    y = lax.conv_general_dilated(y, p["conv2_w"], (1, 1), ((2, 2), (2, 2)),
                                 dimension_numbers=("NCHW", "OIHW", "NCHW"),
                                 precision=hp)
    y = y + p["conv2_b"][None, :, None, None]
    y = jax.nn.relu(lax.reduce_window(y, -jnp.inf, lax.max,
                                      (1, 1, 2, 2), (1, 1, 2, 2), "VALID"))
    y = y.reshape(y.shape[0], -1)                     # NCHW flatten -> 2100
    y = jax.nn.relu(jnp.dot(y, p["fc1_w"].T, precision=hp) + p["fc1_b"])
    y = jnp.dot(y, p["fc2_w"].T, precision=hp) + p["fc2_b"]
    return jax.nn.log_softmax(y, axis=-1)


if __name__ == "__main__":
    key = jax.random.PRNGKey(0)
    kx, kp = jax.random.split(key)
    # batch=2, 1 channel, 28x60 spatial => 20 * (28//4) * (60//4) = 2100 fc1 features.
    x = jax.random.normal(kx, (2, 1, 28, 60), jnp.float32)
    torch_params = init_params(kp)
    params = prepare_params(torch_params)

    out = jax.block_until_ready(net_forward(x, params))

    assert out.shape == (2, 15), out.shape
    assert bool(jnp.all(jnp.isfinite(out)))
    # log-softmax rows must (log-)normalize to ~0.
    assert bool(jnp.all(jnp.abs(jax.scipy.special.logsumexp(out, axis=1)) < 1e-3))
    # bf16-operand Pallas pipeline vs f32 XLA reference.
    ref = reference_forward(x, torch_params)
    assert bool(jnp.max(jnp.abs(out - ref)) < 5e-2)
    print("KERNEL_OK")
</pallas_src>

<mosaic_0001>
module attributes {stable_mosaic.version = 11 : i64} {
  func.func @_conv1_kernel(%arg0: i32, %arg1: memref<1x4x25x420xbf16, #tpu.memory_space<vmem>>, %arg2: memref<10x25xbf16, #tpu.memory_space<vmem>>, %arg3: memref<10x1xf32, #tpu.memory_space<vmem>>, %arg4: memref<1x10x420xbf16, #tpu.memory_space<vmem>>) attributes {dimension_semantics = [#tpu.dimension_semantics<parallel>], iteration_bounds = array<i64: 2>, scalar_prefetch = 0 : i64, scratch_operands = 0 : i64, tpu.core_type = #tpu.core_type<tc>, window_params = [{transform_indices = @transform_0, window_bounds = array<i64: 1, 4, 25, 420>}, {pipeline_mode = #tpu.pipeline_mode<synchronous>, transform_indices = @transform_1, window_bounds = array<i64: 10, 25>}, {pipeline_mode = #tpu.pipeline_mode<synchronous>, transform_indices = @transform_2, window_bounds = array<i64: 10, 1>}, {transform_indices = @transform_3, window_bounds = array<i64: 1, 10, 420>}]} {
    %c0 = arith.constant 0 : index
    %c0_0 = arith.constant 0 : index
    %0 = vector.load %arg2[%c0, %c0_0] : memref<10x25xbf16, #tpu.memory_space<vmem>>, vector<10x25xbf16>
    %c0_1 = arith.constant 0 : index
    %c0_2 = arith.constant 0 : index
    %c0_3 = arith.constant 0 : index
    %c0_4 = arith.constant 0 : index
    %1 = vector.load %arg1[%c0_1, %c0_2, %c0_3, %c0_4] : memref<1x4x25x420xbf16, #tpu.memory_space<vmem>>, vector<1x1x25x420xbf16>
    %2 = vector.shape_cast %1 : vector<1x1x25x420xbf16> to vector<25x420xbf16>
    %cst = arith.constant dense<0.000000e+00> : vector<10x420xf32>
    %3 = tpu.matmul %0, %2, %cst {dimension_numbers = #tpu.dot_dimension_numbers<[1], [0], [0], [1], [0, 0, 1, 1], [], []>} : vector<10x25xbf16>, vector<25x420xbf16>, vector<10x420xf32> -> vector<10x420xf32>
    %c0_5 = arith.constant 0 : index
    %c1 = arith.constant 1 : index
    %c0_6 = arith.constant 0 : index
    %c0_7 = arith.constant 0 : index
    %4 = vector.load %arg1[%c0_5, %c1, %c0_6, %c0_7] : memref<1x4x25x420xbf16, #tpu.memory_space<vmem>>, vector<1x1x25x420xbf16>
    %5 = vector.shape_cast %4 : vector<1x1x25x420xbf16> to vector<25x420xbf16>
    %cst_8 = arith.constant dense<0.000000e+00> : vector<10x420xf32>
    %6 = tpu.matmul %0, %5, %cst_8 {dimension_numbers = #tpu.dot_dimension_numbers<[1], [0], [0], [1], [0, 0, 1, 1], [], []>} : vector<10x25xbf16>, vector<25x420xbf16>, vector<10x420xf32> -> vector<10x420xf32>
    %7 = arith.maximumf %3, %6 : vector<10x420xf32>
    %c0_9 = arith.constant 0 : index
    %c2 = arith.constant 2 : index
    %c0_10 = arith.constant 0 : index
    %c0_11 = arith.constant 0 : index
    %8 = vector.load %arg1[%c0_9, %c2, %c0_10, %c0_11] : memref<1x4x25x420xbf16, #tpu.memory_space<vmem>>, vector<1x1x25x420xbf16>
    %9 = vector.shape_cast %8 : vector<1x1x25x420xbf16> to vector<25x420xbf16>
    %cst_12 = arith.constant dense<0.000000e+00> : vector<10x420xf32>
    %10 = tpu.matmul %0, %9, %cst_12 {dimension_numbers = #tpu.dot_dimension_numbers<[1], [0], [0], [1], [0, 0, 1, 1], [], []>} : vector<10x25xbf16>, vector<25x420xbf16>, vector<10x420xf32> -> vector<10x420xf32>
    %11 = arith.maximumf %7, %10 : vector<10x420xf32>
    %c0_13 = arith.constant 0 : index
    %c3 = arith.constant 3 : index
    %c0_14 = arith.constant 0 : index
    %c0_15 = arith.constant 0 : index
    %12 = vector.load %arg1[%c0_13, %c3, %c0_14, %c0_15] : memref<1x4x25x420xbf16, #tpu.memory_space<vmem>>, vector<1x1x25x420xbf16>
    %13 = vector.shape_cast %12 : vector<1x1x25x420xbf16> to vector<25x420xbf16>
    %cst_16 = arith.constant dense<0.000000e+00> : vector<10x420xf32>
    %14 = tpu.matmul %0, %13, %cst_16 {dimension_numbers = #tpu.dot_dimension_numbers<[1], [0], [0], [1], [0, 0, 1, 1], [], []>} : vector<10x25xbf16>, vector<25x420xbf16>, vector<10x420xf32> -> vector<10x420xf32>
    %15 = arith.maximumf %11, %14 : vector<10x420xf32>
    %c0_17 = arith.constant 0 : index
    %c0_18 = arith.constant 0 : index
    %16 = vector.load %arg3[%c0_17, %c0_18] : memref<10x1xf32, #tpu.memory_space<vmem>>, vector<10x1xf32>
    %17 = vector.broadcast %16 : vector<10x1xf32> to vector<10x420xf32>
    %18 = arith.addf %15, %17 : vector<10x420xf32>
    %cst_19 = arith.constant 0.000000e+00 : f32
    %19 = vector.broadcast %cst_19 : f32 to vector<10x420xf32>
    %20 = arith.maximumf %18, %19 : vector<10x420xf32>
    %21 = arith.truncf %20 : vector<10x420xf32> to vector<10x420xbf16>
    %c0_20 = arith.constant 0 : index
    %c0_21 = arith.constant 0 : index
    %c0_22 = arith.constant 0 : index
    %22 = vector.load %arg4[%c0_20, %c0_21, %c0_22] : memref<1x10x420xbf16, #tpu.memory_space<vmem>>, vector<1x10x420xbf16>
    %23 = vector.shape_cast %22 : vector<1x10x420xbf16> to vector<10x420xbf16>
    %24 = vector.shape_cast %21 : vector<10x420xbf16> to vector<1x10x420xbf16>
    tpu.vector_store %arg4[%c0_20, %c0_21, %c0_22], %24 {strides = array<i32>} : memref<1x10x420xbf16, #tpu.memory_space<vmem>>, vector<1x10x420xbf16>,
    return
  }
  func.func @transform_0(%arg0: i32) -> (i32, i32, i32, i32) {
    %c0_i32 = arith.constant 0 : i32
    %c0_i32_0 = arith.constant 0 : i32
    %c0_i32_1 = arith.constant 0 : i32
    %c0_i32_2 = arith.constant 0 : i32
    return %arg0, %c0_i32, %c0_i32_0, %c0_i32_1 : i32, i32, i32, i32
  }
  func.func @transform_1(%arg0: i32) -> (i32, i32) {
    %c0_i32 = arith.constant 0 : i32
    %c0_i32_0 = arith.constant 0 : i32
    %c0_i32_1 = arith.constant 0 : i32
    return %c0_i32, %c0_i32_0 : i32, i32
  }
  func.func @transform_2(%arg0: i32) -> (i32, i32) {
    %c0_i32 = arith.constant 0 : i32
    %c0_i32_0 = arith.constant 0 : i32
    %c0_i32_1 = arith.constant 0 : i32
    return %c0_i32, %c0_i32_0 : i32, i32
  }
  func.func @transform_3(%arg0: i32) -> (i32, i32, i32) {
    %c0_i32 = arith.constant 0 : i32
    %c0_i32_0 = arith.constant 0 : i32
    %c0_i32_1 = arith.constant 0 : i32
    return %arg0, %c0_i32, %c0_i32_0 : i32, i32, i32
  }
}

module attributes {stable_mosaic.version = 11 : i64} {
  func.func @_conv2_fc_kernel(%arg0: i32, %arg1: memref<1x4x250x105xbf16, #tpu.memory_space<vmem>>, %arg2: memref<20x250xbf16, #tpu.memory_space<vmem>>, %arg3: memref<20x1xf32, #tpu.memory_space<vmem>>, %arg4: memref<20x105x50xbf16, #tpu.memory_space<vmem>>, %arg5: memref<1x50xf32, #tpu.memory_space<vmem>>, %arg6: memref<50x15xbf16, #tpu.memory_space<vmem>>, %arg7: memref<1x15xf32, #tpu.memory_space<vmem>>, %arg8: memref<1x1x15xf32, #tpu.memory_space<vmem>>) attributes {dimension_semantics = [#tpu.dimension_semantics<parallel>], iteration_bounds = array<i64: 2>, scalar_prefetch = 0 : i64, scratch_operands = 0 : i64, tpu.core_type = #tpu.core_type<tc>, window_params = [{transform_indices = @transform_0, window_bounds = array<i64: 1, 4, 250, 105>}, {pipeline_mode = #tpu.pipeline_mode<synchronous>, transform_indices = @transform_1, window_bounds = array<i64: 20, 250>}, {pipeline_mode = #tpu.pipeline_mode<synchronous>, transform_indices = @transform_2, window_bounds = array<i64: 20, 1>}, {pipeline_mode = #tpu.pipeline_mode<synchronous>, transform_indices = @transform_3, window_bounds = array<i64: 20, 105, 50>}, {pipeline_mode = #tpu.pipeline_mode<synchronous>, transform_indices = @transform_4, window_bounds = array<i64: 1, 50>}, {pipeline_mode = #tpu.pipeline_mode<synchronous>, transform_indices = @transform_5, window_bounds = array<i64: 50, 15>}, {pipeline_mode = #tpu.pipeline_mode<synchronous>, transform_indices = @transform_6, window_bounds = array<i64: 1, 15>}, {transform_indices = @transform_7, window_bounds = array<i64: 1, 1, 15>}]} {
    %c0 = arith.constant 0 : index
    %c0_0 = arith.constant 0 : index
    %0 = vector.load %arg2[%c0, %c0_0] : memref<20x250xbf16, #tpu.memory_space<vmem>>, vector<20x250xbf16>
    %c0_1 = arith.constant 0 : index
    %c0_2 = arith.constant 0 : index
    %c0_3 = arith.constant 0 : index
    %c0_4 = arith.constant 0 : index
    %1 = vector.load %arg1[%c0_1, %c0_2, %c0_3, %c0_4] : memref<1x4x250x105xbf16, #tpu.memory_space<vmem>>, vector<1x1x250x105xbf16>
    %2 = vector.shape_cast %1 : vector<1x1x250x105xbf16> to vector<250x105xbf16>
    %cst = arith.constant dense<0.000000e+00> : vector<20x105xf32>
    %3 = tpu.matmul %0, %2, %cst {dimension_numbers = #tpu.dot_dimension_numbers<[1], [0], [0], [1], [0, 0, 1, 1], [], []>} : vector<20x250xbf16>, vector<250x105xbf16>, vector<20x105xf32> -> vector<20x105xf32>
    %c0_5 = arith.constant 0 : index
    %c1 = arith.constant 1 : index
    %c0_6 = arith.constant 0 : index
    %c0_7 = arith.constant 0 : index
    %4 = vector.load %arg1[%c0_5, %c1, %c0_6, %c0_7] : memref<1x4x250x105xbf16, #tpu.memory_space<vmem>>, vector<1x1x250x105xbf16>
    %5 = vector.shape_cast %4 : vector<1x1x250x105xbf16> to vector<250x105xbf16>
    %cst_8 = arith.constant dense<0.000000e+00> : vector<20x105xf32>
    %6 = tpu.matmul %0, %5, %cst_8 {dimension_numbers = #tpu.dot_dimension_numbers<[1], [0], [0], [1], [0, 0, 1, 1], [], []>} : vector<20x250xbf16>, vector<250x105xbf16>, vector<20x105xf32> -> vector<20x105xf32>
    %7 = arith.maximumf %3, %6 : vector<20x105xf32>
    %c0_9 = arith.constant 0 : index
    %c2 = arith.constant 2 : index
    %c0_10 = arith.constant 0 : index
    %c0_11 = arith.constant 0 : index
    %8 = vector.load %arg1[%c0_9, %c2, %c0_10, %c0_11] : memref<1x4x250x105xbf16, #tpu.memory_space<vmem>>, vector<1x1x250x105xbf16>
    %9 = vector.shape_cast %8 : vector<1x1x250x105xbf16> to vector<250x105xbf16>
    %cst_12 = arith.constant dense<0.000000e+00> : vector<20x105xf32>
    %10 = tpu.matmul %0, %9, %cst_12 {dimension_numbers = #tpu.dot_dimension_numbers<[1], [0], [0], [1], [0, 0, 1, 1], [], []>} : vector<20x250xbf16>, vector<250x105xbf16>, vector<20x105xf32> -> vector<20x105xf32>
    %11 = arith.maximumf %7, %10 : vector<20x105xf32>
    %c0_13 = arith.constant 0 : index
    %c3 = arith.constant 3 : index
    %c0_14 = arith.constant 0 : index
    %c0_15 = arith.constant 0 : index
    %12 = vector.load %arg1[%c0_13, %c3, %c0_14, %c0_15] : memref<1x4x250x105xbf16, #tpu.memory_space<vmem>>, vector<1x1x250x105xbf16>
    %13 = vector.shape_cast %12 : vector<1x1x250x105xbf16> to vector<250x105xbf16>
    %cst_16 = arith.constant dense<0.000000e+00> : vector<20x105xf32>
    %14 = tpu.matmul %0, %13, %cst_16 {dimension_numbers = #tpu.dot_dimension_numbers<[1], [0], [0], [1], [0, 0, 1, 1], [], []>} : vector<20x250xbf16>, vector<250x105xbf16>, vector<20x105xf32> -> vector<20x105xf32>
    %15 = arith.maximumf %11, %14 : vector<20x105xf32>
    %c0_17 = arith.constant 0 : index
    %c0_18 = arith.constant 0 : index
    %16 = vector.load %arg3[%c0_17, %c0_18] : memref<20x1xf32, #tpu.memory_space<vmem>>, vector<20x1xf32>
    %17 = vector.broadcast %16 : vector<20x1xf32> to vector<20x105xf32>
    %18 = arith.addf %15, %17 : vector<20x105xf32>
    %cst_19 = arith.constant 0.000000e+00 : f32
    %19 = vector.broadcast %cst_19 : f32 to vector<20x105xf32>
    %20 = arith.maximumf %18, %19 : vector<20x105xf32>
    %c0_20 = arith.constant 0 : index
    %c0_21 = arith.constant 0 : index
    %21 = vector.load %arg5[%c0_20, %c0_21] : memref<1x50xf32, #tpu.memory_space<vmem>>, vector<1x50xf32>
    %22 = vector.extract_strided_slice %20 {offsets = [0, 0], sizes = [1, 105], strides = [1, 1]} : vector<20x105xf32> to vector<1x105xf32>
    %23 = arith.truncf %22 : vector<1x105xf32> to vector<1x105xbf16>
    %c0_22 = arith.constant 0 : index
    %c0_23 = arith.constant 0 : index
    %c0_24 = arith.constant 0 : index
    %24 = vector.load %arg4[%c0_22, %c0_23, %c0_24] : memref<20x105x50xbf16, #tpu.memory_space<vmem>>, vector<1x105x50xbf16>
    %25 = vector.shape_cast %24 : vector<1x105x50xbf16> to vector<105x50xbf16>
    %cst_25 = arith.constant dense<0.000000e+00> : vector<1x50xf32>
    %26 = tpu.matmul %23, %25, %cst_25 {dimension_numbers = #tpu.dot_dimension_numbers<[1], [0], [0], [1], [0, 0, 1, 1], [], []>} : vector<1x105xbf16>, vector<105x50xbf16>, vector<1x50xf32> -> vector<1x50xf32>
    %27 = arith.addf %21, %26 : vector<1x50xf32>
    %28 = vector.extract_strided_slice %20 {offsets = [1, 0], sizes = [1, 105], strides = [1, 1]} : vector<20x105xf32> to vector<1x105xf32>
    %29 = arith.truncf %28 : vector<1x105xf32> to vector<1x105xbf16>
    %c1_26 = arith.constant 1 : index
    %c0_27 = arith.constant 0 : index
    %c0_28 = arith.constant 0 : index
    %30 = vector.load %arg4[%c1_26, %c0_27, %c0_28] : memref<20x105x50xbf16, #tpu.memory_space<vmem>>, vector<1x105x50xbf16>
    %31 = vector.shape_cast %30 : vector<1x105x50xbf16> to vector<105x50xbf16>
    %cst_29 = arith.constant dense<0.000000e+00> : vector<1x50xf32>
    %32 = tpu.matmul %29, %31, %cst_29 {dimension_numbers = #tpu.dot_dimension_numbers<[1], [0], [0], [1], [0, 0, 1, 1], [], []>} : vector<1x105xbf16>, vector<105x50xbf16>, vector<1x50xf32> -> vector<1x50xf32>
    %33 = arith.addf %27, %32 : vector<1x50xf32>
    %34 = vector.extract_strided_slice %20 {offsets = [2, 0], sizes = [1, 105], strides = [1, 1]} : vector<20x105xf32> to vector<1x105xf32>
    %35 = arith.truncf %34 : vector<1x105xf32> to vector<1x105xbf16>
    %c2_30 = arith.constant 2 : index
    %c0_31 = arith.constant 0 : index
    %c0_32 = arith.constant 0 : index
    %36 = vector.load %arg4[%c2_30, %c0_31, %c0_32] : memref<20x105x50xbf16, #tpu.memory_space<vmem>>, vector<1x105x50xbf16>
    %37 = vector.shape_cast %36 : vector<1x105x50xbf16> to vector<105x50xbf16>
    %cst_33 = arith.constant dense<0.000000e+00> : vector<1x50xf32>
    %38 = tpu.matmul %35, %37, %cst_33 {dimension_numbers = #tpu.dot_dimension_numbers<[1], [0], [0], [1], [0, 0, 1, 1], [], []>} : vector<1x105xbf16>, vector<105x50xbf16>, vector<1x50xf32> -> vector<1x50xf32>
    %39 = arith.addf %33, %38 : vector<1x50xf32>
    %40 = vector.extract_strided_slice %20 {offsets = [3, 0], sizes = [1, 105], strides = [1, 1]} : vector<20x105xf32> to vector<1x105xf32>
    %41 = arith.truncf %40 : vector<1x105xf32> to vector<1x105xbf16>
    %c3_34 = arith.constant 3 : index
    %c0_35 = arith.constant 0 : index
    %c0_36 = arith.constant 0 : index
    %42 = vector.load %arg4[%c3_34, %c0_35, %c0_36] : memref<20x105x50xbf16, #tpu.memory_space<vmem>>, vector<1x105x50xbf16>
    %43 = vector.shape_cast %42 : vector<1x105x50xbf16> to vector<105x50xbf16>
    %cst_37 = arith.constant dense<0.000000e+00> : vector<1x50xf32>
    %44 = tpu.matmul %41, %43, %cst_37 {dimension_numbers = #tpu.dot_dimension_numbers<[1], [0], [0], [1], [0, 0, 1, 1], [], []>} : vector<1x105xbf16>, vector<105x50xbf16>, vector<1x50xf32> -> vector<1x50xf32>
    %45 = arith.addf %39, %44 : vector<1x50xf32>
    %46 = vector.extract_strided_slice %20 {offsets = [4, 0], sizes = [1, 105], strides = [1, 1]} : vector<20x105xf32> to vector<1x105xf32>
    %47 = arith.truncf %46 : vector<1x105xf32> to vector<1x105xbf16>
    %c4 = arith.constant 4 : index
    %c0_38 = arith.constant 0 : index
    %c0_39 = arith.constant 0 : index
    %48 = vector.load %arg4[%c4, %c0_38, %c0_39] : memref<20x105x50xbf16, #tpu.memory_space<vmem>>, vector<1x105x50xbf16>
    %49 = vector.shape_cast %48 : vector<1x105x50xbf16> to vector<105x50xbf16>
    %cst_40 = arith.constant dense<0.000000e+00> : vector<1x50xf32>
    %50 = tpu.matmul %47, %49, %cst_40 {dimension_numbers = #tpu.dot_dimension_numbers<[1], [0], [0], [1], [0, 0, 1, 1], [], []>} : vector<1x105xbf16>, vector<105x50xbf16>, vector<1x50xf32> -> vector<1x50xf32>
    %51 = arith.addf %45, %50 : vector<1x50xf32>
    %52 = vector.extract_strided_slice %20 {offsets = [5, 0], sizes = [1, 105], strides = [1, 1]} : vector<20x105xf32> to vector<1x105xf32>
    %53 = arith.truncf %52 : vector<1x105xf32> to vector<1x105xbf16>
    %c5 = arith.constant 5 : index
    %c0_41 = arith.constant 0 : index
    %c0_42 = arith.constant 0 : index
    %54 = vector.load %arg4[%c5, %c0_41, %c0_42] : memref<20x105x50xbf16, #tpu.memory_space<vmem>>, vector<1x105x50xbf16>
    %55 = vector.shape_cast %54 : vector<1x105x50xbf16> to vector<105x50xbf16>
    %cst_43 = arith.constant dense<0.000000e+00> : vector<1x50xf32>
    %56 = tpu.matmul %53, %55, %cst_43 {dimension_numbers = #tpu.dot_dimension_numbers<[1], [0], [0], [1], [0, 0, 1, 1], [], []>} : vector<1x105xbf16>, vector<105x50xbf16>, vector<1x50xf32> -> vector<1x50xf32>
    %57 = arith.addf %51, %56 : vector<1x50xf32>
    %58 = vector.extract_strided_slice %20 {offsets = [6, 0], sizes = [1, 105], strides = [1, 1]} : vector<20x105xf32> to vector<1x105xf32>
    %59 = arith.truncf %58 : vector<1x105xf32> to vector<1x105xbf16>
    %c6 = arith.constant 6 : index
    %c0_44 = arith.constant 0 : index
    %c0_45 = arith.constant 0 : index
    %60 = vector.load %arg4[%c6, %c0_44, %c0_45] : memref<20x105x50xbf16, #tpu.memory_space<vmem>>, vector<1x105x50xbf16>
    %61 = vector.shape_cast %60 : vector<1x105x50xbf16> to vector<105x50xbf16>
    %cst_46 = arith.constant dense<0.000000e+00> : vector<1x50xf32>
    %62 = tpu.matmul %59, %61, %cst_46 {dimension_numbers = #tpu.dot_dimension_numbers<[1], [0], [0], [1], [0, 0, 1, 1], [], []>} : vector<1x105xbf16>, vector<105x50xbf16>, vector<1x50xf32> -> vector<1x50xf32>
    %63 = arith.addf %57, %62 : vector<1x50xf32>
    %64 = vector.extract_strided_slice %20 {offsets = [7, 0], sizes = [1, 105], strides = [1, 1]} : vector<20x105xf32> to vector<1x105xf32>
    %65 = arith.truncf %64 : vector<1x105xf32> to vector<1x105xbf16>
    %c7 = arith.constant 7 : index
    %c0_47 = arith.constant 0 : index
    %c0_48 = arith.constant 0 : index
    %66 = vector.load %arg4[%c7, %c0_47, %c0_48] : memref<20x105x50xbf16, #tpu.memory_space<vmem>>, vector<1x105x50xbf16>
    %67 = vector.shape_cast %66 : vector<1x105x50xbf16> to vector<105x50xbf16>
    %cst_49 = arith.constant dense<0.000000e+00> : vector<1x50xf32>
    %68 = tpu.matmul %65, %67, %cst_49 {dimension_numbers = #tpu.dot_dimension_numbers<[1], [0], [0], [1], [0, 0, 1, 1], [], []>} : vector<1x105xbf16>, vector<105x50xbf16>, vector<1x50xf32> -> vector<1x50xf32>
    %69 = arith.addf %63, %68 : vector<1x50xf32>
    %70 = vector.extract_strided_slice %20 {offsets = [8, 0], sizes = [1, 105], strides = [1, 1]} : vector<20x105xf32> to vector<1x105xf32>
    %71 = arith.truncf %70 : vector<1x105xf32> to vector<1x105xbf16>
    %c8 = arith.constant 8 : index
    %c0_50 = arith.constant 0 : index
    %c0_51 = arith.constant 0 : index
    %72 = vector.load %arg4[%c8, %c0_50, %c0_51] : memref<20x105x50xbf16, #tpu.memory_space<vmem>>, vector<1x105x50xbf16>
    %73 = vector.shape_cast %72 : vector<1x105x50xbf16> to vector<105x50xbf16>
    %cst_52 = arith.constant dense<0.000000e+00> : vector<1x50xf32>
    %74 = tpu.matmul %71, %73, %cst_52 {dimension_numbers = #tpu.dot_dimension_numbers<[1], [0], [0], [1], [0, 0, 1, 1], [], []>} : vector<1x105xbf16>, vector<105x50xbf16>, vector<1x50xf32> -> vector<1x50xf32>
    %75 = arith.addf %69, %74 : vector<1x50xf32>
    %76 = vector.extract_strided_slice %20 {offsets = [9, 0], sizes = [1, 105], strides = [1, 1]} : vector<20x105xf32> to vector<1x105xf32>
    %77 = arith.truncf %76 : vector<1x105xf32> to vector<1x105xbf16>
    %c9 = arith.constant 9 : index
    %c0_53 = arith.constant 0 : index
    %c0_54 = arith.constant 0 : index
    %78 = vector.load %arg4[%c9, %c0_53, %c0_54] : memref<20x105x50xbf16, #tpu.memory_space<vmem>>, vector<1x105x50xbf16>
    %79 = vector.shape_cast %78 : vector<1x105x50xbf16> to vector<105x50xbf16>
    %cst_55 = arith.constant dense<0.000000e+00> : vector<1x50xf32>
    %80 = tpu.matmul %77, %79, %cst_55 {dimension_numbers = #tpu.dot_dimension_numbers<[1], [0], [0], [1], [0, 0, 1, 1], [], []>} : vector<1x105xbf16>, vector<105x50xbf16>, vector<1x50xf32> -> vector<1x50xf32>
    %81 = arith.addf %75, %80 : vector<1x50xf32>
    %82 = vector.extract_strided_slice %20 {offsets = [10, 0], sizes = [1, 105], strides = [1, 1]} : vector<20x105xf32> to vector<1x105xf32>
    %83 = arith.truncf %82 : vector<1x105xf32> to vector<1x105xbf16>
    %c10 = arith.constant 10 : index
    %c0_56 = arith.constant 0 : index
    %c0_57 = arith.constant 0 : index
    %84 = vector.load %arg4[%c10, %c0_56, %c0_57] : memref<20x105x50xbf16, #tpu.memory_space<vmem>>, vector<1x105x50xbf16>
    %85 = vector.shape_cast %84 : vector<1x105x50xbf16> to vector<105x50xbf16>
    %cst_58 = arith.constant dense<0.000000e+00> : vector<1x50xf32>
    %86 = tpu.matmul %83, %85, %cst_58 {dimension_numbers = #tpu.dot_dimension_numbers<[1], [0], [0], [1], [0, 0, 1, 1], [], []>} : vector<1x105xbf16>, vector<105x50xbf16>, vector<1x50xf32> -> vector<1x50xf32>
    %87 = arith.addf %81, %86 : vector<1x50xf32>
    %88 = vector.extract_strided_slice %20 {offsets = [11, 0], sizes = [1, 105], strides = [1, 1]} : vector<20x105xf32> to vector<1x105xf32>
    %89 = arith.truncf %88 : vector<1x105xf32> to vector<1x105xbf16>
    %c11 = arith.constant 11 : index
    %c0_59 = arith.constant 0 : index
    %c0_60 = arith.constant 0 : index
    %90 = vector.load %arg4[%c11, %c0_59, %c0_60] : memref<20x105x50xbf16, #tpu.memory_space<vmem>>, vector<1x105x50xbf16>
    %91 = vector.shape_cast %90 : vector<1x105x50xbf16> to vector<105x50xbf16>
    %cst_61 = arith.constant dense<0.000000e+00> : vector<1x50xf32>
    %92 = tpu.matmul %89, %91, %cst_61 {dimension_numbers = #tpu.dot_dimension_numbers<[1], [0], [0], [1], [0, 0, 1, 1], [], []>} : vector<1x105xbf16>, vector<105x50xbf16>, vector<1x50xf32> -> vector<1x50xf32>
    %93 = arith.addf %87, %92 : vector<1x50xf32>
    %94 = vector.extract_strided_slice %20 {offsets = [12, 0], sizes = [1, 105], strides = [1, 1]} : vector<20x105xf32> to vector<1x105xf32>
    %95 = arith.truncf %94 : vector<1x105xf32> to vector<1x105xbf16>
    %c12 = arith.constant 12 : index
    %c0_62 = arith.constant 0 : index
    %c0_63 = arith.constant 0 : index
    %96 = vector.load %arg4[%c12, %c0_62, %c0_63] : memref<20x105x50xbf16, #tpu.memory_space<vmem>>, vector<1x105x50xbf16>
    %97 = vector.shape_cast %96 : vector<1x105x50xbf16> to vector<105x50xbf16>
    %cst_64 = arith.constant dense<0.000000e+00> : vector<1x50xf32>
    %98 = tpu.matmul %95, %97, %cst_64 {dimension_numbers = #tpu.dot_dimension_numbers<[1], [0], [0], [1], [0, 0, 1, 1], [], []>} : vector<1x105xbf16>, vector<105x50xbf16>, vector<1x50xf32> -> vector<1x50xf32>
    %99 = arith.addf %93, %98 : vector<1x50xf32>
    %100 = vector.extract_strided_slice %20 {offsets = [13, 0], sizes = [1, 105], strides = [1, 1]} : vector<20x105xf32> to vector<1x105xf32>
    %101 = arith.truncf %100 : vector<1x105xf32> to vector<1x105xbf16>
    %c13 = arith.constant 13 : index
    %c0_65 = arith.constant 0 : index
    %c0_66 = arith.constant 0 : index
    %102 = vector.load %arg4[%c13, %c0_65, %c0_66] : memref<20x105x50xbf16, #tpu.memory_space<vmem>>, vector<1x105x50xbf16>
    %103 = vector.shape_cast %102 : vector<1x105x50xbf16> to vector<105x50xbf16>
    %cst_67 = arith.constant dense<0.000000e+00> : vector<1x50xf32>
    %104 = tpu.matmul %101, %103, %cst_67 {dimension_numbers = #tpu.dot_dimension_numbers<[1], [0], [0], [1], [0, 0, 1, 1], [], []>} : vector<1x105xbf16>, vector<105x50xbf16>, vector<1x50xf32> -> vector<1x50xf32>
    %105 = arith.addf %99, %104 : vector<1x50xf32>
    %106 = vector.extract_strided_slice %20 {offsets = [14, 0], sizes = [1, 105], strides = [1, 1]} : vector<20x105xf32> to vector<1x105xf32>
    %107 = arith.truncf %106 : vector<1x105xf32> to vector<1x105xbf16>
    %c14 = arith.constant 14 : index
    %c0_68 = arith.constant 0 : index
    %c0_69 = arith.constant 0 : index
    %108 = vector.load %arg4[%c14, %c0_68, %c0_69] : memref<20x105x50xbf16, #tpu.memory_space<vmem>>, vector<1x105x50xbf16>
    %109 = vector.shape_cast %108 : vector<1x105x50xbf16> to vector<105x50xbf16>
    %cst_70 = arith.constant dense<0.000000e+00> : vector<1x50xf32>
    %110 = tpu.matmul %107, %109, %cst_70 {dimension_numbers = #tpu.dot_dimension_numbers<[1], [0], [0], [1], [0, 0, 1, 1], [], []>} : vector<1x105xbf16>, vector<105x50xbf16>, vector<1x50xf32> -> vector<1x50xf32>
    %111 = arith.addf %105, %110 : vector<1x50xf32>
    %112 = vector.extract_strided_slice %20 {offsets = [15, 0], sizes = [1, 105], strides = [1, 1]} : vector<20x105xf32> to vector<1x105xf32>
    %113 = arith.truncf %112 : vector<1x105xf32> to vector<1x105xbf16>
    %c15 = arith.constant 15 : index
    %c0_71 = arith.constant 0 : index
    %c0_72 = arith.constant 0 : index
    %114 = vector.load %arg4[%c15, %c0_71, %c0_72] : memref<20x105x50xbf16, #tpu.memory_space<vmem>>, vector<1x105x50xbf16>
    %115 = vector.shape_cast %114 : vector<1x105x50xbf16> to vector<105x50xbf16>
    %cst_73 = arith.constant dense<0.000000e+00> : vector<1x50xf32>
    %116 = tpu.matmul %113, %115, %cst_73 {dimension_numbers = #tpu.dot_dimension_numbers<[1], [0], [0], [1], [0, 0, 1, 1], [], []>} : vector<1x105xbf16>, vector<105x50xbf16>, vector<1x50xf32> -> vector<1x50xf32>
    %117 = arith.addf %111, %116 : vector<1x50xf32>
    %118 = vector.extract_strided_slice %20 {offsets = [16, 0], sizes = [1, 105], strides = [1, 1]} : vector<20x105xf32> to vector<1x105xf32>
    %119 = arith.truncf %118 : vector<1x105xf32> to vector<1x105xbf16>
    %c16 = arith.constant 16 : index
    %c0_74 = arith.constant 0 : index
    %c0_75 = arith.constant 0 : index
    %120 = vector.load %arg4[%c16, %c0_74, %c0_75] : memref<20x105x50xbf16, #tpu.memory_space<vmem>>, vector<1x105x50xbf16>
    %121 = vector.shape_cast %120 : vector<1x105x50xbf16> to vector<105x50xbf16>
    %cst_76 = arith.constant dense<0.000000e+00> : vector<1x50xf32>
    %122 = tpu.matmul %119, %121, %cst_76 {dimension_numbers = #tpu.dot_dimension_numbers<[1], [0], [0], [1], [0, 0, 1, 1], [], []>} : vector<1x105xbf16>, vector<105x50xbf16>, vector<1x50xf32> -> vector<1x50xf32>
    %123 = arith.addf %117, %122 : vector<1x50xf32>
    %124 = vector.extract_strided_slice %20 {offsets = [17, 0], sizes = [1, 105], strides = [1, 1]} : vector<20x105xf32> to vector<1x105xf32>
    %125 = arith.truncf %124 : vector<1x105xf32> to vector<1x105xbf16>
    %c17 = arith.constant 17 : index
    %c0_77 = arith.constant 0 : index
    %c0_78 = arith.constant 0 : index
    %126 = vector.load %arg4[%c17, %c0_77, %c0_78] : memref<20x105x50xbf16, #tpu.memory_space<vmem>>, vector<1x105x50xbf16>
    %127 = vector.shape_cast %126 : vector<1x105x50xbf16> to vector<105x50xbf16>
    %cst_79 = arith.constant dense<0.000000e+00> : vector<1x50xf32>
    %128 = tpu.matmul %125, %127, %cst_79 {dimension_numbers = #tpu.dot_dimension_numbers<[1], [0], [0], [1], [0, 0, 1, 1], [], []>} : vector<1x105xbf16>, vector<105x50xbf16>, vector<1x50xf32> -> vector<1x50xf32>
    %129 = arith.addf %123, %128 : vector<1x50xf32>
    %130 = vector.extract_strided_slice %20 {offsets = [18, 0], sizes = [1, 105], strides = [1, 1]} : vector<20x105xf32> to vector<1x105xf32>
    %131 = arith.truncf %130 : vector<1x105xf32> to vector<1x105xbf16>
    %c18 = arith.constant 18 : index
    %c0_80 = arith.constant 0 : index
    %c0_81 = arith.constant 0 : index
    %132 = vector.load %arg4[%c18, %c0_80, %c0_81] : memref<20x105x50xbf16, #tpu.memory_space<vmem>>, vector<1x105x50xbf16>
    %133 = vector.shape_cast %132 : vector<1x105x50xbf16> to vector<105x50xbf16>
    %cst_82 = arith.constant dense<0.000000e+00> : vector<1x50xf32>
    %134 = tpu.matmul %131, %133, %cst_82 {dimension_numbers = #tpu.dot_dimension_numbers<[1], [0], [0], [1], [0, 0, 1, 1], [], []>} : vector<1x105xbf16>, vector<105x50xbf16>, vector<1x50xf32> -> vector<1x50xf32>
    %135 = arith.addf %129, %134 : vector<1x50xf32>
    %136 = vector.extract_strided_slice %20 {offsets = [19, 0], sizes = [1, 105], strides = [1, 1]} : vector<20x105xf32> to vector<1x105xf32>
    %137 = arith.truncf %136 : vector<1x105xf32> to vector<1x105xbf16>
    %c19 = arith.constant 19 : index
    %c0_83 = arith.constant 0 : index
    %c0_84 = arith.constant 0 : index
    %138 = vector.load %arg4[%c19, %c0_83, %c0_84] : memref<20x105x50xbf16, #tpu.memory_space<vmem>>, vector<1x105x50xbf16>
    %139 = vector.shape_cast %138 : vector<1x105x50xbf16> to vector<105x50xbf16>
    %cst_85 = arith.constant dense<0.000000e+00> : vector<1x50xf32>
    %140 = tpu.matmul %137, %139, %cst_85 {dimension_numbers = #tpu.dot_dimension_numbers<[1], [0], [0], [1], [0, 0, 1, 1], [], []>} : vector<1x105xbf16>, vector<105x50xbf16>, vector<1x50xf32> -> vector<1x50xf32>
    %141 = arith.addf %135, %140 : vector<1x50xf32>
    %cst_86 = arith.constant 0.000000e+00 : f32
    %142 = vector.broadcast %cst_86 : f32 to vector<1x50xf32>
    %143 = arith.maximumf %141, %142 : vector<1x50xf32>
    %144 = arith.truncf %143 : vector<1x50xf32> to vector<1x50xbf16>
    %c0_87 = arith.constant 0 : index
    %c0_88 = arith.constant 0 : index
    %145 = vector.load %arg6[%c0_87, %c0_88] : memref<50x15xbf16, #tpu.memory_space<vmem>>, vector<50x15xbf16>
    %cst_89 = arith.constant dense<0.000000e+00> : vector<1x15xf32>
    %146 = tpu.matmul %144, %145, %cst_89 {dimension_numbers = #tpu.dot_dimension_numbers<[1], [0], [0], [1], [0, 0, 1, 1], [], []>} : vector<1x50xbf16>, vector<50x15xbf16>, vector<1x15xf32> -> vector<1x15xf32>
    %c0_90 = arith.constant 0 : index
    %c0_91 = arith.constant 0 : index
    %147 = vector.load %arg7[%c0_90, %c0_91] : memref<1x15xf32, #tpu.memory_space<vmem>>, vector<1x15xf32>
    %148 = arith.addf %146, %147 : vector<1x15xf32>
    %cst_92 = arith.constant dense<0xFF800000> : vector<1xf32>
    %149 = vector.multi_reduction <maximumf>, %148, %cst_92 [1] : vector<1x15xf32> to vector<1xf32>
    %150 = vector.shape_cast %149 : vector<1xf32> to vector<1x1xf32>
    %151 = vector.broadcast %150 : vector<1x1xf32> to vector<1x15xf32>
    %152 = arith.subf %148, %151 : vector<1x15xf32>
    %153 = math.exp %152 : vector<1x15xf32>
    %cst_93 = arith.constant dense<0.000000e+00> : vector<1xf32>
    %154 = vector.multi_reduction <add>, %153, %cst_93 [1] : vector<1x15xf32> to vector<1xf32>
    %155 = vector.shape_cast %154 : vector<1xf32> to vector<1x1xf32>
    %156 = math.log %155 : vector<1x1xf32>
    %157 = vector.broadcast %156 : vector<1x1xf32> to vector<1x15xf32>
    %158 = arith.subf %152, %157 : vector<1x15xf32>
    %c0_94 = arith.constant 0 : index
    %c0_95 = arith.constant 0 : index
    %c0_96 = arith.constant 0 : index
    %159 = vector.load %arg8[%c0_94, %c0_95, %c0_96] : memref<1x1x15xf32, #tpu.memory_space<vmem>>, vector<1x1x15xf32>
    %160 = vector.shape_cast %159 : vector<1x1x15xf32> to vector<1x15xf32>
    %161 = vector.shape_cast %158 : vector<1x15xf32> to vector<1x1x15xf32>
    tpu.vector_store %arg8[%c0_94, %c0_95, %c0_96], %161 {strides = array<i32>} : memref<1x1x15xf32, #tpu.memory_space<vmem>>, vector<1x1x15xf32>,
    return
  }
  func.func @transform_0(%arg0: i32) -> (i32, i32, i32, i32) {
    %c0_i32 = arith.constant 0 : i32
    %c0_i32_0 = arith.constant 0 : i32
    %c0_i32_1 = arith.constant 0 : i32
    %c0_i32_2 = arith.constant 0 : i32
    return %arg0, %c0_i32, %c0_i32_0, %c0_i32_1 : i32, i32, i32, i32
  }
  func.func @transform_1(%arg0: i32) -> (i32, i32) {
    %c0_i32 = arith.constant 0 : i32
    %c0_i32_0 = arith.constant 0 : i32
    %c0_i32_1 = arith.constant 0 : i32
    return %c0_i32, %c0_i32_0 : i32, i32
  }
  func.func @transform_2(%arg0: i32) -> (i32, i32) {
    %c0_i32 = arith.constant 0 : i32
    %c0_i32_0 = arith.constant 0 : i32
    %c0_i32_1 = arith.constant 0 : i32
    return %c0_i32, %c0_i32_0 : i32, i32
  }
  func.func @transform_3(%arg0: i32) -> (i32, i32, i32) {
    %c0_i32 = arith.constant 0 : i32
    %c0_i32_0 = arith.constant 0 : i32
    %c0_i32_1 = arith.constant 0 : i32
    %c0_i32_2 = arith.constant 0 : i32
    return %c0_i32, %c0_i32_0, %c0_i32_1 : i32, i32, i32
  }
  func.func @transform_4(%arg0: i32) -> (i32, i32) {
    %c0_i32 = arith.constant 0 : i32
    %c0_i32_0 = arith.constant 0 : i32
    %c0_i32_1 = arith.constant 0 : i32
    return %c0_i32, %c0_i32_0 : i32, i32
  }
  func.func @transform_5(%arg0: i32) -> (i32, i32) {
    %c0_i32 = arith.constant 0 : i32
    %c0_i32_0 = arith.constant 0 : i32
    %c0_i32_1 = arith.constant 0 : i32
    return %c0_i32, %c0_i32_0 : i32, i32
  }
  func.func @transform_6(%arg0: i32) -> (i32, i32) {
    %c0_i32 = arith.constant 0 : i32
    %c0_i32_0 = arith.constant 0 : i32
    %c0_i32_1 = arith.constant 0 : i32
    return %c0_i32, %c0_i32_0 : i32, i32
  }
  func.func @transform_7(%arg0: i32) -> (i32, i32, i32) {
    %c0_i32 = arith.constant 0 : i32
    %c0_i32_0 = arith.constant 0 : i32
    %c0_i32_1 = arith.constant 0 : i32
    return %arg0, %c0_i32, %c0_i32_0 : i32, i32, i32
  }
}

</mosaic_0001>

<llo_original>
// kernel: net_forward.2
$region0: #{net_forward.2}
  #allocation0 [shape = 'u32[]', space=smem, size = 0x4, offset = 0x4, fixed_abs, tag = 'smem constant byte address 0x4 - core index']
  #allocation1 [shape = 'u32[72,128]{1,0:T(1,128)}', space=vmem, size = 0x9000, scoped, tag = 'internal scratch']
  %s0 = inlined_call_operand.vmem [shape: bf16[2,4,25,420], index: 0, kind: input, shape index: {}]
  %s1 = inlined_call_operand.vmem [shape: bf16[10,25], index: 1, kind: input, shape index: {}]
  %s2 = inlined_call_operand.vmem [shape: f32[10,1], index: 2, kind: input, shape index: {}]
  %s3 = inlined_call_operand.vmem [shape: bf16[2,10,420], index: 3, kind: output, shape index: {}]
  %s4 = sld [smem:[#allocation0]]
  $region45: #{net_forward.2} parent=0
    _
  %s6 = ssub.s32 1, %s4
  %s7 = scalar_select 0, %s6, %s4
  loop: start=0, step=1, limit=4
  $region2: #{net_forward.2} parent=0 // loop_pre_header
    _
  $region3: #{net_forward.2} parent=0 // loop_header
    %s9 = sphi 0, %s13
    %p10 = scmp.ge.s32.totalorder %s9, 4
    %s19 = sphi 0, %s21
    %s22 = sphi 0, %s19
    %s23 = sphi 0, %s22
    %s39 = sphi 0, %s23
    %s43 = sphi 0, %s43
    %s45 = sphi 0, %s43
    %s46 = sphi 0, %s45
    %s60 = sphi 0, %s46
    %s64 = sphi 0, %s64
    %s66 = sphi 0, %s64
    %s67 = sphi 0, %s66
    %s81 = sphi 0, %s67
    %s87 = sphi 0, %s89
    %s90 = sphi 0, %s87
    %s91 = sphi 0, %s90
    %s107 = sphi 0, %s91
  $region4: #{net_forward.2} parent=0 // loop_header_branch
    %12 = sbr.rel (%p10) target = $region8
  $region5: #{net_forward.2} parent=0 // loop_body
    %s14 = ssub.s32 %s9, 1
    %s15 = ssub.s32 %s9, 2
    %s16 = sadd.s32 %s9, 1
    %s17 = ssub.s32 %s9, %s16
    %p18 = scmp.eq.s32.totalorder %s17, 0
    %s20 = sadd.s32 %s19, 1
    %s21 = scalar_select %p18, %s19, %s20
    %p24 = pneg %p18
    %p25 = scmp.eq.s32.totalorder %s9, 1
    %p26 = por %p24, %p25
    %p27 = scmp.ne.s32.totalorder %s19, %s22
    %p28 = scmp.eq.s32.totalorder %s9, 0
    %p29 = por %p27, %p28
    %p30 = scmp.ne.s32.totalorder %s19, %s22
    %p31 = scmp.eq.s32.totalorder %s14, 1
    %p32 = por %p30, %p31
    %p33 = scmp.ne.s32.totalorder %s22, %s23
    %p34 = scmp.eq.s32.totalorder %s14, 0
    %p35 = por %p33, %p34
    %p36 = scmp.ne.s32.totalorder %s22, %s23
    %p37 = scmp.eq.s32.totalorder %s15, 1
    %p38 = por %p36, %p37
    %p40 = scmp.ne.s32.totalorder %s23, %s39
    %p41 = scmp.eq.s32.totalorder %s15, 0
    %p42 = por %p40, %p41
    %s44 = sadd.s32 %s43, 1
    %p47 = scmp.eq.s32.totalorder %s9, 1
    %p48 = scmp.ne.s32.totalorder %s43, %s45
    %p49 = scmp.eq.s32.totalorder %s9, 0
    %p50 = por %p48, %p49
    %p51 = scmp.ne.s32.totalorder %s43, %s45
    %p52 = scmp.eq.s32.totalorder %s14, 1
    %p53 = por %p51, %p52
    %p54 = scmp.ne.s32.totalorder %s45, %s46
    %p55 = scmp.eq.s32.totalorder %s14, 0
    %p56 = por %p54, %p55
    %p57 = scmp.ne.s32.totalorder %s45, %s46
    %p58 = scmp.eq.s32.totalorder %s15, 1
    %p59 = por %p57, %p58
    %p61 = scmp.ne.s32.totalorder %s46, %s60
    %p62 = scmp.eq.s32.totalorder %s15, 0
    %p63 = por %p61, %p62
    %s65 = sadd.s32 %s64, 1
    %p68 = scmp.eq.s32.totalorder %s9, 1
    %p69 = scmp.ne.s32.totalorder %s64, %s66
    %p70 = scmp.eq.s32.totalorder %s9, 0
    %p71 = por %p69, %p70
    %p72 = scmp.ne.s32.totalorder %s64, %s66
    %p73 = scmp.eq.s32.totalorder %s14, 1
    %p74 = por %p72, %p73
    %p75 = scmp.ne.s32.totalorder %s66, %s67
    %p76 = scmp.eq.s32.totalorder %s14, 0
    %p77 = por %p75, %p76
    %p78 = scmp.ne.s32.totalorder %s66, %s67
    %p79 = scmp.eq.s32.totalorder %s15, 1
    %p80 = por %p78, %p79
    %p82 = scmp.ne.s32.totalorder %s67, %s81
    %p83 = scmp.eq.s32.totalorder %s15, 0
    %p84 = por %p82, %p83
    %s85 = ssub.s32 %s9, %s16
    %p86 = scmp.eq.s32.totalorder %s85, 0
    %s88 = sadd.s32 %s87, 1
    %s89 = scalar_select %p86, %s87, %s88
    %p92 = pneg %p86
    %p93 = scmp.eq.s32.totalorder %s9, 1
    %p94 = por %p92, %p93
    %p95 = scmp.ne.s32.totalorder %s87, %s90
    %p96 = scmp.eq.s32.totalorder %s9, 0
    %p97 = por %p95, %p96
    %p98 = scmp.ne.s32.totalorder %s87, %s90
    %p99 = scmp.eq.s32.totalorder %s14, 1
    %p100 = por %p98, %p99
    %p101 = scmp.ne.s32.totalorder %s90, %s91
    %p102 = scmp.eq.s32.totalorder %s14, 0
    %p103 = por %p101, %p102
    %p104 = scmp.ne.s32.totalorder %s90, %s91
    %p105 = scmp.eq.s32.totalorder %s15, 1
    %p106 = por %p104, %p105
    %p108 = scmp.ne.s32.totalorder %s91, %s107
    %p109 = scmp.eq.s32.totalorder %s15, 0
    %p110 = por %p108, %p109
    %p111 = scmp.le.s32.totalorder 1, %s9
    %p112 = scmp.lt.s32.totalorder %s9, 3
    %p113 = pnand %p111, %p112
    %p114 = pneg %p113
    // Predicated region
    $region9: #{net_forward.2} parent=5 // pred_check
      _
    $region10: #{net_forward.2} parent=5 // pred_check_branch
      %116 = sbr.rel (%p113) target = $region12
    $region11: #{net_forward.2} parent=5 // pred_region
      %s117 = ssub.s32 %s9, 1
      // Predicated region
      $region13: #{net_forward.2} parent=11 // pred_check
        %p118 = pneg %p56
      $region14: #{net_forward.2} parent=11 // pred_check_branch
        %120 = sbr.rel (%p118) target = $region16
      $region15: #{net_forward.2} parent=11 // pred_region
        _
      $region16: #{net_forward.2} parent=11 // pred_fallthru
        _
      // Predicated region
      $region17: #{net_forward.2} parent=11 // pred_check
        %p121 = pneg %p77
      $region18: #{net_forward.2} parent=11 // pred_check_branch
        %123 = sbr.rel (%p121) target = $region20
      $region19: #{net_forward.2} parent=11 // pred_region
        _
      $region20: #{net_forward.2} parent=11 // pred_fallthru
        _
    $region12: #{net_forward.2} parent=5 // pred_fallthru
      _
    %p124 = scmp.lt.s32.totalorder %s9, 2
    // Predicated region
    $region21: #{net_forward.2} parent=5 // pred_check
      %p125 = pneg %p124
    $region22: #{net_forward.2} parent=5 // pred_check_branch
      %127 = sbr.rel (%p125) target = $region24
    $region23: #{net_forward.2} parent=5 // pred_region
      // Predicated region
      $region25: #{net_forward.2} parent=23 // pred_check
        %p128 = pneg %p29
      $region26: #{net_forward.2} parent=23 // pred_check_branch
        %130 = sbr.rel (%p128) target = $region28
      $region27: #{net_forward.2} parent=23 // pred_region
        %p131 = scmp.lt.s32.totalorder %s9, 1
        %s132 = scalar_select %p131, %s9, 1
        %s133 = smul.addr %s132, 64
        %s134 = smul.addr %s133, 4
        %s135 = scalar_lea.vmem %s0, %s134
      $region28: #{net_forward.2} parent=23 // pred_fallthru
        _
    $region24: #{net_forward.2} parent=5 // pred_fallthru
      _
    %p136 = scmp.le.s32.totalorder 1, %s9
    %p137 = scmp.lt.s32.totalorder %s9, 3
    %p138 = pnand %p136, %p137
    %p139 = pneg %p138
    // Predicated region
    $region29: #{net_forward.2} parent=5 // pred_check
      _
    $region30: #{net_forward.2} parent=5 // pred_check_branch
      %141 = sbr.rel (%p138) target = $region32
    $region31: #{net_forward.2} parent=5 // pred_region
      %s142 = ssub.s32 %s9, 1
      %p143 = scmp.lt.s32.totalorder %s14, 1
      %s144 = scalar_select %p143, %s14, 1
      %s145 = smul.addr %s144, 64
      %s146 = smul.addr %s145, 4
      %s147 = scalar_lea.vmem %s0, %s146
      %p148 = pneg %p35
      %p149 = pneg %p32
      %p150 = pneg %p56
      %p151 = pneg %p53
      %p152 = pneg %p77
      %p153 = pneg %p74
      %p154 = pneg %p103
      %p155 = pneg %p100
      %p156 = scmp.lt.s32.totalorder %s14, 1
      %s157 = scalar_select %p156, %s14, 1
      %s158 = smul.addr %s157, 8
      %s159 = smul.addr %s158, 4
      %s160 = scalar_lea.vmem %s3, %s159
      %p161 = scmp.lt.s32.totalorder %s14, 1
      %s162 = scalar_select %p161, %s14, 1
      %s163 = smul.addr %s162, 64
      %s164 = smul.addr %s163, 4
      %s165 = scalar_lea.vmem %s0, %s164
      %p166 = scmp.lt.s32.totalorder %s14, 1
      %s167 = scalar_select %p166, %s14, 1
      %s168 = smul.addr %s167, 8
      %s169 = smul.addr %s168, 4
      %s170 = scalar_lea.vmem %s3, %s169
      %v172 = vld [vmem:[%s1] sm:$0xf]
      %v173 = vld [vmem:[%s1 + $0x4] sm:$0x1]
      %v174 = vld [vmem:[%s165] sm:$0xff]
      %v175 = vld [vmem:[%s165 + $0x8] sm:$0xff]
      %v176 = vld [vmem:[%s165 + $0x10] sm:$0xff]
      %v177 = vld [vmem:[%s165 + $0x18] sm:$0xff]
      %v178 = vld [vmem:[%s165 + $0x20] sm:$0xff]
      %v179 = vld [vmem:[%s165 + $0x28] sm:$0xff]
      %v180 = vld [vmem:[%s165 + $0x30] sm:$0x11]
      %v181 = vld [vmem:[%s165 + $0x38] sm:$0x11]
      %v184 = vunpack.c.l.b16 %v172
      %v185 = vunpack.c.l.b16 %v173
      %v186 = vpack.c.b16 %v185, %v184
      %v195 = vunpack.c.l.b16 %v174
      %v196 = vunpack.c.h.b16 %v174
      %v197 = vunpack.c.l.b16 %v175
      %v198 = vunpack.c.h.b16 %v175
      %v199 = vunpack.c.l.b16 %v176
      %v200 = vunpack.c.h.b16 %v176
      %v201 = vunpack.c.l.b16 %v177
      %v202 = vunpack.c.h.b16 %v177
      %v203 = vunpack.c.l.b16 %v178
      %v204 = vunpack.c.h.b16 %v178
      %v205 = vunpack.c.l.b16 %v179
      %v206 = vunpack.c.h.b16 %v179
      %v207 = vunpack.c.l.b16 %v180
      %v208 = vunpack.c.h.b16 %v180
      %v209 = vunpack.c.l.b16 %v181
      %v210 = vunpack.c.h.b16 %v181
      %v211 = vpack.c.b16 %v199, %v195
      %v212 = vpack.c.b16 %v200, %v196
      %v213 = vpack.c.b16 %v201, %v197
      %v214 = vpack.c.b16 %v202, %v198
      %v215 = vpack.c.b16 %v207, %v203
      %v216 = vpack.c.b16 %v208, %v204
      %v217 = vpack.c.b16 %v209, %v205
      %v218 = vpack.c.b16 %v210, %v206
      %vm223 = vcmask 203776
      %v225 = vsel %vm223, %v186, 0
      %vm227 = vcmask 1043456
      %vm228 = vcmask 1044480
      %v229 = vsel %vm227, 4294967295, 65535
      %v230 = vsel %vm228, %v229, 0
      %v232 = vand.u32 %v215, %v230
      %v235 = vand.u32 %v216, %v230
      %v238 = vand.u32 %v217, %v230
      %v241 = vand.u32 %v218, %v230
      %243 = vmatpush.bf16.msra.mxu0 0
      %244 = vmatpush.bf16.msra.mxu0 0
      %245 = vmatpush.bf16.msra.mxu0 0
      %246 = vmatpush.bf16.msra.mxu0 0
      %247 = vmatpush.bf16.msra.mxu0 0
      %248 = vmatpush.bf16.msra.mxu0 0
      %249 = vmatpush.bf16.msra.mxu0 %v232
      %250 = vmatpush.bf16.msra.mxu0 %v211
      %251 = vmatmul.bf16.gmra.mxu0 %v225
      %v252 = vpop.f32.mrf.mxu0
      %v253 = vadd.f32 0.0, %v252
      %v254 = vpop.f32.mrf.mxu0
      %v255 = vadd.f32 0.0, %v254
      %256 = vdwg.mxu0
      %257 = vmatpush.bf16.msra.mxu0 0
      %258 = vmatpush.bf16.msra.mxu0 0
      %259 = vmatpush.bf16.msra.mxu0 0
      %260 = vmatpush.bf16.msra.mxu0 0
      %261 = vmatpush.bf16.msra.mxu0 0
      %262 = vmatpush.bf16.msra.mxu0 0
      %263 = vmatpush.bf16.msra.mxu0 %v235
      %264 = vmatpush.bf16.msra.mxu0 %v212
      %265 = vmatmul.bf16.gmra.mxu0 %v225
      %v266 = vpop.f32.mrf.mxu0
      %v267 = vadd.f32 0.0, %v266
      %v268 = vpop.f32.mrf.mxu0
      %v269 = vadd.f32 0.0, %v268
      %270 = vdwg.mxu0
      %271 = vmatpush.bf16.msra.mxu0 0
      %272 = vmatpush.bf16.msra.mxu0 0
      %273 = vmatpush.bf16.msra.mxu0 0
      %274 = vmatpush.bf16.msra.mxu0 0
      %275 = vmatpush.bf16.msra.mxu0 0
      %276 = vmatpush.bf16.msra.mxu0 0
      %277 = vmatpush.bf16.msra.mxu0 %v238
      %278 = vmatpush.bf16.msra.mxu0 %v213
      %279 = vmatmul.bf16.gmra.mxu0 %v225
      %v280 = vpop.f32.mrf.mxu0
      %v281 = vadd.f32 0.0, %v280
      %v282 = vpop.f32.mrf.mxu0
      %v283 = vadd.f32 0.0, %v282
      %284 = vdwg.mxu0
      %285 = vmatpush.bf16.msra.mxu0 0
      %286 = vmatpush.bf16.msra.mxu0 0
      %287 = vmatpush.bf16.msra.mxu0 0
      %288 = vmatpush.bf16.msra.mxu0 0
      %289 = vmatpush.bf16.msra.mxu0 0
      %290 = vmatpush.bf16.msra.mxu0 0
      %291 = vmatpush.bf16.msra.mxu0 %v241
      %292 = vmatpush.bf16.msra.mxu0 %v214
      %293 = vmatmul.bf16.gmra.mxu0 %v225
      %v294 = vpop.f32.mrf.mxu0
      %v295 = vadd.f32 0.0, %v294
      %v296 = vpop.f32.mrf.mxu0
      %v297 = vadd.f32 0.0, %v296
      %298 = vdwg.mxu0
      %s299 = scalar_lea.vmem %s165, 64
      %v300 = vld [vmem:[%s299] sm:$0xff]
      %v301 = vld [vmem:[%s299 + $0x8] sm:$0xff]
      %v302 = vld [vmem:[%s299 + $0x10] sm:$0xff]
      %v303 = vld [vmem:[%s299 + $0x18] sm:$0xff]
      %v304 = vld [vmem:[%s299 + $0x20] sm:$0xff]
      %v305 = vld [vmem:[%s299 + $0x28] sm:$0xff]
      %v306 = vld [vmem:[%s299 + $0x30] sm:$0x11]
      %v307 = vld [vmem:[%s299 + $0x38] sm:$0x11]
      %v316 = vunpack.c.l.b16 %v300
      %v317 = vunpack.c.h.b16 %v300
      %v318 = vunpack.c.l.b16 %v301
      %v319 = vunpack.c.h.b16 %v301
      %v320 = vunpack.c.l.b16 %v302
      %v321 = vunpack.c.h.b16 %v302
      %v322 = vunpack.c.l.b16 %v303
      %v323 = vunpack.c.h.b16 %v303
      %v324 = vunpack.c.l.b16 %v304
      %v325 = vunpack.c.h.b16 %v304
      %v326 = vunpack.c.l.b16 %v305
      %v327 = vunpack.c.h.b16 %v305
      %v328 = vunpack.c.l.b16 %v306
      %v329 = vunpack.c.h.b16 %v306
      %v330 = vunpack.c.l.b16 %v307
      %v331 = vunpack.c.h.b16 %v307
      %v332 = vpack.c.b16 %v320, %v316
      %v333 = vpack.c.b16 %v321, %v317
      %v334 = vpack.c.b16 %v322, %v318
      %v335 = vpack.c.b16 %v323, %v319
      %v336 = vpack.c.b16 %v328, %v324
      %v337 = vpack.c.b16 %v329, %v325
      %v338 = vpack.c.b16 %v330, %v326
      %v339 = vpack.c.b16 %v331, %v327
      %v345 = vand.u32 %v336, %v230
      %v348 = vand.u32 %v337, %v230
      %v351 = vand.u32 %v338, %v230
      %v354 = vand.u32 %v339, %v230
      %356 = vmatpush.bf16.msra.mxu0 0
      %357 = vmatpush.bf16.msra.mxu0 0
      %358 = vmatpush.bf16.msra.mxu0 0
      %359 = vmatpush.bf16.msra.mxu0 0
      %360 = vmatpush.bf16.msra.mxu0 0
      %361 = vmatpush.bf16.msra.mxu0 0
      %362 = vmatpush.bf16.msra.mxu0 %v345
      %363 = vmatpush.bf16.msra.mxu0 %v332
      %364 = vmatmul.bf16.gmra.mxu0 %v225
      %v365 = vpop.f32.mrf.mxu0
      %v366 = vadd.f32 0.0, %v365
      %v367 = vpop.f32.mrf.mxu0
      %v368 = vadd.f32 0.0, %v367
      %369 = vdwg.mxu0
      %370 = vmatpush.bf16.msra.mxu0 0
      %371 = vmatpush.bf16.msra.mxu0 0
      %372 = vmatpush.bf16.msra.mxu0 0
      %373 = vmatpush.bf16.msra.mxu0 0
      %374 = vmatpush.bf16.msra.mxu0 0
      %375 = vmatpush.bf16.msra.mxu0 0
      %376 = vmatpush.bf16.msra.mxu0 %v348
      %377 = vmatpush.bf16.msra.mxu0 %v333
      %378 = vmatmul.bf16.gmra.mxu0 %v225
      %v379 = vpop.f32.mrf.mxu0
      %v380 = vadd.f32 0.0, %v379
      %v381 = vpop.f32.mrf.mxu0
      %v382 = vadd.f32 0.0, %v381
      %383 = vdwg.mxu0
      %384 = vmatpush.bf16.msra.mxu0 0
      %385 = vmatpush.bf16.msra.mxu0 0
      %386 = vmatpush.bf16.msra.mxu0 0
      %387 = vmatpush.bf16.msra.mxu0 0
      %388 = vmatpush.bf16.msra.mxu0 0
      %389 = vmatpush.bf16.msra.mxu0 0
      %390 = vmatpush.bf16.msra.mxu0 %v351
      %391 = vmatpush.bf16.msra.mxu0 %v334
      %392 = vmatmul.bf16.gmra.mxu0 %v225
      %v393 = vpop.f32.mrf.mxu0
      %v394 = vadd.f32 0.0, %v393
      %v395 = vpop.f32.mrf.mxu0
      %v396 = vadd.f32 0.0, %v395
      %397 = vdwg.mxu0
      %398 = vmatpush.bf16.msra.mxu0 0
      %399 = vmatpush.bf16.msra.mxu0 0
      %400 = vmatpush.bf16.msra.mxu0 0
      %401 = vmatpush.bf16.msra.mxu0 0
      %402 = vmatpush.bf16.msra.mxu0 0
      %403 = vmatpush.bf16.msra.mxu0 0
      %404 = vmatpush.bf16.msra.mxu0 %v354
      %405 = vmatpush.bf16.msra.mxu0 %v335
      %406 = vmatmul.bf16.gmra.mxu0 %v225
      %v407 = vpop.f32.mrf.mxu0
      %v408 = vadd.f32 0.0, %v407
      %v409 = vpop.f32.mrf.mxu0
      %v410 = vadd.f32 0.0, %v409
      %411 = vdwg.mxu0
      %v412 = vmax.f32 %v253, %v366
      %v413 = vmax.f32 %v267, %v380
      %v414 = vmax.f32 %v281, %v394
      %v415 = vmax.f32 %v295, %v408
      %v416 = vmax.f32 %v255, %v368
      %v417 = vmax.f32 %v269, %v382
      %v418 = vmax.f32 %v283, %v396
      %v419 = vmax.f32 %v297, %v410
      %s420 = scalar_lea.vmem %s165, 128
      %v421 = vld [vmem:[%s420] sm:$0xff]
      %v422 = vld [vmem:[%s420 + $0x8] sm:$0xff]
      %v423 = vld [vmem:[%s420 + $0x10] sm:$0xff]
      %v424 = vld [vmem:[%s420 + $0x18] sm:$0xff]
      %v425 = vld [vmem:[%s420 + $0x20] sm:$0xff]
      %v426 = vld [vmem:[%s420 + $0x28] sm:$0xff]
      %v427 = vld [vmem:[%s420 + $0x30] sm:$0x11]
      %v428 = vld [vmem:[%s420 + $0x38] sm:$0x11]
      %v437 = vunpack.c.l.b16 %v421
      %v438 = vunpack.c.h.b16 %v421
      %v439 = vunpack.c.l.b16 %v422
      %v440 = vunpack.c.h.b16 %v422
      %v441 = vunpack.c.l.b16 %v423
      %v442 = vunpack.c.h.b16 %v423
      %v443 = vunpack.c.l.b16 %v424
      %v444 = vunpack.c.h.b16 %v424
      %v445 = vunpack.c.l.b16 %v425
      %v446 = vunpack.c.h.b16 %v425
      %v447 = vunpack.c.l.b16 %v426
      %v448 = vunpack.c.h.b16 %v426
      %v449 = vunpack.c.l.b16 %v427
      %v450 = vunpack.c.h.b16 %v427
      %v451 = vunpack.c.l.b16 %v428
      %v452 = vunpack.c.h.b16 %v428
      %v453 = vpack.c.b16 %v441, %v437
      %v454 = vpack.c.b16 %v442, %v438
      %v455 = vpack.c.b16 %v443, %v439
      %v456 = vpack.c.b16 %v444, %v440
      %v457 = vpack.c.b16 %v449, %v445
      %v458 = vpack.c.b16 %v450, %v446
      %v459 = vpack.c.b16 %v451, %v447
      %v460 = vpack.c.b16 %v452, %v448
      %v466 = vand.u32 %v457, %v230
      %v469 = vand.u32 %v458, %v230
      %v472 = vand.u32 %v459, %v230
      %v475 = vand.u32 %v460, %v230
      %477 = vmatpush.bf16.msra.mxu0 0
      %478 = vmatpush.bf16.msra.mxu0 0
      %479 = vmatpush.bf16.msra.mxu0 0
      %480 = vmatpush.bf16.msra.mxu0 0
      %481 = vmatpush.bf16.msra.mxu0 0
      %482 = vmatpush.bf16.msra.mxu0 0
      %483 = vmatpush.bf16.msra.mxu0 %v466
      %484 = vmatpush.bf16.msra.mxu0 %v453
      %485 = vmatmul.bf16.gmra.mxu0 %v225
      %v486 = vpop.f32.mrf.mxu0
      %v487 = vadd.f32 0.0, %v486
      %v488 = vpop.f32.mrf.mxu0
      %v489 = vadd.f32 0.0, %v488
      %490 = vdwg.mxu0
      %491 = vmatpush.bf16.msra.mxu0 0
      %492 = vmatpush.bf16.msra.mxu0 0
      %493 = vmatpush.bf16.msra.mxu0 0
      %494 = vmatpush.bf16.msra.mxu0 0
      %495 = vmatpush.bf16.msra.mxu0 0
      %496 = vmatpush.bf16.msra.mxu0 0
      %497 = vmatpush.bf16.msra.mxu0 %v469
      %498 = vmatpush.bf16.msra.mxu0 %v454
      %499 = vmatmul.bf16.gmra.mxu0 %v225
      %v500 = vpop.f32.mrf.mxu0
      %v501 = vadd.f32 0.0, %v500
      %v502 = vpop.f32.mrf.mxu0
      %v503 = vadd.f32 0.0, %v502
      %504 = vdwg.mxu0
      %505 = vmatpush.bf16.msra.mxu0 0
      %506 = vmatpush.bf16.msra.mxu0 0
      %507 = vmatpush.bf16.msra.mxu0 0
      %508 = vmatpush.bf16.msra.mxu0 0
      %509 = vmatpush.bf16.msra.mxu0 0
      %510 = vmatpush.bf16.msra.mxu0 0
      %511 = vmatpush.bf16.msra.mxu0 %v472
      %512 = vmatpush.bf16.msra.mxu0 %v455
      %513 = vmatmul.bf16.gmra.mxu0 %v225
      %v514 = vpop.f32.mrf.mxu0
      %v515 = vadd.f32 0.0, %v514
      %v516 = vpop.f32.mrf.mxu0
      %v517 = vadd.f32 0.0, %v516
      %518 = vdwg.mxu0
      %519 = vmatpush.bf16.msra.mxu0 0
      %520 = vmatpush.bf16.msra.mxu0 0
      %521 = vmatpush.bf16.msra.mxu0 0
      %522 = vmatpush.bf16.msra.mxu0 0
      %523 = vmatpush.bf16.msra.mxu0 0
      %524 = vmatpush.bf16.msra.mxu0 0
      %525 = vmatpush.bf16.msra.mxu0 %v475
      %526 = vmatpush.bf16.msra.mxu0 %v456
      %527 = vmatmul.bf16.gmra.mxu0 %v225
      %v528 = vpop.f32.mrf.mxu0
      %v529 = vadd.f32 0.0, %v528
      %v530 = vpop.f32.mrf.mxu0
      %v531 = vadd.f32 0.0, %v530
      %532 = vdwg.mxu0
      %v533 = vmax.f32 %v412, %v487
      %v534 = vmax.f32 %v413, %v501
      %v535 = vmax.f32 %v414, %v515
      %v536 = vmax.f32 %v415, %v529
      %v537 = vmax.f32 %v416, %v489
      %v538 = vmax.f32 %v417, %v503
      %v539 = vmax.f32 %v418, %v517
      %v540 = vmax.f32 %v419, %v531
      %s541 = scalar_lea.vmem %s165, 192
      %v542 = vld [vmem:[%s541] sm:$0xff]
      %v543 = vld [vmem:[%s541 + $0x8] sm:$0xff]
      %v544 = vld [vmem:[%s541 + $0x10] sm:$0xff]
      %v545 = vld [vmem:[%s541 + $0x18] sm:$0xff]
      %v546 = vld [vmem:[%s541 + $0x20] sm:$0xff]
      %v547 = vld [vmem:[%s541 + $0x28] sm:$0xff]
      %v548 = vld [vmem:[%s541 + $0x30] sm:$0x11]
      %v549 = vld [vmem:[%s541 + $0x38] sm:$0x11]
      %v558 = vunpack.c.l.b16 %v542
      %v559 = vunpack.c.h.b16 %v542
      %v560 = vunpack.c.l.b16 %v543
      %v561 = vunpack.c.h.b16 %v543
      %v562 = vunpack.c.l.b16 %v544
      %v563 = vunpack.c.h.b16 %v544
      %v564 = vunpack.c.l.b16 %v545
      %v565 = vunpack.c.h.b16 %v545
      %v566 = vunpack.c.l.b16 %v546
      %v567 = vunpack.c.h.b16 %v546
      %v568 = vunpack.c.l.b16 %v547
      %v569 = vunpack.c.h.b16 %v547
      %v570 = vunpack.c.l.b16 %v548
      %v571 = vunpack.c.h.b16 %v548
      %v572 = vunpack.c.l.b16 %v549
      %v573 = vunpack.c.h.b16 %v549
      %v574 = vpack.c.b16 %v562, %v558
      %v575 = vpack.c.b16 %v563, %v559
      %v576 = vpack.c.b16 %v564, %v560
      %v577 = vpack.c.b16 %v565, %v561
      %v578 = vpack.c.b16 %v570, %v566
      %v579 = vpack.c.b16 %v571, %v567
      %v580 = vpack.c.b16 %v572, %v568
      %v581 = vpack.c.b16 %v573, %v569
      %v587 = vand.u32 %v578, %v230
      %v590 = vand.u32 %v579, %v230
      %v593 = vand.u32 %v580, %v230
      %v596 = vand.u32 %v581, %v230
      %598 = vmatpush.bf16.msra.mxu0 0
      %599 = vmatpush.bf16.msra.mxu0 0
      %600 = vmatpush.bf16.msra.mxu0 0
      %601 = vmatpush.bf16.msra.mxu0 0
      %602 = vmatpush.bf16.msra.mxu0 0
      %603 = vmatpush.bf16.msra.mxu0 0
      %604 = vmatpush.bf16.msra.mxu0 %v587
      %605 = vmatpush.bf16.msra.mxu0 %v574
      %606 = vmatmul.bf16.gmra.mxu0 %v225
      %v607 = vpop.f32.mrf.mxu0
      %v608 = vadd.f32 0.0, %v607
      %v609 = vpop.f32.mrf.mxu0
      %v610 = vadd.f32 0.0, %v609
      %611 = vdwg.mxu0
      %612 = vmatpush.bf16.msra.mxu0 0
      %613 = vmatpush.bf16.msra.mxu0 0
      %614 = vmatpush.bf16.msra.mxu0 0
      %615 = vmatpush.bf16.msra.mxu0 0
      %616 = vmatpush.bf16.msra.mxu0 0
      %617 = vmatpush.bf16.msra.mxu0 0
      %618 = vmatpush.bf16.msra.mxu0 %v590
      %619 = vmatpush.bf16.msra.mxu0 %v575
      %620 = vmatmul.bf16.gmra.mxu0 %v225
      %v621 = vpop.f32.mrf.mxu0
      %v622 = vadd.f32 0.0, %v621
      %v623 = vpop.f32.mrf.mxu0
      %v624 = vadd.f32 0.0, %v623
      %625 = vdwg.mxu0
      %626 = vmatpush.bf16.msra.mxu0 0
      %627 = vmatpush.bf16.msra.mxu0 0
      %628 = vmatpush.bf16.msra.mxu0 0
      %629 = vmatpush.bf16.msra.mxu0 0
      %630 = vmatpush.bf16.msra.mxu0 0
      %631 = vmatpush.bf16.msra.mxu0 0
      %632 = vmatpush.bf16.msra.mxu0 %v593
      %633 = vmatpush.bf16.msra.mxu0 %v576
      %634 = vmatmul.bf16.gmra.mxu0 %v225
      %v635 = vpop.f32.mrf.mxu0
      %v636 = vadd.f32 0.0, %v635
      %v637 = vpop.f32.mrf.mxu0
      %v638 = vadd.f32 0.0, %v637
      %639 = vdwg.mxu0
      %640 = vmatpush.bf16.msra.mxu0 0
      %641 = vmatpush.bf16.msra.mxu0 0
      %642 = vmatpush.bf16.msra.mxu0 0
      %643 = vmatpush.bf16.msra.mxu0 0
      %644 = vmatpush.bf16.msra.mxu0 0
      %645 = vmatpush.bf16.msra.mxu0 0
      %646 = vmatpush.bf16.msra.mxu0 %v596
      %647 = vmatpush.bf16.msra.mxu0 %v577
      %648 = vmatmul.bf16.gmra.mxu0 %v225
      %v649 = vpop.f32.mrf.mxu0
      %v650 = vadd.f32 0.0, %v649
      %v651 = vpop.f32.mrf.mxu0
      %v652 = vadd.f32 0.0, %v651
      %653 = vdwg.mxu0
      %v654 = vmax.f32 %v533, %v608
      %v655 = vmax.f32 %v534, %v622
      %v656 = vmax.f32 %v535, %v636
      %v657 = vmax.f32 %v536, %v650
      %v658 = vmax.f32 %v537, %v610
      %v659 = vmax.f32 %v538, %v624
      %v660 = vmax.f32 %v539, %v638
      %v661 = vmax.f32 %v540, %v652
      %v662 = vld [vmem:[%s2] sm:$0xff]
      %v663 = vld [vmem:[%s2 + $0x8] sm:$0x3]
      %665 = vset.pattern.permute.xlu0 0
      %666 = vperm.xlu0 %665, %v662
      %v667 = vpop.permute.xlu0 %666
      %670 = vset.pattern.permute.xlu0 0
      %671 = vperm.xlu0 %670, %v663
      %v672 = vpop.permute.xlu0 %671
      %v674 = vadd.f32 %v654, %v667
      %v675 = vadd.f32 %v655, %v667
      %v676 = vadd.f32 %v656, %v667
      %v677 = vadd.f32 %v657, %v667
      %v678 = vadd.f32 %v658, %v672
      %v679 = vadd.f32 %v659, %v672
      %v680 = vadd.f32 %v660, %v672
      %v681 = vadd.f32 %v661, %v672
      %v682 = vmax.f32 %v674, 0.0
      %v683 = vmax.f32 %v675, 0.0
      %v684 = vmax.f32 %v676, 0.0
      %v685 = vmax.f32 %v677, 0.0
      %v686 = vmax.f32 %v678, 0.0
      %v687 = vmax.f32 %v679, 0.0
      %v688 = vmax.f32 %v680, 0.0
      %v689 = vmax.f32 %v681, 0.0
      %v690 = vpack.c.bf16 %v683, %v682
      %v691 = vpack.c.bf16 %v685, %v684
      %v692 = vpack.c.bf16 %v687, %v686
      %v693 = vpack.c.bf16 %v689, %v688
      %694 = vst [vmem:[%s170] sm:$0xff] %v690
      %vm695 = vcmask 293892
      %vm696 = vmor %vm695, %vm227
      %697 = vst.msk [vmem:[%s170 + $0x8] sm:$0xff] %vm696, %v691
      %698 = vst [vmem:[%s170 + $0x10] sm:$0x11] %v692
      %vm699 = vcmask 1040384
      %vm700 = vcmask 290820
      %vm701 = vmor %vm700, %vm699
      %702 = vst.msk [vmem:[%s170 + $0x18] sm:$0x11] %vm701, %v693
      %p703 = scmp.lt.s32.totalorder %s14, 1
      %s704 = scalar_select %p703, %s14, 1
      %s705 = smul.addr %s704, 8
      %s706 = smul.addr %s705, 4
      %s707 = scalar_lea.vmem %s3, %s706
      // Predicated region
      $region33: #{net_forward.2} parent=31 // pred_check
        %p708 = pneg %p100
      $region34: #{net_forward.2} parent=31 // pred_check_branch
        %710 = sbr.rel (%p708) target = $region36
      $region35: #{net_forward.2} parent=31 // pred_region
        _
      $region36: #{net_forward.2} parent=31 // pred_fallthru
        _
    $region32: #{net_forward.2} parent=5 // pred_fallthru
      _
    %p711 = scmp.le.s32.totalorder 2, %s9
    // Predicated region
    $region37: #{net_forward.2} parent=5 // pred_check
      %p712 = pneg %p711
    $region38: #{net_forward.2} parent=5 // pred_check_branch
      %714 = sbr.rel (%p712) target = $region40
    $region39: #{net_forward.2} parent=5 // pred_region
      %s715 = ssub.s32 %s9, 2
      // Predicated region
      $region41: #{net_forward.2} parent=39 // pred_check
        %p716 = pneg %p106
      $region42: #{net_forward.2} parent=39 // pred_check_branch
        %718 = sbr.rel (%p716) target = $region44
      $region43: #{net_forward.2} parent=39 // pred_region
        %p719 = scmp.lt.s32.totalorder %s15, 1
        %s720 = scalar_select %p719, %s15, 1
        %s721 = smul.addr %s720, 8
        %s722 = smul.addr %s721, 4
        %s723 = scalar_lea.vmem %s3, %s722
      $region44: #{net_forward.2} parent=39 // pred_fallthru
        _
    $region40: #{net_forward.2} parent=5 // pred_fallthru
      _
  $region6: #{net_forward.2} parent=0 // loop_footer
    %s13 = sadd.s32 1, %s9
  $region7: #{net_forward.2} parent=0 // loop_footer_branch
    %8 = sbr.rel target = $region3
  $region8: #{net_forward.2} parent=0 // loop_exit
    _

// kernel: net_forward.3
$region0: #{net_forward.3}
  #allocation0 [shape = 'u32[]', space=smem, size = 0x4, offset = 0x4, fixed_abs, tag = 'smem constant byte address 0x4 - core index']
  #allocation1 [shape = 'u32[72,128]{1,0:T(1,128)}', space=vmem, size = 0x9000, scoped, tag = 'internal scratch']
  %s0 = inlined_call_operand.vmem [shape: bf16[2,4,250,105], index: 0, kind: input, shape index: {}]
  %s1 = inlined_call_operand.vmem [shape: bf16[20,250], index: 1, kind: input, shape index: {}]
  %s2 = inlined_call_operand.vmem [shape: f32[20,1], index: 2, kind: input, shape index: {}]
  %s3 = inlined_call_operand.vmem [shape: bf16[20,105,50], index: 3, kind: input, shape index: {}]
  %s4 = inlined_call_operand.vmem [shape: f32[1,50], index: 4, kind: input, shape index: {}]
  %s5 = inlined_call_operand.vmem [shape: bf16[50,15], index: 5, kind: input, shape index: {}]
  %s6 = inlined_call_operand.vmem [shape: f32[1,15], index: 6, kind: input, shape index: {}]
  %s7 = inlined_call_operand.hbm [shape: f32[2,1,15], index: 7, kind: output, shape index: {}]
  %s8 = sld [smem:[#allocation0]]
  $region61: #{net_forward.3} parent=0
    _
  %s10 = ssub.s32 1, %s8
  %s11 = scalar_select 0, %s10, %s8
  $region1: #{net_forward.3} parent=0
    #allocation2 [shape = 'u8[1024]{0}', space=vmem, size = 0x400, scoped, tag = 'output window, operand 0']
    #allocation3 [shape = 's32[2]{0}', space=sflag, size = 0x8, scoped, tag = 'scoped memory for net_forward.3']
    %12 = vsyncpa [#allocation3], 0
    %s13 = scalar_lea.sflag [#allocation3], 1
    %14 = vsyncpa %s13, 0
    loop: start=0, step=1, limit=4
    $region2: #{net_forward.3} parent=1 // loop_pre_header
      _
    $region3: #{net_forward.3} parent=1 // loop_header
      %s16 = sphi 0, %s20
      %p17 = scmp.ge.s32.totalorder %s16, 4
      %s26 = sphi 0, %s28
      %s29 = sphi 0, %s26
      %s30 = sphi 0, %s29
      %s46 = sphi 0, %s30
      %s50 = sphi 0, %s50
      %s52 = sphi 0, %s50
      %s53 = sphi 0, %s52
      %s67 = sphi 0, %s53
      %s71 = sphi 0, %s71
      %s73 = sphi 0, %s71
      %s74 = sphi 0, %s73
      %s88 = sphi 0, %s74
      %s92 = sphi 0, %s92
      %s94 = sphi 0, %s92
      %s95 = sphi 0, %s94
      %s109 = sphi 0, %s95
      %s113 = sphi 0, %s113
      %s115 = sphi 0, %s113
      %s116 = sphi 0, %s115
      %s130 = sphi 0, %s116
      %s134 = sphi 0, %s134
      %s136 = sphi 0, %s134
      %s137 = sphi 0, %s136
      %s151 = sphi 0, %s137
      %s155 = sphi 0, %s155
      %s157 = sphi 0, %s155
      %s158 = sphi 0, %s157
      %s172 = sphi 0, %s158
      %s178 = sphi 0, %s180
      %s181 = sphi 0, %s178
      %s182 = sphi 0, %s181
      %s198 = sphi 0, %s182
    $region4: #{net_forward.3} parent=1 // loop_header_branch
      %19 = sbr.rel (%p17) target = $region8
    $region5: #{net_forward.3} parent=1 // loop_body
      %s21 = ssub.s32 %s16, 1
      %s22 = ssub.s32 %s16, 2
      %s23 = sadd.s32 %s16, 1
      %s24 = ssub.s32 %s16, %s23
      %p25 = scmp.eq.s32.totalorder %s24, 0
      %s27 = sadd.s32 %s26, 1
      %s28 = scalar_select %p25, %s26, %s27
      %p31 = pneg %p25
      %p32 = scmp.eq.s32.totalorder %s16, 1
      %p33 = por %p31, %p32
      %p34 = scmp.ne.s32.totalorder %s26, %s29
      %p35 = scmp.eq.s32.totalorder %s16, 0
      %p36 = por %p34, %p35
      %p37 = scmp.ne.s32.totalorder %s26, %s29
      %p38 = scmp.eq.s32.totalorder %s21, 1
      %p39 = por %p37, %p38
      %p40 = scmp.ne.s32.totalorder %s29, %s30
      %p41 = scmp.eq.s32.totalorder %s21, 0
      %p42 = por %p40, %p41
      %p43 = scmp.ne.s32.totalorder %s29, %s30
      %p44 = scmp.eq.s32.totalorder %s22, 1
      %p45 = por %p43, %p44
      %p47 = scmp.ne.s32.totalorder %s30, %s46
      %p48 = scmp.eq.s32.totalorder %s22, 0
      %p49 = por %p47, %p48
      %s51 = sadd.s32 %s50, 1
      %p54 = scmp.eq.s32.totalorder %s16, 1
      %p55 = scmp.ne.s32.totalorder %s50, %s52
      %p56 = scmp.eq.s32.totalorder %s16, 0
      %p57 = por %p55, %p56
      %p58 = scmp.ne.s32.totalorder %s50, %s52
      %p59 = scmp.eq.s32.totalorder %s21, 1
      %p60 = por %p58, %p59
      %p61 = scmp.ne.s32.totalorder %s52, %s53
      %p62 = scmp.eq.s32.totalorder %s21, 0
      %p63 = por %p61, %p62
      %p64 = scmp.ne.s32.totalorder %s52, %s53
      %p65 = scmp.eq.s32.totalorder %s22, 1
      %p66 = por %p64, %p65
      %p68 = scmp.ne.s32.totalorder %s53, %s67
      %p69 = scmp.eq.s32.totalorder %s22, 0
      %p70 = por %p68, %p69
      %s72 = sadd.s32 %s71, 1
      %p75 = scmp.eq.s32.totalorder %s16, 1
      %p76 = scmp.ne.s32.totalorder %s71, %s73
      %p77 = scmp.eq.s32.totalorder %s16, 0
      %p78 = por %p76, %p77
      %p79 = scmp.ne.s32.totalorder %s71, %s73
      %p80 = scmp.eq.s32.totalorder %s21, 1
      %p81 = por %p79, %p80
      %p82 = scmp.ne.s32.totalorder %s73, %s74
      %p83 = scmp.eq.s32.totalorder %s21, 0
      %p84 = por %p82, %p83
      %p85 = scmp.ne.s32.totalorder %s73, %s74
      %p86 = scmp.eq.s32.totalorder %s22, 1
      %p87 = por %p85, %p86
      %p89 = scmp.ne.s32.totalorder %s74, %s88
      %p90 = scmp.eq.s32.totalorder %s22, 0
      %p91 = por %p89, %p90
      %s93 = sadd.s32 %s92, 1
      %p96 = scmp.eq.s32.totalorder %s16, 1
      %p97 = scmp.ne.s32.totalorder %s92, %s94
      %p98 = scmp.eq.s32.totalorder %s16, 0
      %p99 = por %p97, %p98
      %p100 = scmp.ne.s32.totalorder %s92, %s94
      %p101 = scmp.eq.s32.totalorder %s21, 1
      %p102 = por %p100, %p101
      %p103 = scmp.ne.s32.totalorder %s94, %s95
      %p104 = scmp.eq.s32.totalorder %s21, 0
      %p105 = por %p103, %p104
      %p106 = scmp.ne.s32.totalorder %s94, %s95
      %p107 = scmp.eq.s32.totalorder %s22, 1
      %p108 = por %p106, %p107
      %p110 = scmp.ne.s32.totalorder %s95, %s109
      %p111 = scmp.eq.s32.totalorder %s22, 0
      %p112 = por %p110, %p111
      %s114 = sadd.s32 %s113, 1
      %p117 = scmp.eq.s32.totalorder %s16, 1
      %p118 = scmp.ne.s32.totalorder %s113, %s115
      %p119 = scmp.eq.s32.totalorder %s16, 0
      %p120 = por %p118, %p119
      %p121 = scmp.ne.s32.totalorder %s113, %s115
      %p122 = scmp.eq.s32.totalorder %s21, 1
      %p123 = por %p121, %p122
      %p124 = scmp.ne.s32.totalorder %s115, %s116
      %p125 = scmp.eq.s32.totalorder %s21, 0
      %p126 = por %p124, %p125
      %p127 = scmp.ne.s32.totalorder %s115, %s116
      %p128 = scmp.eq.s32.totalorder %s22, 1
      %p129 = por %p127, %p128
      %p131 = scmp.ne.s32.totalorder %s116, %s130
      %p132 = scmp.eq.s32.totalorder %s22, 0
      %p133 = por %p131, %p132
      %s135 = sadd.s32 %s134, 1
      %p138 = scmp.eq.s32.totalorder %s16, 1
      %p139 = scmp.ne.s32.totalorder %s134, %s136
      %p140 = scmp.eq.s32.totalorder %s16, 0
      %p141 = por %p139, %p140
      %p142 = scmp.ne.s32.totalorder %s134, %s136
      %p143 = scmp.eq.s32.totalorder %s21, 1
      %p144 = por %p142, %p143
      %p145 = scmp.ne.s32.totalorder %s136, %s137
      %p146 = scmp.eq.s32.totalorder %s21, 0
      %p147 = por %p145, %p146
      %p148 = scmp.ne.s32.totalorder %s136, %s137
      %p149 = scmp.eq.s32.totalorder %s22, 1
      %p150 = por %p148, %p149
      %p152 = scmp.ne.s32.totalorder %s137, %s151
      %p153 = scmp.eq.s32.totalorder %s22, 0
      %p154 = por %p152, %p153
      %s156 = sadd.s32 %s155, 1
      %p159 = scmp.eq.s32.totalorder %s16, 1
      %p160 = scmp.ne.s32.totalorder %s155, %s157
      %p161 = scmp.eq.s32.totalorder %s16, 0
      %p162 = por %p160, %p161
      %p163 = scmp.ne.s32.totalorder %s155, %s157
      %p164 = scmp.eq.s32.totalorder %s21, 1
      %p165 = por %p163, %p164
      %p166 = scmp.ne.s32.totalorder %s157, %s158
      %p167 = scmp.eq.s32.totalorder %s21, 0
      %p168 = por %p166, %p167
      %p169 = scmp.ne.s32.totalorder %s157, %s158
      %p170 = scmp.eq.s32.totalorder %s22, 1
      %p171 = por %p169, %p170
      %p173 = scmp.ne.s32.totalorder %s158, %s172
      %p174 = scmp.eq.s32.totalorder %s22, 0
      %p175 = por %p173, %p174
      %s176 = ssub.s32 %s16, %s23
      %p177 = scmp.eq.s32.totalorder %s176, 0
      %s179 = sadd.s32 %s178, 1
      %s180 = scalar_select %p177, %s178, %s179
      %p183 = pneg %p177
      %p184 = scmp.eq.s32.totalorder %s16, 1
      %p185 = por %p183, %p184
      %p186 = scmp.ne.s32.totalorder %s178, %s181
      %p187 = scmp.eq.s32.totalorder %s16, 0
      %p188 = por %p186, %p187
      %p189 = scmp.ne.s32.totalorder %s178, %s181
      %p190 = scmp.eq.s32.totalorder %s21, 1
      %p191 = por %p189, %p190
      %p192 = scmp.ne.s32.totalorder %s181, %s182
      %p193 = scmp.eq.s32.totalorder %s21, 0
      %p194 = por %p192, %p193
      %p195 = scmp.ne.s32.totalorder %s181, %s182
      %p196 = scmp.eq.s32.totalorder %s22, 1
      %p197 = por %p195, %p196
      %p199 = scmp.ne.s32.totalorder %s182, %s198
      %p200 = scmp.eq.s32.totalorder %s22, 0
      %p201 = por %p199, %p200
      %p202 = scmp.le.s32.totalorder 1, %s16
      %p203 = scmp.lt.s32.totalorder %s16, 3
      %p204 = pnand %p202, %p203
      %p205 = pneg %p204
      // Predicated region
      $region9: #{net_forward.3} parent=5 // pred_check
        _
      $region10: #{net_forward.3} parent=5 // pred_check_branch
        %207 = sbr.rel (%p204) target = $region12
      $region11: #{net_forward.3} parent=5 // pred_region
        %s208 = ssub.s32 %s16, 1
        // Predicated region
        $region13: #{net_forward.3} parent=11 // pred_check
          %p209 = pneg %p63
        $region14: #{net_forward.3} parent=11 // pred_check_branch
          %211 = sbr.rel (%p209) target = $region16
        $region15: #{net_forward.3} parent=11 // pred_region
          _
        $region16: #{net_forward.3} parent=11 // pred_fallthru
          _
        // Predicated region
        $region17: #{net_forward.3} parent=11 // pred_check
          %p212 = pneg %p84
        $region18: #{net_forward.3} parent=11 // pred_check_branch
          %214 = sbr.rel (%p212) target = $region20
        $region19: #{net_forward.3} parent=11 // pred_region
          _
        $region20: #{net_forward.3} parent=11 // pred_fallthru
          _
        // Predicated region
        $region21: #{net_forward.3} parent=11 // pred_check
          %p215 = pneg %p105
        $region22: #{net_forward.3} parent=11 // pred_check_branch
          %217 = sbr.rel (%p215) target = $region24
        $region23: #{net_forward.3} parent=11 // pred_region
          _
        $region24: #{net_forward.3} parent=11 // pred_fallthru
          _
        // Predicated region
        $region25: #{net_forward.3} parent=11 // pred_check
          %p218 = pneg %p126
        $region26: #{net_forward.3} parent=11 // pred_check_branch
          %220 = sbr.rel (%p218) target = $region28
        $region27: #{net_forward.3} parent=11 // pred_region
          _
        $region28: #{net_forward.3} parent=11 // pred_fallthru
          _
        // Predicated region
        $region29: #{net_forward.3} parent=11 // pred_check
          %p221 = pneg %p147
        $region30: #{net_forward.3} parent=11 // pred_check_branch
          %223 = sbr.rel (%p221) target = $region32
        $region31: #{net_forward.3} parent=11 // pred_region
          _
        $region32: #{net_forward.3} parent=11 // pred_fallthru
          _
        // Predicated region
        $region33: #{net_forward.3} parent=11 // pred_check
          %p224 = pneg %p168
        $region34: #{net_forward.3} parent=11 // pred_check_branch
          %226 = sbr.rel (%p224) target = $region36
        $region35: #{net_forward.3} parent=11 // pred_region
          _
        $region36: #{net_forward.3} parent=11 // pred_fallthru
          _
      $region12: #{net_forward.3} parent=5 // pred_fallthru
        _
      %p227 = scmp.lt.s32.totalorder %s16, 2
      // Predicated region
      $region37: #{net_forward.3} parent=5 // pred_check
        %p228 = pneg %p227
      $region38: #{net_forward.3} parent=5 // pred_check_branch
        %230 = sbr.rel (%p228) target = $region40
      $region39: #{net_forward.3} parent=5 // pred_region
        // Predicated region
        $region41: #{net_forward.3} parent=39 // pred_check
          %p231 = pneg %p36
        $region42: #{net_forward.3} parent=39 // pred_check_branch
          %233 = sbr.rel (%p231) target = $region44
        $region43: #{net_forward.3} parent=39 // pred_region
          %p234 = scmp.lt.s32.totalorder %s16, 1
          %s235 = scalar_select %p234, %s16, 1
          %s236 = smul.addr %s235, 128
          %s237 = smul.addr %s236, 4
          %s238 = scalar_lea.vmem %s0, %s237
        $region44: #{net_forward.3} parent=39 // pred_fallthru
          _
      $region40: #{net_forward.3} parent=5 // pred_fallthru
        _
      %p239 = scmp.le.s32.totalorder 1, %s16
      %p240 = scmp.lt.s32.totalorder %s16, 3
      %p241 = pnand %p239, %p240
      %p242 = pneg %p241
      // Predicated region
      $region45: #{net_forward.3} parent=5 // pred_check
        _
      $region46: #{net_forward.3} parent=5 // pred_check_branch
        %244 = sbr.rel (%p241) target = $region48
      $region47: #{net_forward.3} parent=5 // pred_region
        %s245 = ssub.s32 %s16, 1
        %p246 = scmp.lt.s32.totalorder %s21, 1
        %s247 = scalar_select %p246, %s21, 1
        %s248 = smul.addr %s247, 128
        %s249 = smul.addr %s248, 4
        %s250 = scalar_lea.vmem %s0, %s249
        %p251 = pneg %p42
        %p252 = pneg %p39
        %p253 = pneg %p63
        %p254 = pneg %p60
        %p255 = pneg %p84
        %p256 = pneg %p81
        %p257 = pneg %p105
        %p258 = pneg %p102
        %p259 = pneg %p126
        %p260 = pneg %p123
        %p261 = pneg %p147
        %p262 = pneg %p144
        %p263 = pneg %p168
        %p264 = pneg %p165
        %p265 = pneg %p194
        %p266 = pneg %p191
        %s267 = sand.u32 %s181, 1
        %s268 = scalar_lea.sflag [#allocation3], %s267
        %s269 = sand.u32 %s181, 1
        %s270 = scalar_lea.vmem [#allocation2], %s269
        %p271 = scmp.lt.s32.totalorder %s21, 1
        %s272 = scalar_select %p271, %s21, 1
        %s273 = smul.addr %s272, 128
        %s274 = smul.addr %s273, 4
        %s275 = scalar_lea.vmem %s0, %s274
        %v277 = vld [vmem:[%s1] sm:$0xff]
        %v278 = vld [vmem:[%s1 + $0x8] sm:$0xff]
        %v279 = vld [vmem:[%s1 + $0x10] sm:$0x33]
        %v280 = vld [vmem:[%s275] sm:$0xf]
        %v281 = vld [vmem:[%s275 + $0x4] sm:$0xf]
        %v282 = vld [vmem:[%s275 + $0x8] sm:$0xf]
        %v283 = vld [vmem:[%s275 + $0xc] sm:$0xf]
        %v284 = vld [vmem:[%s275 + $0x10] sm:$0xf]
        %v285 = vld [vmem:[%s275 + $0x14] sm:$0xf]
        %v286 = vld [vmem:[%s275 + $0x18] sm:$0xf]
        %v287 = vld [vmem:[%s275 + $0x1c] sm:$0xf]
        %v288 = vld [vmem:[%s275 + $0x20] sm:$0xf]
        %v289 = vld [vmem:[%s275 + $0x24] sm:$0xf]
        %v290 = vld [vmem:[%s275 + $0x28] sm:$0xf]
        %v291 = vld [vmem:[%s275 + $0x2c] sm:$0xf]
        %v292 = vld [vmem:[%s275 + $0x30] sm:$0xf]
        %v293 = vld [vmem:[%s275 + $0x34] sm:$0xf]
        %v294 = vld [vmem:[%s275 + $0x38] sm:$0xf]
        %v295 = vld [vmem:[%s275 + $0x3c] sm:$0xf]
        %v296 = vld [vmem:[%s275 + $0x40] sm:$0xf]
        %v297 = vld [vmem:[%s275 + $0x44] sm:$0xf]
        %v298 = vld [vmem:[%s275 + $0x48] sm:$0xf]
        %v299 = vld [vmem:[%s275 + $0x4c] sm:$0xf]
        %v300 = vld [vmem:[%s275 + $0x50] sm:$0xf]
        %v301 = vld [vmem:[%s275 + $0x54] sm:$0xf]
        %v302 = vld [vmem:[%s275 + $0x58] sm:$0xf]
        %v303 = vld [vmem:[%s275 + $0x5c] sm:$0xf]
        %v304 = vld [vmem:[%s275 + $0x60] sm:$0xf]
        %v305 = vld [vmem:[%s275 + $0x64] sm:$0xf]
        %v306 = vld [vmem:[%s275 + $0x68] sm:$0xf]
        %v307 = vld [vmem:[%s275 + $0x6c] sm:$0xf]
        %v308 = vld [vmem:[%s275 + $0x70] sm:$0xf]
        %v309 = vld [vmem:[%s275 + $0x74] sm:$0xf]
        %v310 = vld [vmem:[%s275 + $0x78] sm:$0xf]
        %v311 = vld [vmem:[%s275 + $0x7c] sm:$0x1]
        %v315 = vunpack.c.l.b16 %v277
        %v316 = vunpack.c.h.b16 %v277
        %v317 = vunpack.c.l.b16 %v278
        %v318 = vunpack.c.h.b16 %v278
        %v319 = vunpack.c.l.b16 %v279
        %v320 = vunpack.c.h.b16 %v279
        %v321 = vpack.c.b16 %v317, %v315
        %v322 = vpack.c.b16 %v318, %v316
        %v323 = vpack.c.b16 %v319, %v319
        %v324 = vpack.c.b16 %v320, %v320
        %v359 = vunpack.c.l.b16 %v280
        %v360 = vunpack.c.l.b16 %v281
        %v361 = vunpack.c.l.b16 %v282
        %v362 = vunpack.c.l.b16 %v283
        %v363 = vunpack.c.l.b16 %v284
        %v364 = vunpack.c.l.b16 %v285
        %v365 = vunpack.c.l.b16 %v286
        %v366 = vunpack.c.l.b16 %v287
        %v367 = vunpack.c.l.b16 %v288
        %v368 = vunpack.c.l.b16 %v289
        %v369 = vunpack.c.l.b16 %v290
        %v370 = vunpack.c.l.b16 %v291
        %v371 = vunpack.c.l.b16 %v292
        %v372 = vunpack.c.l.b16 %v293
        %v373 = vunpack.c.l.b16 %v294
        %v374 = vunpack.c.l.b16 %v295
        %v375 = vunpack.c.l.b16 %v296
        %v376 = vunpack.c.l.b16 %v297
        %v377 = vunpack.c.l.b16 %v298
        %v378 = vunpack.c.l.b16 %v299
        %v379 = vunpack.c.l.b16 %v300
        %v380 = vunpack.c.l.b16 %v301
        %v381 = vunpack.c.l.b16 %v302
        %v382 = vunpack.c.l.b16 %v303
        %v383 = vunpack.c.l.b16 %v304
        %v384 = vunpack.c.l.b16 %v305
        %v385 = vunpack.c.l.b16 %v306
        %v386 = vunpack.c.l.b16 %v307
        %v387 = vunpack.c.l.b16 %v308
        %v388 = vunpack.c.l.b16 %v309
        %v389 = vunpack.c.l.b16 %v310
        %v390 = vunpack.c.l.b16 %v311
        %v391 = vpack.c.b16 %v360, %v359
        %v392 = vpack.c.b16 %v362, %v361
        %v393 = vpack.c.b16 %v364, %v363
        %v394 = vpack.c.b16 %v366, %v365
        %v395 = vpack.c.b16 %v368, %v367
        %v396 = vpack.c.b16 %v370, %v369
        %v397 = vpack.c.b16 %v372, %v371
        %v398 = vpack.c.b16 %v374, %v373
        %v399 = vpack.c.b16 %v376, %v375
        %v400 = vpack.c.b16 %v378, %v377
        %v401 = vpack.c.b16 %v380, %v379
        %v402 = vpack.c.b16 %v382, %v381
        %v403 = vpack.c.b16 %v384, %v383
        %v404 = vpack.c.b16 %v386, %v385
        %v405 = vpack.c.b16 %v388, %v387
        %v406 = vpack.c.b16 %v390, %v389
        %vm422 = vcmask 998400
        %v424 = vsel %vm422, %v322, 0
        %v427 = vsel %vm422, %v324, 0
        %vm429 = vcmask 1044480
        %v431 = vsel %vm429, %v406, 0
        %433 = vmatpush.bf16.msra.mxu0 %v398
        %434 = vmatpush.bf16.msra.mxu0 %v397
        %435 = vmatpush.bf16.msra.mxu0 %v396
        %436 = vmatpush.bf16.msra.mxu0 %v395
        %437 = vmatpush.bf16.msra.mxu0 %v394
        %438 = vmatpush.bf16.msra.mxu0 %v393
        %439 = vmatpush.bf16.msra.mxu0 %v392
        %440 = vmatpush.bf16.msra.mxu0 %v391
        %441 = vmatmul.bf16.gmra.mxu0 %v321
        %v442 = vpop.f32.mrf.mxu0
        %v443 = vadd.f32 0.0, %v442
        %v444 = vpop.f32.mrf.mxu0
        %v445 = vadd.f32 0.0, %v444
        %446 = vmatmul.bf16.gmra.mxu0 %v323
        %v447 = vpop.f32.mrf.mxu0
        %v448 = vadd.f32 0.0, %v447
        %v449 = vpop.f32.mrf.mxu0
        %450 = vdwg.mxu0
        %451 = vmatpush.bf16.msra.mxu0 %v431
        %452 = vmatpush.bf16.msra.mxu0 %v405
        %453 = vmatpush.bf16.msra.mxu0 %v404
        %454 = vmatpush.bf16.msra.mxu0 %v403
        %455 = vmatpush.bf16.msra.mxu0 %v402
        %456 = vmatpush.bf16.msra.mxu0 %v401
        %457 = vmatpush.bf16.msra.mxu0 %v400
        %458 = vmatpush.bf16.msra.mxu0 %v399
        %459 = vmatmul.bf16.gmra.mxu0 %v424
        %v460 = vpop.f32.mrf.mxu0
        %v461 = vadd.f32 %v443, %v460
        %v462 = vpop.f32.mrf.mxu0
        %v463 = vadd.f32 %v445, %v462
        %464 = vmatmul.bf16.gmra.mxu0 %v427
        %v465 = vpop.f32.mrf.mxu0
        %v466 = vadd.f32 %v448, %v465
        %v467 = vpop.f32.mrf.mxu0
        %468 = vdwg.mxu0
        %s469 = scalar_lea.vmem %s275, 128
        %v470 = vld [vmem:[%s469] sm:$0xf]
        %v471 = vld [vmem:[%s469 + $0x4] sm:$0xf]
        %v472 = vld [vmem:[%s469 + $0x8] sm:$0xf]
        %v473 = vld [vmem:[%s469 + $0xc] sm:$0xf]
        %v474 = vld [vmem:[%s469 + $0x10] sm:$0xf]
        %v475 = vld [vmem:[%s469 + $0x14] sm:$0xf]
        %v476 = vld [vmem:[%s469 + $0x18] sm:$0xf]
        %v477 = vld [vmem:[%s469 + $0x1c] sm:$0xf]
        %v478 = vld [vmem:[%s469 + $0x20] sm:$0xf]
        %v479 = vld [vmem:[%s469 + $0x24] sm:$0xf]
        %v480 = vld [vmem:[%s469 + $0x28] sm:$0xf]
        %v481 = vld [vmem:[%s469 + $0x2c] sm:$0xf]
        %v482 = vld [vmem:[%s469 + $0x30] sm:$0xf]
        %v483 = vld [vmem:[%s469 + $0x34] sm:$0xf]
        %v484 = vld [vmem:[%s469 + $0x38] sm:$0xf]
        %v485 = vld [vmem:[%s469 + $0x3c] sm:$0xf]
        %v486 = vld [vmem:[%s469 + $0x40] sm:$0xf]
        %v487 = vld [vmem:[%s469 + $0x44] sm:$0xf]
        %v488 = vld [vmem:[%s469 + $0x48] sm:$0xf]
        %v489 = vld [vmem:[%s469 + $0x4c] sm:$0xf]
        %v490 = vld [vmem:[%s469 + $0x50] sm:$0xf]
        %v491 = vld [vmem:[%s469 + $0x54] sm:$0xf]
        %v492 = vld [vmem:[%s469 + $0x58] sm:$0xf]
        %v493 = vld [vmem:[%s469 + $0x5c] sm:$0xf]
        %v494 = vld [vmem:[%s469 + $0x60] sm:$0xf]
        %v495 = vld [vmem:[%s469 + $0x64] sm:$0xf]
        %v496 = vld [vmem:[%s469 + $0x68] sm:$0xf]
        %v497 = vld [vmem:[%s469 + $0x6c] sm:$0xf]
        %v498 = vld [vmem:[%s469 + $0x70] sm:$0xf]
        %v499 = vld [vmem:[%s469 + $0x74] sm:$0xf]
        %v500 = vld [vmem:[%s469 + $0x78] sm:$0xf]
        %v501 = vld [vmem:[%s469 + $0x7c] sm:$0x1]
        %v534 = vunpack.c.l.b16 %v470
        %v535 = vunpack.c.l.b16 %v471
        %v536 = vunpack.c.l.b16 %v472
        %v537 = vunpack.c.l.b16 %v473
        %v538 = vunpack.c.l.b16 %v474
        %v539 = vunpack.c.l.b16 %v475
        %v540 = vunpack.c.l.b16 %v476
        %v541 = vunpack.c.l.b16 %v477
        %v542 = vunpack.c.l.b16 %v478
        %v543 = vunpack.c.l.b16 %v479
        %v544 = vunpack.c.l.b16 %v480
        %v545 = vunpack.c.l.b16 %v481
        %v546 = vunpack.c.l.b16 %v482
        %v547 = vunpack.c.l.b16 %v483
        %v548 = vunpack.c.l.b16 %v484
        %v549 = vunpack.c.l.b16 %v485
        %v550 = vunpack.c.l.b16 %v486
        %v551 = vunpack.c.l.b16 %v487
        %v552 = vunpack.c.l.b16 %v488
        %v553 = vunpack.c.l.b16 %v489
        %v554 = vunpack.c.l.b16 %v490
        %v555 = vunpack.c.l.b16 %v491
        %v556 = vunpack.c.l.b16 %v492
        %v557 = vunpack.c.l.b16 %v493
        %v558 = vunpack.c.l.b16 %v494
        %v559 = vunpack.c.l.b16 %v495
        %v560 = vunpack.c.l.b16 %v496
        %v561 = vunpack.c.l.b16 %v497
        %v562 = vunpack.c.l.b16 %v498
        %v563 = vunpack.c.l.b16 %v499
        %v564 = vunpack.c.l.b16 %v500
        %v565 = vunpack.c.l.b16 %v501
        %v566 = vpack.c.b16 %v535, %v534
        %v567 = vpack.c.b16 %v537, %v536
        %v568 = vpack.c.b16 %v539, %v538
        %v569 = vpack.c.b16 %v541, %v540
        %v570 = vpack.c.b16 %v543, %v542
        %v571 = vpack.c.b16 %v545, %v544
        %v572 = vpack.c.b16 %v547, %v546
        %v573 = vpack.c.b16 %v549, %v548
        %v574 = vpack.c.b16 %v551, %v550
        %v575 = vpack.c.b16 %v553, %v552
        %v576 = vpack.c.b16 %v555, %v554
        %v577 = vpack.c.b16 %v557, %v556
        %v578 = vpack.c.b16 %v559, %v558
        %v579 = vpack.c.b16 %v561, %v560
        %v580 = vpack.c.b16 %v563, %v562
        %v581 = vpack.c.b16 %v565, %v564
        %v598 = vsel %vm429, %v581, 0
        %600 = vmatpush.bf16.msra.mxu0 %v573
        %601 = vmatpush.bf16.msra.mxu0 %v572
        %602 = vmatpush.bf16.msra.mxu0 %v571
        %603 = vmatpush.bf16.msra.mxu0 %v570
        %604 = vmatpush.bf16.msra.mxu0 %v569
        %605 = vmatpush.bf16.msra.mxu0 %v568
        %606 = vmatpush.bf16.msra.mxu0 %v567
        %607 = vmatpush.bf16.msra.mxu0 %v566
        %608 = vmatmul.bf16.gmra.mxu0 %v321
        %v609 = vpop.f32.mrf.mxu0
        %v610 = vadd.f32 0.0, %v609
        %v611 = vpop.f32.mrf.mxu0
        %v612 = vadd.f32 0.0, %v611
        %613 = vmatmul.bf16.gmra.mxu0 %v323
        %v614 = vpop.f32.mrf.mxu0
        %v615 = vadd.f32 0.0, %v614
        %v616 = vpop.f32.mrf.mxu0
        %617 = vdwg.mxu0
        %618 = vmatpush.bf16.msra.mxu0 %v598
        %619 = vmatpush.bf16.msra.mxu0 %v580
        %620 = vmatpush.bf16.msra.mxu0 %v579
        %621 = vmatpush.bf16.msra.mxu0 %v578
        %622 = vmatpush.bf16.msra.mxu0 %v577
        %623 = vmatpush.bf16.msra.mxu0 %v576
        %624 = vmatpush.bf16.msra.mxu0 %v575
        %625 = vmatpush.bf16.msra.mxu0 %v574
        %626 = vmatmul.bf16.gmra.mxu0 %v424
        %v627 = vpop.f32.mrf.mxu0
        %v628 = vadd.f32 %v610, %v627
        %v629 = vpop.f32.mrf.mxu0
        %v630 = vadd.f32 %v612, %v629
        %631 = vmatmul.bf16.gmra.mxu0 %v427
        %v632 = vpop.f32.mrf.mxu0
        %v633 = vadd.f32 %v615, %v632
        %v634 = vpop.f32.mrf.mxu0
        %635 = vdwg.mxu0
        %v636 = vmax.f32 %v461, %v628
        %v637 = vmax.f32 %v463, %v630
        %v638 = vmax.f32 %v466, %v633
        %s639 = scalar_lea.vmem %s275, 256
        %v640 = vld [vmem:[%s639] sm:$0xf]
        %v641 = vld [vmem:[%s639 + $0x4] sm:$0xf]
        %v642 = vld [vmem:[%s639 + $0x8] sm:$0xf]
        %v643 = vld [vmem:[%s639 + $0xc] sm:$0xf]
        %v644 = vld [vmem:[%s639 + $0x10] sm:$0xf]
        %v645 = vld [vmem:[%s639 + $0x14] sm:$0xf]
        %v646 = vld [vmem:[%s639 + $0x18] sm:$0xf]
        %v647 = vld [vmem:[%s639 + $0x1c] sm:$0xf]
        %v648 = vld [vmem:[%s639 + $0x20] sm:$0xf]
        %v649 = vld [vmem:[%s639 + $0x24] sm:$0xf]
        %v650 = vld [vmem:[%s639 + $0x28] sm:$0xf]
        %v651 = vld [vmem:[%s639 + $0x2c] sm:$0xf]
        %v652 = vld [vmem:[%s639 + $0x30] sm:$0xf]
        %v653 = vld [vmem:[%s639 + $0x34] sm:$0xf]
        %v654 = vld [vmem:[%s639 + $0x38] sm:$0xf]
        %v655 = vld [vmem:[%s639 + $0x3c] sm:$0xf]
        %v656 = vld [vmem:[%s639 + $0x40] sm:$0xf]
        %v657 = vld [vmem:[%s639 + $0x44] sm:$0xf]
        %v658 = vld [vmem:[%s639 + $0x48] sm:$0xf]
        %v659 = vld [vmem:[%s639 + $0x4c] sm:$0xf]
        %v660 = vld [vmem:[%s639 + $0x50] sm:$0xf]
        %v661 = vld [vmem:[%s639 + $0x54] sm:$0xf]
        %v662 = vld [vmem:[%s639 + $0x58] sm:$0xf]
        %v663 = vld [vmem:[%s639 + $0x5c] sm:$0xf]
        %v664 = vld [vmem:[%s639 + $0x60] sm:$0xf]
        %v665 = vld [vmem:[%s639 + $0x64] sm:$0xf]
        %v666 = vld [vmem:[%s639 + $0x68] sm:$0xf]
        %v667 = vld [vmem:[%s639 + $0x6c] sm:$0xf]
        %v668 = vld [vmem:[%s639 + $0x70] sm:$0xf]
        %v669 = vld [vmem:[%s639 + $0x74] sm:$0xf]
        %v670 = vld [vmem:[%s639 + $0x78] sm:$0xf]
        %v671 = vld [vmem:[%s639 + $0x7c] sm:$0x1]
        %v704 = vunpack.c.l.b16 %v640
        %v705 = vunpack.c.l.b16 %v641
        %v706 = vunpack.c.l.b16 %v642
        %v707 = vunpack.c.l.b16 %v643
        %v708 = vunpack.c.l.b16 %v644
        %v709 = vunpack.c.l.b16 %v645
        %v710 = vunpack.c.l.b16 %v646
        %v711 = vunpack.c.l.b16 %v647
        %v712 = vunpack.c.l.b16 %v648
        %v713 = vunpack.c.l.b16 %v649
        %v714 = vunpack.c.l.b16 %v650
        %v715 = vunpack.c.l.b16 %v651
        %v716 = vunpack.c.l.b16 %v652
        %v717 = vunpack.c.l.b16 %v653
        %v718 = vunpack.c.l.b16 %v654
        %v719 = vunpack.c.l.b16 %v655
        %v720 = vunpack.c.l.b16 %v656
        %v721 = vunpack.c.l.b16 %v657
        %v722 = vunpack.c.l.b16 %v658
        %v723 = vunpack.c.l.b16 %v659
        %v724 = vunpack.c.l.b16 %v660
        %v725 = vunpack.c.l.b16 %v661
        %v726 = vunpack.c.l.b16 %v662
        %v727 = vunpack.c.l.b16 %v663
        %v728 = vunpack.c.l.b16 %v664
        %v729 = vunpack.c.l.b16 %v665
        %v730 = vunpack.c.l.b16 %v666
        %v731 = vunpack.c.l.b16 %v667
        %v732 = vunpack.c.l.b16 %v668
        %v733 = vunpack.c.l.b16 %v669
        %v734 = vunpack.c.l.b16 %v670
        %v735 = vunpack.c.l.b16 %v671
        %v736 = vpack.c.b16 %v705, %v704
        %v737 = vpack.c.b16 %v707, %v706
        %v738 = vpack.c.b16 %v709, %v708
        %v739 = vpack.c.b16 %v711, %v710
        %v740 = vpack.c.b16 %v713, %v712
        %v741 = vpack.c.b16 %v715, %v714
        %v742 = vpack.c.b16 %v717, %v716
        %v743 = vpack.c.b16 %v719, %v718
        %v744 = vpack.c.b16 %v721, %v720
        %v745 = vpack.c.b16 %v723, %v722
        %v746 = vpack.c.b16 %v725, %v724
        %v747 = vpack.c.b16 %v727, %v726
        %v748 = vpack.c.b16 %v729, %v728
        %v749 = vpack.c.b16 %v731, %v730
        %v750 = vpack.c.b16 %v733, %v732
        %v751 = vpack.c.b16 %v735, %v734
        %v768 = vsel %vm429, %v751, 0
        %770 = vmatpush.bf16.msra.mxu0 %v743
        %771 = vmatpush.bf16.msra.mxu0 %v742
        %772 = vmatpush.bf16.msra.mxu0 %v741
        %773 = vmatpush.bf16.msra.mxu0 %v740
        %774 = vmatpush.bf16.msra.mxu0 %v739
        %775 = vmatpush.bf16.msra.mxu0 %v738
        %776 = vmatpush.bf16.msra.mxu0 %v737
        %777 = vmatpush.bf16.msra.mxu0 %v736
        %778 = vmatmul.bf16.gmra.mxu0 %v321
        %v779 = vpop.f32.mrf.mxu0
        %v780 = vadd.f32 0.0, %v779
        %v781 = vpop.f32.mrf.mxu0
        %v782 = vadd.f32 0.0, %v781
        %783 = vmatmul.bf16.gmra.mxu0 %v323
        %v784 = vpop.f32.mrf.mxu0
        %v785 = vadd.f32 0.0, %v784
        %v786 = vpop.f32.mrf.mxu0
        %787 = vdwg.mxu0
        %788 = vmatpush.bf16.msra.mxu0 %v768
        %789 = vmatpush.bf16.msra.mxu0 %v750
        %790 = vmatpush.bf16.msra.mxu0 %v749
        %791 = vmatpush.bf16.msra.mxu0 %v748
        %792 = vmatpush.bf16.msra.mxu0 %v747
        %793 = vmatpush.bf16.msra.mxu0 %v746
        %794 = vmatpush.bf16.msra.mxu0 %v745
        %795 = vmatpush.bf16.msra.mxu0 %v744
        %796 = vmatmul.bf16.gmra.mxu0 %v424
        %v797 = vpop.f32.mrf.mxu0
        %v798 = vadd.f32 %v780, %v797
        %v799 = vpop.f32.mrf.mxu0
        %v800 = vadd.f32 %v782, %v799
        %801 = vmatmul.bf16.gmra.mxu0 %v427
        %v802 = vpop.f32.mrf.mxu0
        %v803 = vadd.f32 %v785, %v802
        %v804 = vpop.f32.mrf.mxu0
        %805 = vdwg.mxu0
        %v806 = vmax.f32 %v636, %v798
        %v807 = vmax.f32 %v637, %v800
        %v808 = vmax.f32 %v638, %v803
        %s809 = scalar_lea.vmem %s275, 384
        %v810 = vld [vmem:[%s809] sm:$0xf]
        %v811 = vld [vmem:[%s809 + $0x4] sm:$0xf]
        %v812 = vld [vmem:[%s809 + $0x8] sm:$0xf]
        %v813 = vld [vmem:[%s809 + $0xc] sm:$0xf]
        %v814 = vld [vmem:[%s809 + $0x10] sm:$0xf]
        %v815 = vld [vmem:[%s809 + $0x14] sm:$0xf]
        %v816 = vld [vmem:[%s809 + $0x18] sm:$0xf]
        %v817 = vld [vmem:[%s809 + $0x1c] sm:$0xf]
        %v818 = vld [vmem:[%s809 + $0x20] sm:$0xf]
        %v819 = vld [vmem:[%s809 + $0x24] sm:$0xf]
        %v820 = vld [vmem:[%s809 + $0x28] sm:$0xf]
        %v821 = vld [vmem:[%s809 + $0x2c] sm:$0xf]
        %v822 = vld [vmem:[%s809 + $0x30] sm:$0xf]
        %v823 = vld [vmem:[%s809 + $0x34] sm:$0xf]
        %v824 = vld [vmem:[%s809 + $0x38] sm:$0xf]
        %v825 = vld [vmem:[%s809 + $0x3c] sm:$0xf]
        %v826 = vld [vmem:[%s809 + $0x40] sm:$0xf]
        %v827 = vld [vmem:[%s809 + $0x44] sm:$0xf]
        %v828 = vld [vmem:[%s809 + $0x48] sm:$0xf]
        %v829 = vld [vmem:[%s809 + $0x4c] sm:$0xf]
        %v830 = vld [vmem:[%s809 + $0x50] sm:$0xf]
        %v831 = vld [vmem:[%s809 + $0x54] sm:$0xf]
        %v832 = vld [vmem:[%s809 + $0x58] sm:$0xf]
        %v833 = vld [vmem:[%s809 + $0x5c] sm:$0xf]
        %v834 = vld [vmem:[%s809 + $0x60] sm:$0xf]
        %v835 = vld [vmem:[%s809 + $0x64] sm:$0xf]
        %v836 = vld [vmem:[%s809 + $0x68] sm:$0xf]
        %v837 = vld [vmem:[%s809 + $0x6c] sm:$0xf]
        %v838 = vld [vmem:[%s809 + $0x70] sm:$0xf]
        %v839 = vld [vmem:[%s809 + $0x74] sm:$0xf]
        %v840 = vld [vmem:[%s809 + $0x78] sm:$0xf]
        %v841 = vld [vmem:[%s809 + $0x7c] sm:$0x1]
        %v874 = vunpack.c.l.b16 %v810
        %v875 = vunpack.c.l.b16 %v811
        %v876 = vunpack.c.l.b16 %v812
        %v877 = vunpack.c.l.b16 %v813
        %v878 = vunpack.c.l.b16 %v814
        %v879 = vunpack.c.l.b16 %v815
        %v880 = vunpack.c.l.b16 %v816
        %v881 = vunpack.c.l.b16 %v817
        %v882 = vunpack.c.l.b16 %v818
        %v883 = vunpack.c.l.b16 %v819
        %v884 = vunpack.c.l.b16 %v820
        %v885 = vunpack.c.l.b16 %v821
        %v886 = vunpack.c.l.b16 %v822
        %v887 = vunpack.c.l.b16 %v823
        %v888 = vunpack.c.l.b16 %v824
        %v889 = vunpack.c.l.b16 %v825
        %v890 = vunpack.c.l.b16 %v826
        %v891 = vunpack.c.l.b16 %v827
        %v892 = vunpack.c.l.b16 %v828
        %v893 = vunpack.c.l.b16 %v829
        %v894 = vunpack.c.l.b16 %v830
        %v895 = vunpack.c.l.b16 %v831
        %v896 = vunpack.c.l.b16 %v832
        %v897 = vunpack.c.l.b16 %v833
        %v898 = vunpack.c.l.b16 %v834
        %v899 = vunpack.c.l.b16 %v835
        %v900 = vunpack.c.l.b16 %v836
        %v901 = vunpack.c.l.b16 %v837
        %v902 = vunpack.c.l.b16 %v838
        %v903 = vunpack.c.l.b16 %v839
        %v904 = vunpack.c.l.b16 %v840
        %v905 = vunpack.c.l.b16 %v841
        %v906 = vpack.c.b16 %v875, %v874
        %v907 = vpack.c.b16 %v877, %v876
        %v908 = vpack.c.b16 %v879, %v878
        %v909 = vpack.c.b16 %v881, %v880
        %v910 = vpack.c.b16 %v883, %v882
        %v911 = vpack.c.b16 %v885, %v884
        %v912 = vpack.c.b16 %v887, %v886
        %v913 = vpack.c.b16 %v889, %v888
        %v914 = vpack.c.b16 %v891, %v890
        %v915 = vpack.c.b16 %v893, %v892
        %v916 = vpack.c.b16 %v895, %v894
        %v917 = vpack.c.b16 %v897, %v896
        %v918 = vpack.c.b16 %v899, %v898
        %v919 = vpack.c.b16 %v901, %v900
        %v920 = vpack.c.b16 %v903, %v902
        %v921 = vpack.c.b16 %v905, %v904
        %v938 = vsel %vm429, %v921, 0
        %940 = vmatpush.bf16.msra.mxu0 %v913
        %941 = vmatpush.bf16.msra.mxu0 %v912
        %942 = vmatpush.bf16.msra.mxu0 %v911
        %943 = vmatpush.bf16.msra.mxu0 %v910
        %944 = vmatpush.bf16.msra.mxu0 %v909
        %945 = vmatpush.bf16.msra.mxu0 %v908
        %946 = vmatpush.bf16.msra.mxu0 %v907
        %947 = vmatpush.bf16.msra.mxu0 %v906
        %948 = vmatmul.bf16.gmra.mxu0 %v321
        %v949 = vpop.f32.mrf.mxu0
        %v950 = vadd.f32 0.0, %v949
        %v951 = vpop.f32.mrf.mxu0
        %v952 = vadd.f32 0.0, %v951
        %953 = vmatmul.bf16.gmra.mxu0 %v323
        %v954 = vpop.f32.mrf.mxu0
        %v955 = vadd.f32 0.0, %v954
        %v956 = vpop.f32.mrf.mxu0
        %957 = vdwg.mxu0
        %958 = vmatpush.bf16.msra.mxu0 %v938
        %959 = vmatpush.bf16.msra.mxu0 %v920
        %960 = vmatpush.bf16.msra.mxu0 %v919
        %961 = vmatpush.bf16.msra.mxu0 %v918
        %962 = vmatpush.bf16.msra.mxu0 %v917
        %963 = vmatpush.bf16.msra.mxu0 %v916
        %964 = vmatpush.bf16.msra.mxu0 %v915
        %965 = vmatpush.bf16.msra.mxu0 %v914
        %966 = vmatmul.bf16.gmra.mxu0 %v424
        %v967 = vpop.f32.mrf.mxu0
        %v968 = vadd.f32 %v950, %v967
        %v969 = vpop.f32.mrf.mxu0
        %v970 = vadd.f32 %v952, %v969
        %971 = vmatmul.bf16.gmra.mxu0 %v427
        %v972 = vpop.f32.mrf.mxu0
        %v973 = vadd.f32 %v955, %v972
        %v974 = vpop.f32.mrf.mxu0
        %975 = vdwg.mxu0
        %v976 = vmax.f32 %v806, %v968
        %v977 = vmax.f32 %v807, %v970
        %v978 = vmax.f32 %v808, %v973
        %v979 = vld [vmem:[%s2] sm:$0xff]
        %v980 = vld [vmem:[%s2 + $0x8] sm:$0xff]
        %v981 = vld [vmem:[%s2 + $0x10] sm:$0xf]
        %983 = vset.pattern.permute.xlu0 0
        %984 = vperm.xlu0 %983, %v979
        %v985 = vpop.permute.xlu0 %984
        %988 = vset.pattern.permute.xlu0 0
        %989 = vperm.xlu0 %988, %v980
        %v990 = vpop.permute.xlu0 %989
        %993 = vset.pattern.permute.xlu0 0
        %994 = vperm.xlu0 %993, %v981
        %v995 = vpop.permute.xlu0 %994
        %v997 = vadd.f32 %v976, %v985
        %v998 = vadd.f32 %v977, %v990
        %v999 = vadd.f32 %v978, %v995
        %v1000 = vmax.f32 %v997, 0.0
        %v1001 = vmax.f32 %v998, 0.0
        %v1002 = vmax.f32 %v999, 0.0
        %v1003 = vld [vmem:[%s4] sm:$0x1]
        %v1004 = vpack.c.bf16 %v1000, %v1000
        %v1005 = vld [vmem:[%s3] sm:$0xf]
        %v1006 = vld [vmem:[%s3 + $0x4] sm:$0xf]
        %v1007 = vld [vmem:[%s3 + $0x8] sm:$0xf]
        %v1008 = vld [vmem:[%s3 + $0xc] sm:$0xf]
        %v1009 = vld [vmem:[%s3 + $0x10] sm:$0xf]
        %v1010 = vld [vmem:[%s3 + $0x14] sm:$0xf]
        %v1011 = vld [vmem:[%s3 + $0x18] sm:$0xf]
        %v1012 = vld [vmem:[%s3 + $0x1c] sm:$0xf]
        %v1013 = vld [vmem:[%s3 + $0x20] sm:$0xf]
        %v1014 = vld [vmem:[%s3 + $0x24] sm:$0xf]
        %v1015 = vld [vmem:[%s3 + $0x28] sm:$0xf]
        %v1016 = vld [vmem:[%s3 + $0x2c] sm:$0xf]
        %v1017 = vld [vmem:[%s3 + $0x30] sm:$0xf]
        %v1018 = vld [vmem:[%s3 + $0x34] sm:$0x1]
        %v1033 = vunpack.c.l.b16 %v1005
        %v1034 = vunpack.c.l.b16 %v1006
        %v1035 = vunpack.c.l.b16 %v1007
        %v1036 = vunpack.c.l.b16 %v1008
        %v1037 = vunpack.c.l.b16 %v1009
        %v1038 = vunpack.c.l.b16 %v1010
        %v1039 = vunpack.c.l.b16 %v1011
        %v1040 = vunpack.c.l.b16 %v1012
        %v1041 = vunpack.c.l.b16 %v1013
        %v1042 = vunpack.c.l.b16 %v1014
        %v1043 = vunpack.c.l.b16 %v1015
        %v1044 = vunpack.c.l.b16 %v1016
        %v1045 = vunpack.c.l.b16 %v1017
        %v1046 = vunpack.c.l.b16 %v1018
        %v1047 = vpack.c.b16 %v1034, %v1033
        %v1048 = vpack.c.b16 %v1036, %v1035
        %v1049 = vpack.c.b16 %v1038, %v1037
        %v1050 = vpack.c.b16 %v1040, %v1039
        %v1051 = vpack.c.b16 %v1042, %v1041
        %v1052 = vpack.c.b16 %v1044, %v1043
        %v1053 = vpack.c.b16 %v1046, %v1045
        %vm1060 = vcmask 859136
        %v1062 = vsel %vm1060, %v1004, 0
        %vm1064 = vcmask 1043456
        %v1065 = vsel %vm1064, 4294967295, 65535
        %v1066 = vsel %vm429, %v1065, 0
        %v1068 = vand.u32 %v1053, %v1066
        %1070 = vmatpush.bf16.msra.mxu0 0
        %1071 = vmatpush.bf16.msra.mxu0 %v1068
        %1072 = vmatpush.bf16.msra.mxu0 %v1052
        %1073 = vmatpush.bf16.msra.mxu0 %v1051
        %1074 = vmatpush.bf16.msra.mxu0 %v1050
        %1075 = vmatpush.bf16.msra.mxu0 %v1049
        %1076 = vmatpush.bf16.msra.mxu0 %v1048
        %1077 = vmatpush.bf16.msra.mxu0 %v1047
        %1078 = vmatmul.bf16.gmra.mxu0 %v1062
        %v1079 = vpop.f32.mrf.mxu0
        %v1080 = vadd.f32 0.0, %v1079
        %v1081 = vpop.f32.mrf.mxu0
        %1082 = vdwg.mxu0
        %v1083 = vadd.f32 %v1003, %v1080
        %s1084 = scalar_lea.vmem %s3, 56
        %v1085 = vld [vmem:[%s1084] sm:$0xf]
        %v1086 = vld [vmem:[%s1084 + $0x4] sm:$0xf]
        %v1087 = vld [vmem:[%s1084 + $0x8] sm:$0xf]
        %v1088 = vld [vmem:[%s1084 + $0xc] sm:$0xf]
        %v1089 = vld [vmem:[%s1084 + $0x10] sm:$0xf]
        %v1090 = vld [vmem:[%s1084 + $0x14] sm:$0xf]
        %v1091 = vld [vmem:[%s1084 + $0x18] sm:$0xf]
        %v1092 = vld [vmem:[%s1084 + $0x1c] sm:$0xf]
        %v1093 = vld [vmem:[%s1084 + $0x20] sm:$0xf]
        %v1094 = vld [vmem:[%s1084 + $0x24] sm:$0xf]
        %v1095 = vld [vmem:[%s1084 + $0x28] sm:$0xf]
        %v1096 = vld [vmem:[%s1084 + $0x2c] sm:$0xf]
        %v1097 = vld [vmem:[%s1084 + $0x30] sm:$0xf]
        %v1098 = vld [vmem:[%s1084 + $0x34] sm:$0x1]
        %v1099 = vshrl.u32 %v1004, 16
        %v1115 = vunpack.c.l.b16 %v1085
        %v1116 = vunpack.c.l.b16 %v1086
        %v1117 = vunpack.c.l.b16 %v1087
        %v1118 = vunpack.c.l.b16 %v1088
        %v1119 = vunpack.c.l.b16 %v1089
        %v1120 = vunpack.c.l.b16 %v1090
        %v1121 = vunpack.c.l.b16 %v1091
        %v1122 = vunpack.c.l.b16 %v1092
        %v1123 = vunpack.c.l.b16 %v1093
        %v1124 = vunpack.c.l.b16 %v1094
        %v1125 = vunpack.c.l.b16 %v1095
        %v1126 = vunpack.c.l.b16 %v1096
        %v1127 = vunpack.c.l.b16 %v1097
        %v1128 = vunpack.c.l.b16 %v1098
        %v1129 = vpack.c.b16 %v1116, %v1115
        %v1130 = vpack.c.b16 %v1118, %v1117
        %v1131 = vpack.c.b16 %v1120, %v1119
        %v1132 = vpack.c.b16 %v1122, %v1121
        %v1133 = vpack.c.b16 %v1124, %v1123
        %v1134 = vpack.c.b16 %v1126, %v1125
        %v1135 = vpack.c.b16 %v1128, %v1127
        %v1143 = vsel %vm1060, %v1099, 0
        %v1146 = vand.u32 %v1135, %v1066
        %1148 = vmatpush.bf16.msra.mxu0 0
        %1149 = vmatpush.bf16.msra.mxu0 %v1146
        %1150 = vmatpush.bf16.msra.mxu0 %v1134
        %1151 = vmatpush.bf16.msra.mxu0 %v1133
        %1152 = vmatpush.bf16.msra.mxu0 %v1132
        %1153 = vmatpush.bf16.msra.mxu0 %v1131
        %1154 = vmatpush.bf16.msra.mxu0 %v1130
        %1155 = vmatpush.bf16.msra.mxu0 %v1129
        %1156 = vmatmul.bf16.gmra.mxu0 %v1143
        %v1157 = vpop.f32.mrf.mxu0
        %v1158 = vadd.f32 0.0, %v1157
        %v1159 = vpop.f32.mrf.mxu0
        %1160 = vdwg.mxu0
        %v1161 = vadd.f32 %v1083, %v1158
        %s1162 = scalar_lea.vmem %s3, 112
        %v1163 = vld [vmem:[%s1162] sm:$0xf]
        %v1164 = vld [vmem:[%s1162 + $0x4] sm:$0xf]
        %v1165 = vld [vmem:[%s1162 + $0x8] sm:$0xf]
        %v1166 = vld [vmem:[%s1162 + $0xc] sm:$0xf]
        %v1167 = vld [vmem:[%s1162 + $0x10] sm:$0xf]
        %v1168 = vld [vmem:[%s1162 + $0x14] sm:$0xf]
        %v1169 = vld [vmem:[%s1162 + $0x18] sm:$0xf]
        %v1170 = vld [vmem:[%s1162 + $0x1c] sm:$0xf]
        %v1171 = vld [vmem:[%s1162 + $0x20] sm:$0xf]
        %v1172 = vld [vmem:[%s1162 + $0x24] sm:$0xf]
        %v1173 = vld [vmem:[%s1162 + $0x28] sm:$0xf]
        %v1174 = vld [vmem:[%s1162 + $0x2c] sm:$0xf]
        %v1175 = vld [vmem:[%s1162 + $0x30] sm:$0xf]
        %v1176 = vld [vmem:[%s1162 + $0x34] sm:$0x1]
        %v1178 = vrot.slane %v1004, 1
        %v1193 = vunpack.c.l.b16 %v1163
        %v1194 = vunpack.c.l.b16 %v1164
        %v1195 = vunpack.c.l.b16 %v1165
        %v1196 = vunpack.c.l.b16 %v1166
        %v1197 = vunpack.c.l.b16 %v1167
        %v1198 = vunpack.c.l.b16 %v1168
        %v1199 = vunpack.c.l.b16 %v1169
        %v1200 = vunpack.c.l.b16 %v1170
        %v1201 = vunpack.c.l.b16 %v1171
        %v1202 = vunpack.c.l.b16 %v1172
        %v1203 = vunpack.c.l.b16 %v1173
        %v1204 = vunpack.c.l.b16 %v1174
        %v1205 = vunpack.c.l.b16 %v1175
        %v1206 = vunpack.c.l.b16 %v1176
        %v1207 = vpack.c.b16 %v1194, %v1193
        %v1208 = vpack.c.b16 %v1196, %v1195
        %v1209 = vpack.c.b16 %v1198, %v1197
        %v1210 = vpack.c.b16 %v1200, %v1199
        %v1211 = vpack.c.b16 %v1202, %v1201
        %v1212 = vpack.c.b16 %v1204, %v1203
        %v1213 = vpack.c.b16 %v1206, %v1205
        %v1221 = vsel %vm1060, %v1178, 0
        %v1224 = vand.u32 %v1213, %v1066
        %1226 = vmatpush.bf16.msra.mxu0 0
        %1227 = vmatpush.bf16.msra.mxu0 %v1224
        %1228 = vmatpush.bf16.msra.mxu0 %v1212
        %1229 = vmatpush.bf16.msra.mxu0 %v1211
        %1230 = vmatpush.bf16.msra.mxu0 %v1210
        %1231 = vmatpush.bf16.msra.mxu0 %v1209
        %1232 = vmatpush.bf16.msra.mxu0 %v1208
        %1233 = vmatpush.bf16.msra.mxu0 %v1207
        %1234 = vmatmul.bf16.gmra.mxu0 %v1221
        %v1235 = vpop.f32.mrf.mxu0
        %v1236 = vadd.f32 0.0, %v1235
        %v1237 = vpop.f32.mrf.mxu0
        %1238 = vdwg.mxu0
        %v1239 = vadd.f32 %v1161, %v1236
        %s1240 = scalar_lea.vmem %s3, 168
        %v1241 = vld [vmem:[%s1240] sm:$0xf]
        %v1242 = vld [vmem:[%s1240 + $0x4] sm:$0xf]
        %v1243 = vld [vmem:[%s1240 + $0x8] sm:$0xf]
        %v1244 = vld [vmem:[%s1240 + $0xc] sm:$0xf]
        %v1245 = vld [vmem:[%s1240 + $0x10] sm:$0xf]
        %v1246 = vld [vmem:[%s1240 + $0x14] sm:$0xf]
        %v1247 = vld [vmem:[%s1240 + $0x18] sm:$0xf]
        %v1248 = vld [vmem:[%s1240 + $0x1c] sm:$0xf]
        %v1249 = vld [vmem:[%s1240 + $0x20] sm:$0xf]
        %v1250 = vld [vmem:[%s1240 + $0x24] sm:$0xf]
        %v1251 = vld [vmem:[%s1240 + $0x28] sm:$0xf]
        %v1252 = vld [vmem:[%s1240 + $0x2c] sm:$0xf]
        %v1253 = vld [vmem:[%s1240 + $0x30] sm:$0xf]
        %v1254 = vld [vmem:[%s1240 + $0x34] sm:$0x1]
        %v1255 = vrot.slane %v1099, 1
        %v1270 = vunpack.c.l.b16 %v1241
        %v1271 = vunpack.c.l.b16 %v1242
        %v1272 = vunpack.c.l.b16 %v1243
        %v1273 = vunpack.c.l.b16 %v1244
        %v1274 = vunpack.c.l.b16 %v1245
        %v1275 = vunpack.c.l.b16 %v1246
        %v1276 = vunpack.c.l.b16 %v1247
        %v1277 = vunpack.c.l.b16 %v1248
        %v1278 = vunpack.c.l.b16 %v1249
        %v1279 = vunpack.c.l.b16 %v1250
        %v1280 = vunpack.c.l.b16 %v1251
        %v1281 = vunpack.c.l.b16 %v1252
        %v1282 = vunpack.c.l.b16 %v1253
        %v1283 = vunpack.c.l.b16 %v1254
        %v1284 = vpack.c.b16 %v1271, %v1270
        %v1285 = vpack.c.b16 %v1273, %v1272
        %v1286 = vpack.c.b16 %v1275, %v1274
        %v1287 = vpack.c.b16 %v1277, %v1276
        %v1288 = vpack.c.b16 %v1279, %v1278
        %v1289 = vpack.c.b16 %v1281, %v1280
        %v1290 = vpack.c.b16 %v1283, %v1282
        %v1298 = vsel %vm1060, %v1255, 0
        %v1301 = vand.u32 %v1290, %v1066
        %1303 = vmatpush.bf16.msra.mxu0 0
        %1304 = vmatpush.bf16.msra.mxu0 %v1301
        %1305 = vmatpush.bf16.msra.mxu0 %v1289
        %1306 = vmatpush.bf16.msra.mxu0 %v1288
        %1307 = vmatpush.bf16.msra.mxu0 %v1287
        %1308 = vmatpush.bf16.msra.mxu0 %v1286
        %1309 = vmatpush.bf16.msra.mxu0 %v1285
        %1310 = vmatpush.bf16.msra.mxu0 %v1284
        %1311 = vmatmul.bf16.gmra.mxu0 %v1298
        %v1312 = vpop.f32.mrf.mxu0
        %v1313 = vadd.f32 0.0, %v1312
        %v1314 = vpop.f32.mrf.mxu0
        %1315 = vdwg.mxu0
        %v1316 = vadd.f32 %v1239, %v1313
        %s1317 = scalar_lea.vmem %s3, 224
        %v1318 = vld [vmem:[%s1317] sm:$0xf]
        %v1319 = vld [vmem:[%s1317 + $0x4] sm:$0xf]
        %v1320 = vld [vmem:[%s1317 + $0x8] sm:$0xf]
        %v1321 = vld [vmem:[%s1317 + $0xc] sm:$0xf]
        %v1322 = vld [vmem:[%s1317 + $0x10] sm:$0xf]
        %v1323 = vld [vmem:[%s1317 + $0x14] sm:$0xf]
        %v1324 = vld [vmem:[%s1317 + $0x18] sm:$0xf]
        %v1325 = vld [vmem:[%s1317 + $0x1c] sm:$0xf]
        %v1326 = vld [vmem:[%s1317 + $0x20] sm:$0xf]
        %v1327 = vld [vmem:[%s1317 + $0x24] sm:$0xf]
        %v1328 = vld [vmem:[%s1317 + $0x28] sm:$0xf]
        %v1329 = vld [vmem:[%s1317 + $0x2c] sm:$0xf]
        %v1330 = vld [vmem:[%s1317 + $0x30] sm:$0xf]
        %v1331 = vld [vmem:[%s1317 + $0x34] sm:$0x1]
        %v1332 = vrot.slane %v1004, 2
        %v1347 = vunpack.c.l.b16 %v1318
        %v1348 = vunpack.c.l.b16 %v1319
        %v1349 = vunpack.c.l.b16 %v1320
        %v1350 = vunpack.c.l.b16 %v1321
        %v1351 = vunpack.c.l.b16 %v1322
        %v1352 = vunpack.c.l.b16 %v1323
        %v1353 = vunpack.c.l.b16 %v1324
        %v1354 = vunpack.c.l.b16 %v1325
        %v1355 = vunpack.c.l.b16 %v1326
        %v1356 = vunpack.c.l.b16 %v1327
        %v1357 = vunpack.c.l.b16 %v1328
        %v1358 = vunpack.c.l.b16 %v1329
        %v1359 = vunpack.c.l.b16 %v1330
        %v1360 = vunpack.c.l.b16 %v1331
        %v1361 = vpack.c.b16 %v1348, %v1347
        %v1362 = vpack.c.b16 %v1350, %v1349
        %v1363 = vpack.c.b16 %v1352, %v1351
        %v1364 = vpack.c.b16 %v1354, %v1353
        %v1365 = vpack.c.b16 %v1356, %v1355
        %v1366 = vpack.c.b16 %v1358, %v1357
        %v1367 = vpack.c.b16 %v1360, %v1359
        %v1375 = vsel %vm1060, %v1332, 0
        %v1378 = vand.u32 %v1367, %v1066
        %1380 = vmatpush.bf16.msra.mxu0 0
        %1381 = vmatpush.bf16.msra.mxu0 %v1378
        %1382 = vmatpush.bf16.msra.mxu0 %v1366
        %1383 = vmatpush.bf16.msra.mxu0 %v1365
        %1384 = vmatpush.bf16.msra.mxu0 %v1364
        %1385 = vmatpush.bf16.msra.mxu0 %v1363
        %1386 = vmatpush.bf16.msra.mxu0 %v1362
        %1387 = vmatpush.bf16.msra.mxu0 %v1361
        %1388 = vmatmul.bf16.gmra.mxu0 %v1375
        %v1389 = vpop.f32.mrf.mxu0
        %v1390 = vadd.f32 0.0, %v1389
        %v1391 = vpop.f32.mrf.mxu0
        %1392 = vdwg.mxu0
        %v1393 = vadd.f32 %v1316, %v1390
        %s1394 = scalar_lea.vmem %s3, 280
        %v1395 = vld [vmem:[%s1394] sm:$0xf]
        %v1396 = vld [vmem:[%s1394 + $0x4] sm:$0xf]
        %v1397 = vld [vmem:[%s1394 + $0x8] sm:$0xf]
        %v1398 = vld [vmem:[%s1394 + $0xc] sm:$0xf]
        %v1399 = vld [vmem:[%s1394 + $0x10] sm:$0xf]
        %v1400 = vld [vmem:[%s1394 + $0x14] sm:$0xf]
        %v1401 = vld [vmem:[%s1394 + $0x18] sm:$0xf]
        %v1402 = vld [vmem:[%s1394 + $0x1c] sm:$0xf]
        %v1403 = vld [vmem:[%s1394 + $0x20] sm:$0xf]
        %v1404 = vld [vmem:[%s1394 + $0x24] sm:$0xf]
        %v1405 = vld [vmem:[%s1394 + $0x28] sm:$0xf]
        %v1406 = vld [vmem:[%s1394 + $0x2c] sm:$0xf]
        %v1407 = vld [vmem:[%s1394 + $0x30] sm:$0xf]
        %v1408 = vld [vmem:[%s1394 + $0x34] sm:$0x1]
        %v1409 = vrot.slane %v1099, 2
        %v1424 = vunpack.c.l.b16 %v1395
        %v1425 = vunpack.c.l.b16 %v1396
        %v1426 = vunpack.c.l.b16 %v1397
        %v1427 = vunpack.c.l.b16 %v1398
        %v1428 = vunpack.c.l.b16 %v1399
        %v1429 = vunpack.c.l.b16 %v1400
        %v1430 = vunpack.c.l.b16 %v1401
        %v1431 = vunpack.c.l.b16 %v1402
        %v1432 = vunpack.c.l.b16 %v1403
        %v1433 = vunpack.c.l.b16 %v1404
        %v1434 = vunpack.c.l.b16 %v1405
        %v1435 = vunpack.c.l.b16 %v1406
        %v1436 = vunpack.c.l.b16 %v1407
        %v1437 = vunpack.c.l.b16 %v1408
        %v1438 = vpack.c.b16 %v1425, %v1424
        %v1439 = vpack.c.b16 %v1427, %v1426
        %v1440 = vpack.c.b16 %v1429, %v1428
        %v1441 = vpack.c.b16 %v1431, %v1430
        %v1442 = vpack.c.b16 %v1433, %v1432
        %v1443 = vpack.c.b16 %v1435, %v1434
        %v1444 = vpack.c.b16 %v1437, %v1436
        %v1452 = vsel %vm1060, %v1409, 0
        %v1455 = vand.u32 %v1444, %v1066
        %1457 = vmatpush.bf16.msra.mxu0 0
        %1458 = vmatpush.bf16.msra.mxu0 %v1455
        %1459 = vmatpush.bf16.msra.mxu0 %v1443
        %1460 = vmatpush.bf16.msra.mxu0 %v1442
        %1461 = vmatpush.bf16.msra.mxu0 %v1441
        %1462 = vmatpush.bf16.msra.mxu0 %v1440
        %1463 = vmatpush.bf16.msra.mxu0 %v1439
        %1464 = vmatpush.bf16.msra.mxu0 %v1438
        %1465 = vmatmul.bf16.gmra.mxu0 %v1452
        %v1466 = vpop.f32.mrf.mxu0
        %v1467 = vadd.f32 0.0, %v1466
        %v1468 = vpop.f32.mrf.mxu0
        %1469 = vdwg.mxu0
        %v1470 = vadd.f32 %v1393, %v1467
        %s1471 = scalar_lea.vmem %s3, 336
        %v1472 = vld [vmem:[%s1471] sm:$0xf]
        %v1473 = vld [vmem:[%s1471 + $0x4] sm:$0xf]
        %v1474 = vld [vmem:[%s1471 + $0x8] sm:$0xf]
        %v1475 = vld [vmem:[%s1471 + $0xc] sm:$0xf]
        %v1476 = vld [vmem:[%s1471 + $0x10] sm:$0xf]
        %v1477 = vld [vmem:[%s1471 + $0x14] sm:$0xf]
        %v1478 = vld [vmem:[%s1471 + $0x18] sm:$0xf]
        %v1479 = vld [vmem:[%s1471 + $0x1c] sm:$0xf]
        %v1480 = vld [vmem:[%s1471 + $0x20] sm:$0xf]
        %v1481 = vld [vmem:[%s1471 + $0x24] sm:$0xf]
        %v1482 = vld [vmem:[%s1471 + $0x28] sm:$0xf]
        %v1483 = vld [vmem:[%s1471 + $0x2c] sm:$0xf]
        %v1484 = vld [vmem:[%s1471 + $0x30] sm:$0xf]
        %v1485 = vld [vmem:[%s1471 + $0x34] sm:$0x1]
        %v1486 = vrot.slane %v1004, 3
        %v1501 = vunpack.c.l.b16 %v1472
        %v1502 = vunpack.c.l.b16 %v1473
        %v1503 = vunpack.c.l.b16 %v1474
        %v1504 = vunpack.c.l.b16 %v1475
        %v1505 = vunpack.c.l.b16 %v1476
        %v1506 = vunpack.c.l.b16 %v1477
        %v1507 = vunpack.c.l.b16 %v1478
        %v1508 = vunpack.c.l.b16 %v1479
        %v1509 = vunpack.c.l.b16 %v1480
        %v1510 = vunpack.c.l.b16 %v1481
        %v1511 = vunpack.c.l.b16 %v1482
        %v1512 = vunpack.c.l.b16 %v1483
        %v1513 = vunpack.c.l.b16 %v1484
        %v1514 = vunpack.c.l.b16 %v1485
        %v1515 = vpack.c.b16 %v1502, %v1501
        %v1516 = vpack.c.b16 %v1504, %v1503
        %v1517 = vpack.c.b16 %v1506, %v1505
        %v1518 = vpack.c.b16 %v1508, %v1507
        %v1519 = vpack.c.b16 %v1510, %v1509
        %v1520 = vpack.c.b16 %v1512, %v1511
        %v1521 = vpack.c.b16 %v1514, %v1513
        %v1529 = vsel %vm1060, %v1486, 0
        %v1532 = vand.u32 %v1521, %v1066
        %1534 = vmatpush.bf16.msra.mxu0 0
        %1535 = vmatpush.bf16.msra.mxu0 %v1532
        %1536 = vmatpush.bf16.msra.mxu0 %v1520
        %1537 = vmatpush.bf16.msra.mxu0 %v1519
        %1538 = vmatpush.bf16.msra.mxu0 %v1518
        %1539 = vmatpush.bf16.msra.mxu0 %v1517
        %1540 = vmatpush.bf16.msra.mxu0 %v1516
        %1541 = vmatpush.bf16.msra.mxu0 %v1515
        %1542 = vmatmul.bf16.gmra.mxu0 %v1529
        %v1543 = vpop.f32.mrf.mxu0
        %v1544 = vadd.f32 0.0, %v1543
        %v1545 = vpop.f32.mrf.mxu0
        %1546 = vdwg.mxu0
        %v1547 = vadd.f32 %v1470, %v1544
        %s1548 = scalar_lea.vmem %s3, 392
        %v1549 = vld [vmem:[%s1548] sm:$0xf]
        %v1550 = vld [vmem:[%s1548 + $0x4] sm:$0xf]
        %v1551 = vld [vmem:[%s1548 + $0x8] sm:$0xf]
        %v1552 = vld [vmem:[%s1548 + $0xc] sm:$0xf]
        %v1553 = vld [vmem:[%s1548 + $0x10] sm:$0xf]
        %v1554 = vld [vmem:[%s1548 + $0x14] sm:$0xf]
        %v1555 = vld [vmem:[%s1548 + $0x18] sm:$0xf]
        %v1556 = vld [vmem:[%s1548 + $0x1c] sm:$0xf]
        %v1557 = vld [vmem:[%s1548 + $0x20] sm:$0xf]
        %v1558 = vld [vmem:[%s1548 + $0x24] sm:$0xf]
        %v1559 = vld [vmem:[%s1548 + $0x28] sm:$0xf]
        %v1560 = vld [vmem:[%s1548 + $0x2c] sm:$0xf]
        %v1561 = vld [vmem:[%s1548 + $0x30] sm:$0xf]
        %v1562 = vld [vmem:[%s1548 + $0x34] sm:$0x1]
        %v1563 = vrot.slane %v1099, 3
        %v1578 = vunpack.c.l.b16 %v1549
        %v1579 = vunpack.c.l.b16 %v1550
        %v1580 = vunpack.c.l.b16 %v1551
        %v1581 = vunpack.c.l.b16 %v1552
        %v1582 = vunpack.c.l.b16 %v1553
        %v1583 = vunpack.c.l.b16 %v1554
        %v1584 = vunpack.c.l.b16 %v1555
        %v1585 = vunpack.c.l.b16 %v1556
        %v1586 = vunpack.c.l.b16 %v1557
        %v1587 = vunpack.c.l.b16 %v1558
        %v1588 = vunpack.c.l.b16 %v1559
        %v1589 = vunpack.c.l.b16 %v1560
        %v1590 = vunpack.c.l.b16 %v1561
        %v1591 = vunpack.c.l.b16 %v1562
        %v1592 = vpack.c.b16 %v1579, %v1578
        %v1593 = vpack.c.b16 %v1581, %v1580
        %v1594 = vpack.c.b16 %v1583, %v1582
        %v1595 = vpack.c.b16 %v1585, %v1584
        %v1596 = vpack.c.b16 %v1587, %v1586
        %v1597 = vpack.c.b16 %v1589, %v1588
        %v1598 = vpack.c.b16 %v1591, %v1590
        %v1606 = vsel %vm1060, %v1563, 0
        %v1609 = vand.u32 %v1598, %v1066
        %1611 = vmatpush.bf16.msra.mxu0 0
        %1612 = vmatpush.bf16.msra.mxu0 %v1609
        %1613 = vmatpush.bf16.msra.mxu0 %v1597
        %1614 = vmatpush.bf16.msra.mxu0 %v1596
        %1615 = vmatpush.bf16.msra.mxu0 %v1595
        %1616 = vmatpush.bf16.msra.mxu0 %v1594
        %1617 = vmatpush.bf16.msra.mxu0 %v1593
        %1618 = vmatpush.bf16.msra.mxu0 %v1592
        %1619 = vmatmul.bf16.gmra.mxu0 %v1606
        %v1620 = vpop.f32.mrf.mxu0
        %v1621 = vadd.f32 0.0, %v1620
        %v1622 = vpop.f32.mrf.mxu0
        %1623 = vdwg.mxu0
        %v1624 = vadd.f32 %v1547, %v1621
        %v1625 = vpack.c.bf16 %v1001, %v1001
        %s1626 = scalar_lea.vmem %s3, 448
        %v1627 = vld [vmem:[%s1626] sm:$0xf]
        %v1628 = vld [vmem:[%s1626 + $0x4] sm:$0xf]
        %v1629 = vld [vmem:[%s1626 + $0x8] sm:$0xf]
        %v1630 = vld [vmem:[%s1626 + $0xc] sm:$0xf]
        %v1631 = vld [vmem:[%s1626 + $0x10] sm:$0xf]
        %v1632 = vld [vmem:[%s1626 + $0x14] sm:$0xf]
        %v1633 = vld [vmem:[%s1626 + $0x18] sm:$0xf]
        %v1634 = vld [vmem:[%s1626 + $0x1c] sm:$0xf]
        %v1635 = vld [vmem:[%s1626 + $0x20] sm:$0xf]
        %v1636 = vld [vmem:[%s1626 + $0x24] sm:$0xf]
        %v1637 = vld [vmem:[%s1626 + $0x28] sm:$0xf]
        %v1638 = vld [vmem:[%s1626 + $0x2c] sm:$0xf]
        %v1639 = vld [vmem:[%s1626 + $0x30] sm:$0xf]
        %v1640 = vld [vmem:[%s1626 + $0x34] sm:$0x1]
        %v1655 = vunpack.c.l.b16 %v1627
        %v1656 = vunpack.c.l.b16 %v1628
        %v1657 = vunpack.c.l.b16 %v1629
        %v1658 = vunpack.c.l.b16 %v1630
        %v1659 = vunpack.c.l.b16 %v1631
        %v1660 = vunpack.c.l.b16 %v1632
        %v1661 = vunpack.c.l.b16 %v1633
        %v1662 = vunpack.c.l.b16 %v1634
        %v1663 = vunpack.c.l.b16 %v1635
        %v1664 = vunpack.c.l.b16 %v1636
        %v1665 = vunpack.c.l.b16 %v1637
        %v1666 = vunpack.c.l.b16 %v1638
        %v1667 = vunpack.c.l.b16 %v1639
        %v1668 = vunpack.c.l.b16 %v1640
        %v1669 = vpack.c.b16 %v1656, %v1655
        %v1670 = vpack.c.b16 %v1658, %v1657
        %v1671 = vpack.c.b16 %v1660, %v1659
        %v1672 = vpack.c.b16 %v1662, %v1661
        %v1673 = vpack.c.b16 %v1664, %v1663
        %v1674 = vpack.c.b16 %v1666, %v1665
        %v1675 = vpack.c.b16 %v1668, %v1667
        %v1683 = vsel %vm1060, %v1625, 0
        %v1686 = vand.u32 %v1675, %v1066
        %1688 = vmatpush.bf16.msra.mxu0 0
        %1689 = vmatpush.bf16.msra.mxu0 %v1686
        %1690 = vmatpush.bf16.msra.mxu0 %v1674
        %1691 = vmatpush.bf16.msra.mxu0 %v1673
        %1692 = vmatpush.bf16.msra.mxu0 %v1672
        %1693 = vmatpush.bf16.msra.mxu0 %v1671
        %1694 = vmatpush.bf16.msra.mxu0 %v1670
        %1695 = vmatpush.bf16.msra.mxu0 %v1669
        %1696 = vmatmul.bf16.gmra.mxu0 %v1683
        %v1697 = vpop.f32.mrf.mxu0
        %v1698 = vadd.f32 0.0, %v1697
        %v1699 = vpop.f32.mrf.mxu0
        %1700 = vdwg.mxu0
        %v1701 = vadd.f32 %v1624, %v1698
        %s1702 = scalar_lea.vmem %s3, 504
        %v1703 = vld [vmem:[%s1702] sm:$0xf]
        %v1704 = vld [vmem:[%s1702 + $0x4] sm:$0xf]
        %v1705 = vld [vmem:[%s1702 + $0x8] sm:$0xf]
        %v1706 = vld [vmem:[%s1702 + $0xc] sm:$0xf]
        %v1707 = vld [vmem:[%s1702 + $0x10] sm:$0xf]
        %v1708 = vld [vmem:[%s1702 + $0x14] sm:$0xf]
        %v1709 = vld [vmem:[%s1702 + $0x18] sm:$0xf]
        %v1710 = vld [vmem:[%s1702 + $0x1c] sm:$0xf]
        %v1711 = vld [vmem:[%s1702 + $0x20] sm:$0xf]
        %v1712 = vld [vmem:[%s1702 + $0x24] sm:$0xf]
        %v1713 = vld [vmem:[%s1702 + $0x28] sm:$0xf]
        %v1714 = vld [vmem:[%s1702 + $0x2c] sm:$0xf]
        %v1715 = vld [vmem:[%s1702 + $0x30] sm:$0xf]
        %v1716 = vld [vmem:[%s1702 + $0x34] sm:$0x1]
        %v1717 = vshrl.u32 %v1625, 16
        %v1733 = vunpack.c.l.b16 %v1703
        %v1734 = vunpack.c.l.b16 %v1704
        %v1735 = vunpack.c.l.b16 %v1705
        %v1736 = vunpack.c.l.b16 %v1706
        %v1737 = vunpack.c.l.b16 %v1707
        %v1738 = vunpack.c.l.b16 %v1708
        %v1739 = vunpack.c.l.b16 %v1709
        %v1740 = vunpack.c.l.b16 %v1710
        %v1741 = vunpack.c.l.b16 %v1711
        %v1742 = vunpack.c.l.b16 %v1712
        %v1743 = vunpack.c.l.b16 %v1713
        %v1744 = vunpack.c.l.b16 %v1714
        %v1745 = vunpack.c.l.b16 %v1715
        %v1746 = vunpack.c.l.b16 %v1716
        %v1747 = vpack.c.b16 %v1734, %v1733
        %v1748 = vpack.c.b16 %v1736, %v1735
        %v1749 = vpack.c.b16 %v1738, %v1737
        %v1750 = vpack.c.b16 %v1740, %v1739
        %v1751 = vpack.c.b16 %v1742, %v1741
        %v1752 = vpack.c.b16 %v1744, %v1743
        %v1753 = vpack.c.b16 %v1746, %v1745
        %v1761 = vsel %vm1060, %v1717, 0
        %v1764 = vand.u32 %v1753, %v1066
        %1766 = vmatpush.bf16.msra.mxu0 0
        %1767 = vmatpush.bf16.msra.mxu0 %v1764
        %1768 = vmatpush.bf16.msra.mxu0 %v1752
        %1769 = vmatpush.bf16.msra.mxu0 %v1751
        %1770 = vmatpush.bf16.msra.mxu0 %v1750
        %1771 = vmatpush.bf16.msra.mxu0 %v1749
        %1772 = vmatpush.bf16.msra.mxu0 %v1748
        %1773 = vmatpush.bf16.msra.mxu0 %v1747
        %1774 = vmatmul.bf16.gmra.mxu0 %v1761
        %v1775 = vpop.f32.mrf.mxu0
        %v1776 = vadd.f32 0.0, %v1775
        %v1777 = vpop.f32.mrf.mxu0
        %1778 = vdwg.mxu0
        %v1779 = vadd.f32 %v1701, %v1776
        %s1780 = scalar_lea.vmem %s3, 560
        %v1781 = vld [vmem:[%s1780] sm:$0xf]
        %v1782 = vld [vmem:[%s1780 + $0x4] sm:$0xf]
        %v1783 = vld [vmem:[%s1780 + $0x8] sm:$0xf]
        %v1784 = vld [vmem:[%s1780 + $0xc] sm:$0xf]
        %v1785 = vld [vmem:[%s1780 + $0x10] sm:$0xf]
        %v1786 = vld [vmem:[%s1780 + $0x14] sm:$0xf]
        %v1787 = vld [vmem:[%s1780 + $0x18] sm:$0xf]
        %v1788 = vld [vmem:[%s1780 + $0x1c] sm:$0xf]
        %v1789 = vld [vmem:[%s1780 + $0x20] sm:$0xf]
        %v1790 = vld [vmem:[%s1780 + $0x24] sm:$0xf]
        %v1791 = vld [vmem:[%s1780 + $0x28] sm:$0xf]
        %v1792 = vld [vmem:[%s1780 + $0x2c] sm:$0xf]
        %v1793 = vld [vmem:[%s1780 + $0x30] sm:$0xf]
        %v1794 = vld [vmem:[%s1780 + $0x34] sm:$0x1]
        %v1796 = vrot.slane %v1625, 1
        %v1811 = vunpack.c.l.b16 %v1781
        %v1812 = vunpack.c.l.b16 %v1782
        %v1813 = vunpack.c.l.b16 %v1783
        %v1814 = vunpack.c.l.b16 %v1784
        %v1815 = vunpack.c.l.b16 %v1785
        %v1816 = vunpack.c.l.b16 %v1786
        %v1817 = vunpack.c.l.b16 %v1787
        %v1818 = vunpack.c.l.b16 %v1788
        %v1819 = vunpack.c.l.b16 %v1789
        %v1820 = vunpack.c.l.b16 %v1790
        %v1821 = vunpack.c.l.b16 %v1791
        %v1822 = vunpack.c.l.b16 %v1792
        %v1823 = vunpack.c.l.b16 %v1793
        %v1824 = vunpack.c.l.b16 %v1794
        %v1825 = vpack.c.b16 %v1812, %v1811
        %v1826 = vpack.c.b16 %v1814, %v1813
        %v1827 = vpack.c.b16 %v1816, %v1815
        %v1828 = vpack.c.b16 %v1818, %v1817
        %v1829 = vpack.c.b16 %v1820, %v1819
        %v1830 = vpack.c.b16 %v1822, %v1821
        %v1831 = vpack.c.b16 %v1824, %v1823
        %v1839 = vsel %vm1060, %v1796, 0
        %v1842 = vand.u32 %v1831, %v1066
        %1844 = vmatpush.bf16.msra.mxu0 0
        %1845 = vmatpush.bf16.msra.mxu0 %v1842
        %1846 = vmatpush.bf16.msra.mxu0 %v1830
        %1847 = vmatpush.bf16.msra.mxu0 %v1829
        %1848 = vmatpush.bf16.msra.mxu0 %v1828
        %1849 = vmatpush.bf16.msra.mxu0 %v1827
        %1850 = vmatpush.bf16.msra.mxu0 %v1826
        %1851 = vmatpush.bf16.msra.mxu0 %v1825
        %1852 = vmatmul.bf16.gmra.mxu0 %v1839
        %v1853 = vpop.f32.mrf.mxu0
        %v1854 = vadd.f32 0.0, %v1853
        %v1855 = vpop.f32.mrf.mxu0
        %1856 = vdwg.mxu0
        %v1857 = vadd.f32 %v1779, %v1854
        %s1858 = scalar_lea.vmem %s3, 616
        %v1859 = vld [vmem:[%s1858] sm:$0xf]
        %v1860 = vld [vmem:[%s1858 + $0x4] sm:$0xf]
        %v1861 = vld [vmem:[%s1858 + $0x8] sm:$0xf]
        %v1862 = vld [vmem:[%s1858 + $0xc] sm:$0xf]
        %v1863 = vld [vmem:[%s1858 + $0x10] sm:$0xf]
        %v1864 = vld [vmem:[%s1858 + $0x14] sm:$0xf]
        %v1865 = vld [vmem:[%s1858 + $0x18] sm:$0xf]
        %v1866 = vld [vmem:[%s1858 + $0x1c] sm:$0xf]
        %v1867 = vld [vmem:[%s1858 + $0x20] sm:$0xf]
        %v1868 = vld [vmem:[%s1858 + $0x24] sm:$0xf]
        %v1869 = vld [vmem:[%s1858 + $0x28] sm:$0xf]
        %v1870 = vld [vmem:[%s1858 + $0x2c] sm:$0xf]
        %v1871 = vld [vmem:[%s1858 + $0x30] sm:$0xf]
        %v1872 = vld [vmem:[%s1858 + $0x34] sm:$0x1]
        %v1873 = vrot.slane %v1717, 1
        %v1888 = vunpack.c.l.b16 %v1859
        %v1889 = vunpack.c.l.b16 %v1860
        %v1890 = vunpack.c.l.b16 %v1861
        %v1891 = vunpack.c.l.b16 %v1862
        %v1892 = vunpack.c.l.b16 %v1863
        %v1893 = vunpack.c.l.b16 %v1864
        %v1894 = vunpack.c.l.b16 %v1865
        %v1895 = vunpack.c.l.b16 %v1866
        %v1896 = vunpack.c.l.b16 %v1867
        %v1897 = vunpack.c.l.b16 %v1868
        %v1898 = vunpack.c.l.b16 %v1869
        %v1899 = vunpack.c.l.b16 %v1870
        %v1900 = vunpack.c.l.b16 %v1871
        %v1901 = vunpack.c.l.b16 %v1872
        %v1902 = vpack.c.b16 %v1889, %v1888
        %v1903 = vpack.c.b16 %v1891, %v1890
        %v1904 = vpack.c.b16 %v1893, %v1892
        %v1905 = vpack.c.b16 %v1895, %v1894
        %v1906 = vpack.c.b16 %v1897, %v1896
        %v1907 = vpack.c.b16 %v1899, %v1898
        %v1908 = vpack.c.b16 %v1901, %v1900
        %v1916 = vsel %vm1060, %v1873, 0
        %v1919 = vand.u32 %v1908, %v1066
        %1921 = vmatpush.bf16.msra.mxu0 0
        %1922 = vmatpush.bf16.msra.mxu0 %v1919
        %1923 = vmatpush.bf16.msra.mxu0 %v1907
        %1924 = vmatpush.bf16.msra.mxu0 %v1906
        %1925 = vmatpush.bf16.msra.mxu0 %v1905
        %1926 = vmatpush.bf16.msra.mxu0 %v1904
        %1927 = vmatpush.bf16.msra.mxu0 %v1903
        %1928 = vmatpush.bf16.msra.mxu0 %v1902
        %1929 = vmatmul.bf16.gmra.mxu0 %v1916
        %v1930 = vpop.f32.mrf.mxu0
        %v1931 = vadd.f32 0.0, %v1930
        %v1932 = vpop.f32.mrf.mxu0
        %1933 = vdwg.mxu0
        %v1934 = vadd.f32 %v1857, %v1931
        %s1935 = scalar_lea.vmem %s3, 672
        %v1936 = vld [vmem:[%s1935] sm:$0xf]
        %v1937 = vld [vmem:[%s1935 + $0x4] sm:$0xf]
        %v1938 = vld [vmem:[%s1935 + $0x8] sm:$0xf]
        %v1939 = vld [vmem:[%s1935 + $0xc] sm:$0xf]
        %v1940 = vld [vmem:[%s1935 + $0x10] sm:$0xf]
        %v1941 = vld [vmem:[%s1935 + $0x14] sm:$0xf]
        %v1942 = vld [vmem:[%s1935 + $0x18] sm:$0xf]
        %v1943 = vld [vmem:[%s1935 + $0x1c] sm:$0xf]
        %v1944 = vld [vmem:[%s1935 + $0x20] sm:$0xf]
        %v1945 = vld [vmem:[%s1935 + $0x24] sm:$0xf]
        %v1946 = vld [vmem:[%s1935 + $0x28] sm:$0xf]
        %v1947 = vld [vmem:[%s1935 + $0x2c] sm:$0xf]
        %v1948 = vld [vmem:[%s1935 + $0x30] sm:$0xf]
        %v1949 = vld [vmem:[%s1935 + $0x34] sm:$0x1]
        %v1950 = vrot.slane %v1625, 2
        %v1965 = vunpack.c.l.b16 %v1936
        %v1966 = vunpack.c.l.b16 %v1937
        %v1967 = vunpack.c.l.b16 %v1938
        %v1968 = vunpack.c.l.b16 %v1939
        %v1969 = vunpack.c.l.b16 %v1940
        %v1970 = vunpack.c.l.b16 %v1941
        %v1971 = vunpack.c.l.b16 %v1942
        %v1972 = vunpack.c.l.b16 %v1943
        %v1973 = vunpack.c.l.b16 %v1944
        %v1974 = vunpack.c.l.b16 %v1945
        %v1975 = vunpack.c.l.b16 %v1946
        %v1976 = vunpack.c.l.b16 %v1947
        %v1977 = vunpack.c.l.b16 %v1948
        %v1978 = vunpack.c.l.b16 %v1949
        %v1979 = vpack.c.b16 %v1966, %v1965
        %v1980 = vpack.c.b16 %v1968, %v1967
        %v1981 = vpack.c.b16 %v1970, %v1969
        %v1982 = vpack.c.b16 %v1972, %v1971
        %v1983 = vpack.c.b16 %v1974, %v1973
        %v1984 = vpack.c.b16 %v1976, %v1975
        %v1985 = vpack.c.b16 %v1978, %v1977
        %v1993 = vsel %vm1060, %v1950, 0
        %v1996 = vand.u32 %v1985, %v1066
        %1998 = vmatpush.bf16.msra.mxu0 0
        %1999 = vmatpush.bf16.msra.mxu0 %v1996
        %2000 = vmatpush.bf16.msra.mxu0 %v1984
        %2001 = vmatpush.bf16.msra.mxu0 %v1983
        %2002 = vmatpush.bf16.msra.mxu0 %v1982
        %2003 = vmatpush.bf16.msra.mxu0 %v1981
        %2004 = vmatpush.bf16.msra.mxu0 %v1980
        %2005 = vmatpush.bf16.msra.mxu0 %v1979
        %2006 = vmatmul.bf16.gmra.mxu0 %v1993
        %v2007 = vpop.f32.mrf.mxu0
        %v2008 = vadd.f32 0.0, %v2007
        %v2009 = vpop.f32.mrf.mxu0
        %2010 = vdwg.mxu0
        %v2011 = vadd.f32 %v1934, %v2008
        %s2012 = scalar_lea.vmem %s3, 728
        %v2013 = vld [vmem:[%s2012] sm:$0xf]
        %v2014 = vld [vmem:[%s2012 + $0x4] sm:$0xf]
        %v2015 = vld [vmem:[%s2012 + $0x8] sm:$0xf]
        %v2016 = vld [vmem:[%s2012 + $0xc] sm:$0xf]
        %v2017 = vld [vmem:[%s2012 + $0x10] sm:$0xf]
        %v2018 = vld [vmem:[%s2012 + $0x14] sm:$0xf]
        %v2019 = vld [vmem:[%s2012 + $0x18] sm:$0xf]
        %v2020 = vld [vmem:[%s2012 + $0x1c] sm:$0xf]
        %v2021 = vld [vmem:[%s2012 + $0x20] sm:$0xf]
        %v2022 = vld [vmem:[%s2012 + $0x24] sm:$0xf]
        %v2023 = vld [vmem:[%s2012 + $0x28] sm:$0xf]
        %v2024 = vld [vmem:[%s2012 + $0x2c] sm:$0xf]
        %v2025 = vld [vmem:[%s2012 + $0x30] sm:$0xf]
        %v2026 = vld [vmem:[%s2012 + $0x34] sm:$0x1]
        %v2027 = vrot.slane %v1717, 2
        %v2042 = vunpack.c.l.b16 %v2013
        %v2043 = vunpack.c.l.b16 %v2014
        %v2044 = vunpack.c.l.b16 %v2015
        %v2045 = vunpack.c.l.b16 %v2016
        %v2046 = vunpack.c.l.b16 %v2017
        %v2047 = vunpack.c.l.b16 %v2018
        %v2048 = vunpack.c.l.b16 %v2019
        %v2049 = vunpack.c.l.b16 %v2020
        %v2050 = vunpack.c.l.b16 %v2021
        %v2051 = vunpack.c.l.b16 %v2022
        %v2052 = vunpack.c.l.b16 %v2023
        %v2053 = vunpack.c.l.b16 %v2024
        %v2054 = vunpack.c.l.b16 %v2025
        %v2055 = vunpack.c.l.b16 %v2026
        %v2056 = vpack.c.b16 %v2043, %v2042
        %v2057 = vpack.c.b16 %v2045, %v2044
        %v2058 = vpack.c.b16 %v2047, %v2046
        %v2059 = vpack.c.b16 %v2049, %v2048
        %v2060 = vpack.c.b16 %v2051, %v2050
        %v2061 = vpack.c.b16 %v2053, %v2052
        %v2062 = vpack.c.b16 %v2055, %v2054
        %v2070 = vsel %vm1060, %v2027, 0
        %v2073 = vand.u32 %v2062, %v1066
        %2075 = vmatpush.bf16.msra.mxu0 0
        %2076 = vmatpush.bf16.msra.mxu0 %v2073
        %2077 = vmatpush.bf16.msra.mxu0 %v2061
        %2078 = vmatpush.bf16.msra.mxu0 %v2060
        %2079 = vmatpush.bf16.msra.mxu0 %v2059
        %2080 = vmatpush.bf16.msra.mxu0 %v2058
        %2081 = vmatpush.bf16.msra.mxu0 %v2057
        %2082 = vmatpush.bf16.msra.mxu0 %v2056
        %2083 = vmatmul.bf16.gmra.mxu0 %v2070
        %v2084 = vpop.f32.mrf.mxu0
        %v2085 = vadd.f32 0.0, %v2084
        %v2086 = vpop.f32.mrf.mxu0
        %2087 = vdwg.mxu0
        %v2088 = vadd.f32 %v2011, %v2085
        %s2089 = scalar_lea.vmem %s3, 784
        %v2090 = vld [vmem:[%s2089] sm:$0xf]
        %v2091 = vld [vmem:[%s2089 + $0x4] sm:$0xf]
        %v2092 = vld [vmem:[%s2089 + $0x8] sm:$0xf]
        %v2093 = vld [vmem:[%s2089 + $0xc] sm:$0xf]
        %v2094 = vld [vmem:[%s2089 + $0x10] sm:$0xf]
        %v2095 = vld [vmem:[%s2089 + $0x14] sm:$0xf]
        %v2096 = vld [vmem:[%s2089 + $0x18] sm:$0xf]
        %v2097 = vld [vmem:[%s2089 + $0x1c] sm:$0xf]
        %v2098 = vld [vmem:[%s2089 + $0x20] sm:$0xf]
        %v2099 = vld [vmem:[%s2089 + $0x24] sm:$0xf]
        %v2100 = vld [vmem:[%s2089 + $0x28] sm:$0xf]
        %v2101 = vld [vmem:[%s2089 + $0x2c] sm:$0xf]
        %v2102 = vld [vmem:[%s2089 + $0x30] sm:$0xf]
        %v2103 = vld [vmem:[%s2089 + $0x34] sm:$0x1]
        %v2104 = vrot.slane %v1625, 3
        %v2119 = vunpack.c.l.b16 %v2090
        %v2120 = vunpack.c.l.b16 %v2091
        %v2121 = vunpack.c.l.b16 %v2092
        %v2122 = vunpack.c.l.b16 %v2093
        %v2123 = vunpack.c.l.b16 %v2094
        %v2124 = vunpack.c.l.b16 %v2095
        %v2125 = vunpack.c.l.b16 %v2096
        %v2126 = vunpack.c.l.b16 %v2097
        %v2127 = vunpack.c.l.b16 %v2098
        %v2128 = vunpack.c.l.b16 %v2099
        %v2129 = vunpack.c.l.b16 %v2100
        %v2130 = vunpack.c.l.b16 %v2101
        %v2131 = vunpack.c.l.b16 %v2102
        %v2132 = vunpack.c.l.b16 %v2103
        %v2133 = vpack.c.b16 %v2120, %v2119
        %v2134 = vpack.c.b16 %v2122, %v2121
        %v2135 = vpack.c.b16 %v2124, %v2123
        %v2136 = vpack.c.b16 %v2126, %v2125
        %v2137 = vpack.c.b16 %v2128, %v2127
        %v2138 = vpack.c.b16 %v2130, %v2129
        %v2139 = vpack.c.b16 %v2132, %v2131
        %v2147 = vsel %vm1060, %v2104, 0
        %v2150 = vand.u32 %v2139, %v1066
        %2152 = vmatpush.bf16.msra.mxu0 0
        %2153 = vmatpush.bf16.msra.mxu0 %v2150
        %2154 = vmatpush.bf16.msra.mxu0 %v2138
        %2155 = vmatpush.bf16.msra.mxu0 %v2137
        %2156 = vmatpush.bf16.msra.mxu0 %v2136
        %2157 = vmatpush.bf16.msra.mxu0 %v2135
        %2158 = vmatpush.bf16.msra.mxu0 %v2134
        %2159 = vmatpush.bf16.msra.mxu0 %v2133
        %2160 = vmatmul.bf16.gmra.mxu0 %v2147
        %v2161 = vpop.f32.mrf.mxu0
        %v2162 = vadd.f32 0.0, %v2161
        %v2163 = vpop.f32.mrf.mxu0
        %2164 = vdwg.mxu0
        %v2165 = vadd.f32 %v2088, %v2162
        %s2166 = scalar_lea.vmem %s3, 840
        %v2167 = vld [vmem:[%s2166] sm:$0xf]
        %v2168 = vld [vmem:[%s2166 + $0x4] sm:$0xf]
        %v2169 = vld [vmem:[%s2166 + $0x8] sm:$0xf]
        %v2170 = vld [vmem:[%s2166 + $0xc] sm:$0xf]
        %v2171 = vld [vmem:[%s2166 + $0x10] sm:$0xf]
        %v2172 = vld [vmem:[%s2166 + $0x14] sm:$0xf]
        %v2173 = vld [vmem:[%s2166 + $0x18] sm:$0xf]
        %v2174 = vld [vmem:[%s2166 + $0x1c] sm:$0xf]
        %v2175 = vld [vmem:[%s2166 + $0x20] sm:$0xf]
        %v2176 = vld [vmem:[%s2166 + $0x24] sm:$0xf]
        %v2177 = vld [vmem:[%s2166 + $0x28] sm:$0xf]
        %v2178 = vld [vmem:[%s2166 + $0x2c] sm:$0xf]
        %v2179 = vld [vmem:[%s2166 + $0x30] sm:$0xf]
        %v2180 = vld [vmem:[%s2166 + $0x34] sm:$0x1]
        %v2181 = vrot.slane %v1717, 3
        %v2196 = vunpack.c.l.b16 %v2167
        %v2197 = vunpack.c.l.b16 %v2168
        %v2198 = vunpack.c.l.b16 %v2169
        %v2199 = vunpack.c.l.b16 %v2170
        %v2200 = vunpack.c.l.b16 %v2171
        %v2201 = vunpack.c.l.b16 %v2172
        %v2202 = vunpack.c.l.b16 %v2173
        %v2203 = vunpack.c.l.b16 %v2174
        %v2204 = vunpack.c.l.b16 %v2175
        %v2205 = vunpack.c.l.b16 %v2176
        %v2206 = vunpack.c.l.b16 %v2177
        %v2207 = vunpack.c.l.b16 %v2178
        %v2208 = vunpack.c.l.b16 %v2179
        %v2209 = vunpack.c.l.b16 %v2180
        %v2210 = vpack.c.b16 %v2197, %v2196
        %v2211 = vpack.c.b16 %v2199, %v2198
        %v2212 = vpack.c.b16 %v2201, %v2200
        %v2213 = vpack.c.b16 %v2203, %v2202
        %v2214 = vpack.c.b16 %v2205, %v2204
        %v2215 = vpack.c.b16 %v2207, %v2206
        %v2216 = vpack.c.b16 %v2209, %v2208
        %v2224 = vsel %vm1060, %v2181, 0
        %v2227 = vand.u32 %v2216, %v1066
        %2229 = vmatpush.bf16.msra.mxu0 0
        %2230 = vmatpush.bf16.msra.mxu0 %v2227
        %2231 = vmatpush.bf16.msra.mxu0 %v2215
        %2232 = vmatpush.bf16.msra.mxu0 %v2214
        %2233 = vmatpush.bf16.msra.mxu0 %v2213
        %2234 = vmatpush.bf16.msra.mxu0 %v2212
        %2235 = vmatpush.bf16.msra.mxu0 %v2211
        %2236 = vmatpush.bf16.msra.mxu0 %v2210
        %2237 = vmatmul.bf16.gmra.mxu0 %v2224
        %v2238 = vpop.f32.mrf.mxu0
        %v2239 = vadd.f32 0.0, %v2238
        %v2240 = vpop.f32.mrf.mxu0
        %2241 = vdwg.mxu0
        %v2242 = vadd.f32 %v2165, %v2239
        %v2243 = vpack.c.bf16 %v1002, %v1002
        %s2244 = scalar_lea.vmem %s3, 896
        %v2245 = vld [vmem:[%s2244] sm:$0xf]
        %v2246 = vld [vmem:[%s2244 + $0x4] sm:$0xf]
        %v2247 = vld [vmem:[%s2244 + $0x8] sm:$0xf]
        %v2248 = vld [vmem:[%s2244 + $0xc] sm:$0xf]
        %v2249 = vld [vmem:[%s2244 + $0x10] sm:$0xf]
        %v2250 = vld [vmem:[%s2244 + $0x14] sm:$0xf]
        %v2251 = vld [vmem:[%s2244 + $0x18] sm:$0xf]
        %v2252 = vld [vmem:[%s2244 + $0x1c] sm:$0xf]
        %v2253 = vld [vmem:[%s2244 + $0x20] sm:$0xf]
        %v2254 = vld [vmem:[%s2244 + $0x24] sm:$0xf]
        %v2255 = vld [vmem:[%s2244 + $0x28] sm:$0xf]
        %v2256 = vld [vmem:[%s2244 + $0x2c] sm:$0xf]
        %v2257 = vld [vmem:[%s2244 + $0x30] sm:$0xf]
        %v2258 = vld [vmem:[%s2244 + $0x34] sm:$0x1]
        %v2273 = vunpack.c.l.b16 %v2245
        %v2274 = vunpack.c.l.b16 %v2246
        %v2275 = vunpack.c.l.b16 %v2247
        %v2276 = vunpack.c.l.b16 %v2248
        %v2277 = vunpack.c.l.b16 %v2249
        %v2278 = vunpack.c.l.b16 %v2250
        %v2279 = vunpack.c.l.b16 %v2251
        %v2280 = vunpack.c.l.b16 %v2252
        %v2281 = vunpack.c.l.b16 %v2253
        %v2282 = vunpack.c.l.b16 %v2254
        %v2283 = vunpack.c.l.b16 %v2255
        %v2284 = vunpack.c.l.b16 %v2256
        %v2285 = vunpack.c.l.b16 %v2257
        %v2286 = vunpack.c.l.b16 %v2258
        %v2287 = vpack.c.b16 %v2274, %v2273
        %v2288 = vpack.c.b16 %v2276, %v2275
        %v2289 = vpack.c.b16 %v2278, %v2277
        %v2290 = vpack.c.b16 %v2280, %v2279
        %v2291 = vpack.c.b16 %v2282, %v2281
        %v2292 = vpack.c.b16 %v2284, %v2283
        %v2293 = vpack.c.b16 %v2286, %v2285
        %v2301 = vsel %vm1060, %v2243, 0
        %v2304 = vand.u32 %v2293, %v1066
        %2306 = vmatpush.bf16.msra.mxu0 0
        %2307 = vmatpush.bf16.msra.mxu0 %v2304
        %2308 = vmatpush.bf16.msra.mxu0 %v2292
        %2309 = vmatpush.bf16.msra.mxu0 %v2291
        %2310 = vmatpush.bf16.msra.mxu0 %v2290
        %2311 = vmatpush.bf16.msra.mxu0 %v2289
        %2312 = vmatpush.bf16.msra.mxu0 %v2288
        %2313 = vmatpush.bf16.msra.mxu0 %v2287
        %2314 = vmatmul.bf16.gmra.mxu0 %v2301
        %v2315 = vpop.f32.mrf.mxu0
        %v2316 = vadd.f32 0.0, %v2315
        %v2317 = vpop.f32.mrf.mxu0
        %2318 = vdwg.mxu0
        %v2319 = vadd.f32 %v2242, %v2316
        %s2320 = scalar_lea.vmem %s3, 952
        %v2321 = vld [vmem:[%s2320] sm:$0xf]
        %v2322 = vld [vmem:[%s2320 + $0x4] sm:$0xf]
        %v2323 = vld [vmem:[%s2320 + $0x8] sm:$0xf]
        %v2324 = vld [vmem:[%s2320 + $0xc] sm:$0xf]
        %v2325 = vld [vmem:[%s2320 + $0x10] sm:$0xf]
        %v2326 = vld [vmem:[%s2320 + $0x14] sm:$0xf]
        %v2327 = vld [vmem:[%s2320 + $0x18] sm:$0xf]
        %v2328 = vld [vmem:[%s2320 + $0x1c] sm:$0xf]
        %v2329 = vld [vmem:[%s2320 + $0x20] sm:$0xf]
        %v2330 = vld [vmem:[%s2320 + $0x24] sm:$0xf]
        %v2331 = vld [vmem:[%s2320 + $0x28] sm:$0xf]
        %v2332 = vld [vmem:[%s2320 + $0x2c] sm:$0xf]
        %v2333 = vld [vmem:[%s2320 + $0x30] sm:$0xf]
        %v2334 = vld [vmem:[%s2320 + $0x34] sm:$0x1]
        %v2335 = vshrl.u32 %v2243, 16
        %v2351 = vunpack.c.l.b16 %v2321
        %v2352 = vunpack.c.l.b16 %v2322
        %v2353 = vunpack.c.l.b16 %v2323
        %v2354 = vunpack.c.l.b16 %v2324
        %v2355 = vunpack.c.l.b16 %v2325
        %v2356 = vunpack.c.l.b16 %v2326
        %v2357 = vunpack.c.l.b16 %v2327
        %v2358 = vunpack.c.l.b16 %v2328
        %v2359 = vunpack.c.l.b16 %v2329
        %v2360 = vunpack.c.l.b16 %v2330
        %v2361 = vunpack.c.l.b16 %v2331
        %v2362 = vunpack.c.l.b16 %v2332
        %v2363 = vunpack.c.l.b16 %v2333
        %v2364 = vunpack.c.l.b16 %v2334
        %v2365 = vpack.c.b16 %v2352, %v2351
        %v2366 = vpack.c.b16 %v2354, %v2353
        %v2367 = vpack.c.b16 %v2356, %v2355
        %v2368 = vpack.c.b16 %v2358, %v2357
        %v2369 = vpack.c.b16 %v2360, %v2359
        %v2370 = vpack.c.b16 %v2362, %v2361
        %v2371 = vpack.c.b16 %v2364, %v2363
        %v2379 = vsel %vm1060, %v2335, 0
        %v2382 = vand.u32 %v2371, %v1066
        %2384 = vmatpush.bf16.msra.mxu0 0
        %2385 = vmatpush.bf16.msra.mxu0 %v2382
        %2386 = vmatpush.bf16.msra.mxu0 %v2370
        %2387 = vmatpush.bf16.msra.mxu0 %v2369
        %2388 = vmatpush.bf16.msra.mxu0 %v2368
        %2389 = vmatpush.bf16.msra.mxu0 %v2367
        %2390 = vmatpush.bf16.msra.mxu0 %v2366
        %2391 = vmatpush.bf16.msra.mxu0 %v2365
        %2392 = vmatmul.bf16.gmra.mxu0 %v2379
        %v2393 = vpop.f32.mrf.mxu0
        %v2394 = vadd.f32 0.0, %v2393
        %v2395 = vpop.f32.mrf.mxu0
        %2396 = vdwg.mxu0
        %v2397 = vadd.f32 %v2319, %v2394
        %s2398 = scalar_lea.vmem %s3, 1008
        %v2399 = vld [vmem:[%s2398] sm:$0xf]
        %v2400 = vld [vmem:[%s2398 + $0x4] sm:$0xf]
        %v2401 = vld [vmem:[%s2398 + $0x8] sm:$0xf]
        %v2402 = vld [vmem:[%s2398 + $0xc] sm:$0xf]
        %v2403 = vld [vmem:[%s2398 + $0x10] sm:$0xf]
        %v2404 = vld [vmem:[%s2398 + $0x14] sm:$0xf]
        %v2405 = vld [vmem:[%s2398 + $0x18] sm:$0xf]
        %v2406 = vld [vmem:[%s2398 + $0x1c] sm:$0xf]
        %v2407 = vld [vmem:[%s2398 + $0x20] sm:$0xf]
        %v2408 = vld [vmem:[%s2398 + $0x24] sm:$0xf]
        %v2409 = vld [vmem:[%s2398 + $0x28] sm:$0xf]
        %v2410 = vld [vmem:[%s2398 + $0x2c] sm:$0xf]
        %v2411 = vld [vmem:[%s2398 + $0x30] sm:$0xf]
        %v2412 = vld [vmem:[%s2398 + $0x34] sm:$0x1]
        %v2414 = vrot.slane %v2243, 1
        %v2429 = vunpack.c.l.b16 %v2399
        %v2430 = vunpack.c.l.b16 %v2400
        %v2431 = vunpack.c.l.b16 %v2401
        %v2432 = vunpack.c.l.b16 %v2402
        %v2433 = vunpack.c.l.b16 %v2403
        %v2434 = vunpack.c.l.b16 %v2404
        %v2435 = vunpack.c.l.b16 %v2405
        %v2436 = vunpack.c.l.b16 %v2406
        %v2437 = vunpack.c.l.b16 %v2407
        %v2438 = vunpack.c.l.b16 %v2408
        %v2439 = vunpack.c.l.b16 %v2409
        %v2440 = vunpack.c.l.b16 %v2410
        %v2441 = vunpack.c.l.b16 %v2411
        %v2442 = vunpack.c.l.b16 %v2412
        %v2443 = vpack.c.b16 %v2430, %v2429
        %v2444 = vpack.c.b16 %v2432, %v2431
        %v2445 = vpack.c.b16 %v2434, %v2433
        %v2446 = vpack.c.b16 %v2436, %v2435
        %v2447 = vpack.c.b16 %v2438, %v2437
        %v2448 = vpack.c.b16 %v2440, %v2439
        %v2449 = vpack.c.b16 %v2442, %v2441
        %v2457 = vsel %vm1060, %v2414, 0
        %v2460 = vand.u32 %v2449, %v1066
        %2462 = vmatpush.bf16.msra.mxu0 0
        %2463 = vmatpush.bf16.msra.mxu0 %v2460
        %2464 = vmatpush.bf16.msra.mxu0 %v2448
        %2465 = vmatpush.bf16.msra.mxu0 %v2447
        %2466 = vmatpush.bf16.msra.mxu0 %v2446
        %2467 = vmatpush.bf16.msra.mxu0 %v2445
        %2468 = vmatpush.bf16.msra.mxu0 %v2444
        %2469 = vmatpush.bf16.msra.mxu0 %v2443
        %2470 = vmatmul.bf16.gmra.mxu0 %v2457
        %v2471 = vpop.f32.mrf.mxu0
        %v2472 = vadd.f32 0.0, %v2471
        %v2473 = vpop.f32.mrf.mxu0
        %2474 = vdwg.mxu0
        %v2475 = vadd.f32 %v2397, %v2472
        %s2476 = scalar_lea.vmem %s3, 1064
        %v2477 = vld [vmem:[%s2476] sm:$0xf]
        %v2478 = vld [vmem:[%s2476 + $0x4] sm:$0xf]
        %v2479 = vld [vmem:[%s2476 + $0x8] sm:$0xf]
        %v2480 = vld [vmem:[%s2476 + $0xc] sm:$0xf]
        %v2481 = vld [vmem:[%s2476 + $0x10] sm:$0xf]
        %v2482 = vld [vmem:[%s2476 + $0x14] sm:$0xf]
        %v2483 = vld [vmem:[%s2476 + $0x18] sm:$0xf]
        %v2484 = vld [vmem:[%s2476 + $0x1c] sm:$0xf]
        %v2485 = vld [vmem:[%s2476 + $0x20] sm:$0xf]
        %v2486 = vld [vmem:[%s2476 + $0x24] sm:$0xf]
        %v2487 = vld [vmem:[%s2476 + $0x28] sm:$0xf]
        %v2488 = vld [vmem:[%s2476 + $0x2c] sm:$0xf]
        %v2489 = vld [vmem:[%s2476 + $0x30] sm:$0xf]
        %v2490 = vld [vmem:[%s2476 + $0x34] sm:$0x1]
        %v2491 = vrot.slane %v2335, 1
        %v2506 = vunpack.c.l.b16 %v2477
        %v2507 = vunpack.c.l.b16 %v2478
        %v2508 = vunpack.c.l.b16 %v2479
        %v2509 = vunpack.c.l.b16 %v2480
        %v2510 = vunpack.c.l.b16 %v2481
        %v2511 = vunpack.c.l.b16 %v2482
        %v2512 = vunpack.c.l.b16 %v2483
        %v2513 = vunpack.c.l.b16 %v2484
        %v2514 = vunpack.c.l.b16 %v2485
        %v2515 = vunpack.c.l.b16 %v2486
        %v2516 = vunpack.c.l.b16 %v2487
        %v2517 = vunpack.c.l.b16 %v2488
        %v2518 = vunpack.c.l.b16 %v2489
        %v2519 = vunpack.c.l.b16 %v2490
        %v2520 = vpack.c.b16 %v2507, %v2506
        %v2521 = vpack.c.b16 %v2509, %v2508
        %v2522 = vpack.c.b16 %v2511, %v2510
        %v2523 = vpack.c.b16 %v2513, %v2512
        %v2524 = vpack.c.b16 %v2515, %v2514
        %v2525 = vpack.c.b16 %v2517, %v2516
        %v2526 = vpack.c.b16 %v2519, %v2518
        %v2534 = vsel %vm1060, %v2491, 0
        %v2537 = vand.u32 %v2526, %v1066
        %2539 = vmatpush.bf16.msra.mxu0 0
        %2540 = vmatpush.bf16.msra.mxu0 %v2537
        %2541 = vmatpush.bf16.msra.mxu0 %v2525
        %2542 = vmatpush.bf16.msra.mxu0 %v2524
        %2543 = vmatpush.bf16.msra.mxu0 %v2523
        %2544 = vmatpush.bf16.msra.mxu0 %v2522
        %2545 = vmatpush.bf16.msra.mxu0 %v2521
        %2546 = vmatpush.bf16.msra.mxu0 %v2520
        %2547 = vmatmul.bf16.gmra.mxu0 %v2534
        %v2548 = vpop.f32.mrf.mxu0
        %v2549 = vadd.f32 0.0, %v2548
        %v2550 = vpop.f32.mrf.mxu0
        %2551 = vdwg.mxu0
        %v2552 = vadd.f32 %v2475, %v2549
        %v2553 = vmax.f32 %v2552, 0.0
        %v2554 = vpack.c.bf16 %v2553, %v2553
        %v2555 = vld [vmem:[%s5] sm:$0xf]
        %v2556 = vld [vmem:[%s5 + $0x4] sm:$0xf]
        %v2557 = vld [vmem:[%s5 + $0x8] sm:$0xf]
        %v2558 = vld [vmem:[%s5 + $0xc] sm:$0xf]
        %v2559 = vld [vmem:[%s5 + $0x10] sm:$0xf]
        %v2560 = vld [vmem:[%s5 + $0x14] sm:$0xf]
        %v2561 = vld [vmem:[%s5 + $0x18] sm:$0x1]
        %v2562 = vld [vmem:[%s6] sm:$0x1]
        %v2570 = vunpack.c.l.b16 %v2555
        %v2571 = vunpack.c.l.b16 %v2556
        %v2572 = vunpack.c.l.b16 %v2557
        %v2573 = vunpack.c.l.b16 %v2558
        %v2574 = vunpack.c.l.b16 %v2559
        %v2575 = vunpack.c.l.b16 %v2560
        %v2576 = vunpack.c.l.b16 %v2561
        %v2577 = vpack.c.b16 %v2571, %v2570
        %v2578 = vpack.c.b16 %v2573, %v2572
        %v2579 = vpack.c.b16 %v2575, %v2574
        %v2580 = vpack.c.b16 %v2576, %v2576
        %vm2584 = vcmask 408576
        %v2586 = vsel %vm2584, %v2554, 0
        %vm2588 = vcmask 1040384
        %v2590 = vsel %vm2588, %v2580, 0
        %2592 = vmatpush.bf16.msra.mxu0 0
        %2593 = vmatpush.bf16.msra.mxu0 0
        %2594 = vmatpush.bf16.msra.mxu0 0
        %2595 = vmatpush.bf16.msra.mxu0 0
        %2596 = vmatpush.bf16.msra.mxu0 %v2590
        %2597 = vmatpush.bf16.msra.mxu0 %v2579
        %2598 = vmatpush.bf16.msra.mxu0 %v2578
        %2599 = vmatpush.bf16.msra.mxu0 %v2577
        %2600 = vmatmul.bf16.gmra.mxu0 %v2586
        %v2601 = vpop.f32.mrf.mxu0
        %v2602 = vadd.f32 %v2562, %v2601
        %v2603 = vpop.f32.mrf.mxu0
        %2604 = vdwg.mxu0
        %vm2605 = vcmask 114688
        %v2606 = vsel %vm2605, %v2602, -inf
        %2607 = vmax.xlane.f32.xlu0 %v2606
        %v2608 = vpop.xlane.xlu0 %2607
        %v2609 = vsub.f32 %v2602, %v2608
        %v2610 = vmul.f32 %v2609, 1.442695
        %v2611 = vpow.pop %v2610
        %v2612 = vsel %vm2605, %v2611, 0.0
        %2613 = vadd.xlane.f32.xlu0 %v2612
        %v2614 = vpop.xlane.xlu0 %2613
        %v2615 = vlog2.pop %v2614
        %v2616 = vmul.f32 %v2615, 0.6931472
        %v2617 = vsub.f32 %v2609, %v2616
        %2618 = vst.msk [vmem:[%s270] sm:$0x1] %vm2605, %v2617
        %s2619 = sand.u32 %s181, 1
        %s2620 = scalar_lea.sflag [#allocation3], %s2619
        %s2621 = sand.u32 %s181, 1
        %s2622 = scalar_lea.vmem [#allocation2], %s2621
        // Predicated region
        $region49: #{net_forward.3} parent=47 // pred_check
          %p2623 = pneg %p191
        $region50: #{net_forward.3} parent=47 // pred_check_branch
          %2625 = sbr.rel (%p2623) target = $region52
        $region51: #{net_forward.3} parent=47 // pred_region
          %2627 = vsyncadd %s2620, 0
          %s2628 = scalar_lea.hbm %s7, %s21
          %s2630 = sshll.u32 %s2622, 4
          %s2631 = int_to_ptr.vmem [resolvable:$true] %s2630
          %s2632 = sshll.u32 %s2628, 4
          %s2633 = int_to_ptr.hbm [resolvable:$true] %s2632
          %2635 = dma.vmem_to_hbm [thread:$0]  %s2631, 16, %s2633, %s2620
        $region52: #{net_forward.3} parent=47 // pred_fallthru
          _
      $region48: #{net_forward.3} parent=5 // pred_fallthru
        _
      %p2636 = scmp.le.s32.totalorder 2, %s16
      // Predicated region
      $region53: #{net_forward.3} parent=5 // pred_check
        %p2637 = pneg %p2636
      $region54: #{net_forward.3} parent=5 // pred_check_branch
        %2639 = sbr.rel (%p2637) target = $region56
      $region55: #{net_forward.3} parent=5 // pred_region
        %s2640 = ssub.s32 %s16, 2
        // Predicated region
        $region57: #{net_forward.3} parent=55 // pred_check
          %p2641 = pneg %p197
        $region58: #{net_forward.3} parent=55 // pred_check_branch
          %2643 = sbr.rel (%p2641) target = $region60
        $region59: #{net_forward.3} parent=55 // pred_region
          %s2644 = sand.u32 %s182, 1
          %s2645 = scalar_lea.sflag [#allocation3], %s2644
          %s2646 = sand.u32 %s182, 1
          %s2647 = scalar_lea.vmem [#allocation2], %s2646
          %2649 = dma.done %s2645, 16
        $region60: #{net_forward.3} parent=55 // pred_fallthru
          _
      $region56: #{net_forward.3} parent=5 // pred_fallthru
        _
    $region6: #{net_forward.3} parent=1 // loop_footer
      %s20 = sadd.s32 1, %s16
    $region7: #{net_forward.3} parent=1 // loop_footer_branch
      %15 = sbr.rel target = $region3
    $region8: #{net_forward.3} parent=1 // loop_exit
      _
    %2650 = vsyncpa [#allocation3], 1
    %s2651 = scalar_lea.sflag [#allocation3], 1
    %2652 = vsyncpa %s2651, 1

</llo_original>
